<compile_context>
chip_gen: v5e
topology: v5e:2x2
jax: 0.10.0
libtpu: 0.0.40
codegen_flags: <defaults>
</compile_context>

<pallas_src>
import jax
import jax.numpy as jnp
from jax.experimental import pallas as pl
from jax.experimental.pallas import tpu as pltpu


def make_resblock_kernel(N, H, W, Cin, Cout, stride, eps):
    Ho, Wo = H // stride, W // stride
    M = N * Ho * Wo

    def kernel(xin_ref, w1_ref, w2_ref, wid_ref,
               g1_ref, b1_ref, g2_ref, b2_ref, gid_ref, bid_ref,
               o_ref, pad_ref):
        cdt = pad_ref.dtype                       # MXU operand dtype (bf16/f32)

        def bn(y, g_ref, b_ref):
            # Training-mode BatchNorm: biased batch statistics; two-pass
            # (centered) variance for numerical robustness.  All in f32.
            mean = jnp.mean(y, axis=0, keepdims=True)
            c = y - mean
            var = jnp.mean(c * c, axis=0, keepdims=True)
            return g_ref[...] * c * jax.lax.rsqrt(var + eps) + b_ref[...]

        # ---- conv1 (3x3, pad=1, stride=`stride`): 9 shifted-tap MXU dots ----
        # f32 accumulation; operands stay in the MXU dtype (no per-tap casts,
        # no im2col scratch, no masked sub-128-lane scatter stores).
        y1 = jnp.zeros((M, Cout), jnp.float32)
        for ky in range(3):
            for kx in range(3):
                t = ky * 3 + kx
                if stride == 1:
                    tap = xin_ref[:, ky:ky + Ho, kx:kx + Wo, :]
                else:
                    p = (ky % 2) * 2 + (kx % 2)       # parity phase of padded x
                    oy, ox = ky // 2, kx // 2
                    tap = xin_ref[p, :, oy:oy + Ho, ox:ox + Wo, :]
                y1 = y1 + jnp.dot(tap.reshape(M, Cin), w1_ref[t],
                                  preferred_element_type=jnp.float32)

        # ---- BN1 + ReLU -> interior of a zero-halo scratch (MXU dtype) ----
        a1 = jnp.maximum(bn(y1, g1_ref, b1_ref), 0.0)
        # Zero only the 1-pixel halo; the interior is fully overwritten.
        zrow = jnp.zeros((N, 1, Wo + 2, Cout), cdt)
        zcol = jnp.zeros((N, Ho + 2, 1, Cout), cdt)
        pad_ref[:, 0:1, :, :] = zrow
        pad_ref[:, Ho + 1:Ho + 2, :, :] = zrow
        pad_ref[:, :, 0:1, :] = zcol
        pad_ref[:, :, Wo + 1:Wo + 2, :] = zcol
        pad_ref[:, 1:Ho + 1, 1:Wo + 1, :] = a1.reshape(
            N, Ho, Wo, Cout).astype(cdt)

        # ---- conv2 (3x3, pad=1, stride=1): 9 shifted-tap MXU dots ----
        y2 = jnp.zeros((M, Cout), jnp.float32)
        for ky in range(3):
            for kx in range(3):
                t = ky * 3 + kx
                tap = pad_ref[:, ky:ky + Ho, kx:kx + Wo, :]
                y2 = y2 + jnp.dot(tap.reshape(M, Cout), w2_ref[t],
                                  preferred_element_type=jnp.float32)
        out = bn(y2, g2_ref, b2_ref)

        # ---- identity / 1x1-conv+BN downsample shortcut ----
        if stride == 2:
            # parity phase (odd,odd) of padded x == x[:, ::2, ::2, :]
            xc = xin_ref[3, :, 0:Ho, 0:Wo, :].reshape(M, Cin)
            yid = jnp.dot(xc, wid_ref[...], preferred_element_type=jnp.float32)
            ident = bn(yid, gid_ref, bid_ref)
        else:
            ident = xin_ref[:, 1:Ho + 1, 1:Wo + 1, :].reshape(
                M, Cin).astype(jnp.float32)

        o_ref[...] = jnp.maximum(out + ident, 0.0).astype(o_ref.dtype)

    return kernel


def _vmem_limit_bytes():
    # Per-generation VMEM budget: v7x has 64 MiB per TC, v5e/v6e 128 MiB.
    try:
        info = pltpu.get_tpu_info()
        cap = int(getattr(info, "vmem_capacity_bytes", 64 * 1024 * 1024))
    except Exception:
        cap = 64 * 1024 * 1024
    return min(cap * 3 // 4, 64 * 1024 * 1024)


def resblock_pallas(x_nchw, params, eps=1e-5, mxu_dtype=jnp.bfloat16):
    w1, w2, wid = params["w1"], params["w2"], params["wid"]
    N, Cin, H, W = x_nchw.shape
    Cout = w1.shape[0]
    stride = 1 if Cin == Cout else 2
    Ho, Wo = H // stride, W // stride
    M = N * Ho * Wo

    # ---- glue: NCHW -> NHWC in MXU dtype, pad, parity split for stride 2 ----
    x = jnp.transpose(x_nchw, (0, 2, 3, 1)).astype(mxu_dtype)     # NHWC, bf16
    xpad = jnp.pad(x, ((0, 0), (1, 1), (1, 1), (0, 0)))
    if stride == 2:
        xin = jnp.stack([xpad[:, r::2, c::2, :]
                         for r in (0, 1) for c in (0, 1)])        # (4,N,HP,WP,Cin)
    else:
        xin = xpad                                                # (N,H+2,W+2,Cin)

    # Conv weights as tile-aligned per-tap stacks: (tap, Cin, Cout).
    w1k = jnp.transpose(w1, (2, 3, 1, 0)).reshape(9, Cin, Cout).astype(mxu_dtype)
    w2k = jnp.transpose(w2, (2, 3, 1, 0)).reshape(9, Cout, Cout).astype(mxu_dtype)
    widk = jnp.transpose(wid.reshape(Cout, Cin), (1, 0)).astype(mxu_dtype)

    bnp = lambda v: v.reshape(1, Cout).astype(jnp.float32)
    g1k, b1k, g2k, b2k, gidk, bidk = map(
        bnp, (params["g1"], params["b1"], params["g2"], params["b2"],
              params["gid"], params["bid"]))

    kernel = make_resblock_kernel(N, H, W, Cin, Cout, stride, eps)
    vmem = pl.BlockSpec(memory_space=pltpu.MemorySpace.VMEM)

    wbytes = jnp.dtype(mxu_dtype).itemsize
    flops = (2 * M * 9 * Cin * Cout + 2 * M * 9 * Cout * Cout
             + (2 * M * Cin * Cout if stride == 2 else 0)
             + 12 * M * Cout)
    # HBM traffic only; the zero-halo activation scratch stays in VMEM.
    bytes_accessed = (int(xin.size) * wbytes
                      + (int(w1k.size) + int(w2k.size) + int(widk.size)) * wbytes
                      + 6 * Cout * 4
                      + M * Cout * 4)
    cost = pl.CostEstimate(flops=int(flops),
                           transcendentals=(3 if stride == 2 else 2) * Cout,
                           bytes_accessed=int(bytes_accessed))

    out_2d = pl.pallas_call(
        kernel,
        out_shape=jax.ShapeDtypeStruct((M, Cout), jnp.float32),
        in_specs=[vmem] * 10,
        out_specs=vmem,
        scratch_shapes=[
            pltpu.VMEM((N, Ho + 2, Wo + 2, Cout), mxu_dtype),     # zero-halo act
        ],
        compiler_params=pltpu.CompilerParams(vmem_limit_bytes=_vmem_limit_bytes()),
        cost_estimate=cost,
    )(xin, w1k, w2k, widk, g1k, b1k, g2k, b2k, gidk, bidk)

    out_nhwc = out_2d.reshape(N, Ho, Wo, Cout)
    return jnp.transpose(out_nhwc, (0, 3, 1, 2))                  # back to NCHW


# ---------------- pure-JAX reference (for correctness check) ----------------
def resblock_ref(x, params, eps=1e-5):
    w1, w2, wid = params["w1"], params["w2"], params["wid"]
    Cin, Cout = x.shape[1], w1.shape[0]
    stride = 1 if Cin == Cout else 2
    dn = ("NCHW", "OIHW", "NCHW")

    def conv(x, w, s):
        pad = ((1, 1), (1, 1)) if w.shape[-1] == 3 else ((0, 0), (0, 0))
        return jax.lax.conv_general_dilated(x, w, (s, s), pad,
                                            dimension_numbers=dn)

    def bn(y, g, b):
        m = y.mean(axis=(0, 2, 3), keepdims=True)
        v = y.var(axis=(0, 2, 3), keepdims=True)   # biased, training-mode BN
        return (g[None, :, None, None] * (y - m) * jax.lax.rsqrt(v + eps)
                + b[None, :, None, None])

    out = jax.nn.relu(bn(conv(x, w1, stride), params["g1"], params["b1"]))
    out = bn(conv(out, w2, 1), params["g2"], params["b2"])
    if stride == 2:
        ident = bn(conv(x, wid, 2), params["gid"], params["bid"])
    else:
        ident = x
    return jax.nn.relu(out + ident)


def init_params(key, Cin, Cout):
    ks = jax.random.split(key, 9)

    def kaiming(k, shape):
        fan_in = shape[1] * shape[2] * shape[3]
        return jax.random.normal(k, shape, jnp.float32) * jnp.sqrt(2.0 / fan_in)

    return {
        "w1":  kaiming(ks[0], (Cout, Cin, 3, 3)),
        "w2":  kaiming(ks[1], (Cout, Cout, 3, 3)),
        "wid": kaiming(ks[2], (Cout, Cin, 1, 1)),
        "g1":  1.0 + 0.1 * jax.random.normal(ks[3], (Cout,), jnp.float32),
        "b1":  0.1 * jax.random.normal(ks[4], (Cout,), jnp.float32),
        "g2":  1.0 + 0.1 * jax.random.normal(ks[5], (Cout,), jnp.float32),
        "b2":  0.1 * jax.random.normal(ks[6], (Cout,), jnp.float32),
        "gid": 1.0 + 0.1 * jax.random.normal(ks[7], (Cout,), jnp.float32),
        "bid": 0.1 * jax.random.normal(ks[8], (Cout,), jnp.float32),
    }


if __name__ == "__main__":
    key = jax.random.PRNGKey(0)
    k_p1, k_x1, k_p2, k_x2 = jax.random.split(key, 4)

    # Case 1: in_channels != out_channels -> stride 2 + 1x1-conv/BN shortcut
    N, Cin, Cout, H, W = 2, 4, 8, 16, 16
    params1 = init_params(k_p1, Cin, Cout)
    x1 = jax.random.normal(k_x1, (N, Cin, H, W), jnp.float32)
    ref1 = resblock_ref(x1, params1)

    # Case 2: in_channels == out_channels -> stride 1, plain identity shortcut
    params2 = init_params(k_p2, Cout, Cout)
    x2 = jax.random.normal(k_x2, (N, Cout, H, W), jnp.float32)
    ref2 = resblock_ref(x2, params2)

    # --- exactness of the algorithm: f32 MXU operands, tight tolerance ---
    o1_f32 = resblock_pallas(x1, params1, mxu_dtype=jnp.float32)
    o2_f32 = resblock_pallas(x2, params2, mxu_dtype=jnp.float32)
    jax.block_until_ready((o1_f32, o2_f32))
    assert o1_f32.shape == (N, Cout, H // 2, W // 2)
    assert o2_f32.shape == (N, Cout, H, W)
    assert bool(jnp.allclose(o1_f32, ref1, atol=1e-3, rtol=1e-3)), (
        "stride-2 f32 mismatch: max abs err = %e"
        % float(jnp.max(jnp.abs(o1_f32 - ref1))))
    assert bool(jnp.allclose(o2_f32, ref2, atol=1e-3, rtol=1e-3)), (
        "stride-1 f32 mismatch: max abs err = %e"
        % float(jnp.max(jnp.abs(o2_f32 - ref2))))

    # --- performance path: bf16 MXU operands / activations, f32 accum & BN ---
    o1 = resblock_pallas(x1, params1)            # default bf16
    o2 = resblock_pallas(x2, params2)
    jax.block_until_ready((o1, o2))
    assert bool(jnp.allclose(o1, ref1, atol=5e-2, rtol=5e-2)), (
        "stride-2 bf16 mismatch: max abs err = %e"
        % float(jnp.max(jnp.abs(o1 - ref1))))
    assert bool(jnp.allclose(o2, ref2, atol=5e-2, rtol=5e-2)), (
        "stride-1 bf16 mismatch: max abs err = %e"
        % float(jnp.max(jnp.abs(o2 - ref2))))

    print("KERNEL_OK")
</pallas_src>

<mosaic_0001>
module attributes {stable_mosaic.version = 11 : i64} {
  func.func @kernel(%arg0: memref<4x2x9x9x4xf32, #tpu.memory_space<vmem>>, %arg1: memref<9x4x8xf32, #tpu.memory_space<vmem>>, %arg2: memref<9x8x8xf32, #tpu.memory_space<vmem>>, %arg3: memref<4x8xf32, #tpu.memory_space<vmem>>, %arg4: memref<1x8xf32, #tpu.memory_space<vmem>>, %arg5: memref<1x8xf32, #tpu.memory_space<vmem>>, %arg6: memref<1x8xf32, #tpu.memory_space<vmem>>, %arg7: memref<1x8xf32, #tpu.memory_space<vmem>>, %arg8: memref<1x8xf32, #tpu.memory_space<vmem>>, %arg9: memref<1x8xf32, #tpu.memory_space<vmem>>, %arg10: memref<128x8xf32, #tpu.memory_space<vmem>>, %arg11: memref<2x10x10x8xf32, #tpu.memory_space<vmem>>) attributes {dimension_semantics = [], scalar_prefetch = 0 : i64, scratch_operands = 1 : i64, tpu.core_type = #tpu.core_type<tc>} {
    %cst = arith.constant 0.000000e+00 : f32
    %0 = vector.broadcast %cst : f32 to vector<128x8xf32>
    %c0 = arith.constant 0 : index
    %c0_0 = arith.constant 0 : index
    %c0_1 = arith.constant 0 : index
    %c0_2 = arith.constant 0 : index
    %c0_3 = arith.constant 0 : index
    %1 = vector.load %arg0[%c0, %c0_0, %c0_1, %c0_2, %c0_3] : memref<4x2x9x9x4xf32, #tpu.memory_space<vmem>>, vector<1x2x8x8x4xf32>
    %2 = vector.shape_cast %1 : vector<1x2x8x8x4xf32> to vector<2x8x8x4xf32>
    %3 = vector.shape_cast %2 : vector<2x8x8x4xf32> to vector<128x4xf32>
    %c0_4 = arith.constant 0 : index
    %c0_5 = arith.constant 0 : index
    %c0_6 = arith.constant 0 : index
    %4 = vector.load %arg1[%c0_4, %c0_5, %c0_6] : memref<9x4x8xf32, #tpu.memory_space<vmem>>, vector<1x4x8xf32>
    %5 = vector.shape_cast %4 : vector<1x4x8xf32> to vector<4x8xf32>
    %cst_7 = arith.constant dense<0.000000e+00> : vector<128x8xf32>
    %6 = tpu.matmul %3, %5, %cst_7 {dimension_numbers = #tpu.dot_dimension_numbers<[1], [0], [0], [1], [0, 0, 1, 1], [], []>} : vector<128x4xf32>, vector<4x8xf32>, vector<128x8xf32> -> vector<128x8xf32>
    %7 = arith.addf %0, %6 : vector<128x8xf32>
    %c1 = arith.constant 1 : index
    %c0_8 = arith.constant 0 : index
    %c0_9 = arith.constant 0 : index
    %c0_10 = arith.constant 0 : index
    %c0_11 = arith.constant 0 : index
    %8 = vector.load %arg0[%c1, %c0_8, %c0_9, %c0_10, %c0_11] : memref<4x2x9x9x4xf32, #tpu.memory_space<vmem>>, vector<1x2x8x8x4xf32>
    %9 = vector.shape_cast %8 : vector<1x2x8x8x4xf32> to vector<2x8x8x4xf32>
    %10 = vector.shape_cast %9 : vector<2x8x8x4xf32> to vector<128x4xf32>
    %c1_12 = arith.constant 1 : index
    %c0_13 = arith.constant 0 : index
    %c0_14 = arith.constant 0 : index
    %11 = vector.load %arg1[%c1_12, %c0_13, %c0_14] : memref<9x4x8xf32, #tpu.memory_space<vmem>>, vector<1x4x8xf32>
    %12 = vector.shape_cast %11 : vector<1x4x8xf32> to vector<4x8xf32>
    %cst_15 = arith.constant dense<0.000000e+00> : vector<128x8xf32>
    %13 = tpu.matmul %10, %12, %cst_15 {dimension_numbers = #tpu.dot_dimension_numbers<[1], [0], [0], [1], [0, 0, 1, 1], [], []>} : vector<128x4xf32>, vector<4x8xf32>, vector<128x8xf32> -> vector<128x8xf32>
    %14 = arith.addf %7, %13 : vector<128x8xf32>
    %c0_16 = arith.constant 0 : index
    %c0_17 = arith.constant 0 : index
    %c0_18 = arith.constant 0 : index
    %c1_19 = arith.constant 1 : index
    %c0_20 = arith.constant 0 : index
    %15 = vector.load %arg0[%c0_16, %c0_17, %c0_18, %c1_19, %c0_20] : memref<4x2x9x9x4xf32, #tpu.memory_space<vmem>>, vector<1x2x8x8x4xf32>
    %16 = vector.shape_cast %15 : vector<1x2x8x8x4xf32> to vector<2x8x8x4xf32>
    %17 = vector.shape_cast %16 : vector<2x8x8x4xf32> to vector<128x4xf32>
    %c2 = arith.constant 2 : index
    %c0_21 = arith.constant 0 : index
    %c0_22 = arith.constant 0 : index
    %18 = vector.load %arg1[%c2, %c0_21, %c0_22] : memref<9x4x8xf32, #tpu.memory_space<vmem>>, vector<1x4x8xf32>
    %19 = vector.shape_cast %18 : vector<1x4x8xf32> to vector<4x8xf32>
    %cst_23 = arith.constant dense<0.000000e+00> : vector<128x8xf32>
    %20 = tpu.matmul %17, %19, %cst_23 {dimension_numbers = #tpu.dot_dimension_numbers<[1], [0], [0], [1], [0, 0, 1, 1], [], []>} : vector<128x4xf32>, vector<4x8xf32>, vector<128x8xf32> -> vector<128x8xf32>
    %21 = arith.addf %14, %20 : vector<128x8xf32>
    %c2_24 = arith.constant 2 : index
    %c0_25 = arith.constant 0 : index
    %c0_26 = arith.constant 0 : index
    %c0_27 = arith.constant 0 : index
    %c0_28 = arith.constant 0 : index
    %22 = vector.load %arg0[%c2_24, %c0_25, %c0_26, %c0_27, %c0_28] : memref<4x2x9x9x4xf32, #tpu.memory_space<vmem>>, vector<1x2x8x8x4xf32>
    %23 = vector.shape_cast %22 : vector<1x2x8x8x4xf32> to vector<2x8x8x4xf32>
    %24 = vector.shape_cast %23 : vector<2x8x8x4xf32> to vector<128x4xf32>
    %c3 = arith.constant 3 : index
    %c0_29 = arith.constant 0 : index
    %c0_30 = arith.constant 0 : index
    %25 = vector.load %arg1[%c3, %c0_29, %c0_30] : memref<9x4x8xf32, #tpu.memory_space<vmem>>, vector<1x4x8xf32>
    %26 = vector.shape_cast %25 : vector<1x4x8xf32> to vector<4x8xf32>
    %cst_31 = arith.constant dense<0.000000e+00> : vector<128x8xf32>
    %27 = tpu.matmul %24, %26, %cst_31 {dimension_numbers = #tpu.dot_dimension_numbers<[1], [0], [0], [1], [0, 0, 1, 1], [], []>} : vector<128x4xf32>, vector<4x8xf32>, vector<128x8xf32> -> vector<128x8xf32>
    %28 = arith.addf %21, %27 : vector<128x8xf32>
    %c3_32 = arith.constant 3 : index
    %c0_33 = arith.constant 0 : index
    %c0_34 = arith.constant 0 : index
    %c0_35 = arith.constant 0 : index
    %c0_36 = arith.constant 0 : index
    %29 = vector.load %arg0[%c3_32, %c0_33, %c0_34, %c0_35, %c0_36] : memref<4x2x9x9x4xf32, #tpu.memory_space<vmem>>, vector<1x2x8x8x4xf32>
    %30 = vector.shape_cast %29 : vector<1x2x8x8x4xf32> to vector<2x8x8x4xf32>
    %31 = vector.shape_cast %30 : vector<2x8x8x4xf32> to vector<128x4xf32>
    %c4 = arith.constant 4 : index
    %c0_37 = arith.constant 0 : index
    %c0_38 = arith.constant 0 : index
    %32 = vector.load %arg1[%c4, %c0_37, %c0_38] : memref<9x4x8xf32, #tpu.memory_space<vmem>>, vector<1x4x8xf32>
    %33 = vector.shape_cast %32 : vector<1x4x8xf32> to vector<4x8xf32>
    %cst_39 = arith.constant dense<0.000000e+00> : vector<128x8xf32>
    %34 = tpu.matmul %31, %33, %cst_39 {dimension_numbers = #tpu.dot_dimension_numbers<[1], [0], [0], [1], [0, 0, 1, 1], [], []>} : vector<128x4xf32>, vector<4x8xf32>, vector<128x8xf32> -> vector<128x8xf32>
    %35 = arith.addf %28, %34 : vector<128x8xf32>
    %c2_40 = arith.constant 2 : index
    %c0_41 = arith.constant 0 : index
    %c0_42 = arith.constant 0 : index
    %c1_43 = arith.constant 1 : index
    %c0_44 = arith.constant 0 : index
    %36 = vector.load %arg0[%c2_40, %c0_41, %c0_42, %c1_43, %c0_44] : memref<4x2x9x9x4xf32, #tpu.memory_space<vmem>>, vector<1x2x8x8x4xf32>
    %37 = vector.shape_cast %36 : vector<1x2x8x8x4xf32> to vector<2x8x8x4xf32>
    %38 = vector.shape_cast %37 : vector<2x8x8x4xf32> to vector<128x4xf32>
    %c5 = arith.constant 5 : index
    %c0_45 = arith.constant 0 : index
    %c0_46 = arith.constant 0 : index
    %39 = vector.load %arg1[%c5, %c0_45, %c0_46] : memref<9x4x8xf32, #tpu.memory_space<vmem>>, vector<1x4x8xf32>
    %40 = vector.shape_cast %39 : vector<1x4x8xf32> to vector<4x8xf32>
    %cst_47 = arith.constant dense<0.000000e+00> : vector<128x8xf32>
    %41 = tpu.matmul %38, %40, %cst_47 {dimension_numbers = #tpu.dot_dimension_numbers<[1], [0], [0], [1], [0, 0, 1, 1], [], []>} : vector<128x4xf32>, vector<4x8xf32>, vector<128x8xf32> -> vector<128x8xf32>
    %42 = arith.addf %35, %41 : vector<128x8xf32>
    %c0_48 = arith.constant 0 : index
    %c0_49 = arith.constant 0 : index
    %c1_50 = arith.constant 1 : index
    %c0_51 = arith.constant 0 : index
    %c0_52 = arith.constant 0 : index
    %43 = vector.load %arg0[%c0_48, %c0_49, %c1_50, %c0_51, %c0_52] : memref<4x2x9x9x4xf32, #tpu.memory_space<vmem>>, vector<1x2x8x8x4xf32>
    %44 = vector.shape_cast %43 : vector<1x2x8x8x4xf32> to vector<2x8x8x4xf32>
    %45 = vector.shape_cast %44 : vector<2x8x8x4xf32> to vector<128x4xf32>
    %c6 = arith.constant 6 : index
    %c0_53 = arith.constant 0 : index
    %c0_54 = arith.constant 0 : index
    %46 = vector.load %arg1[%c6, %c0_53, %c0_54] : memref<9x4x8xf32, #tpu.memory_space<vmem>>, vector<1x4x8xf32>
    %47 = vector.shape_cast %46 : vector<1x4x8xf32> to vector<4x8xf32>
    %cst_55 = arith.constant dense<0.000000e+00> : vector<128x8xf32>
    %48 = tpu.matmul %45, %47, %cst_55 {dimension_numbers = #tpu.dot_dimension_numbers<[1], [0], [0], [1], [0, 0, 1, 1], [], []>} : vector<128x4xf32>, vector<4x8xf32>, vector<128x8xf32> -> vector<128x8xf32>
    %49 = arith.addf %42, %48 : vector<128x8xf32>
    %c1_56 = arith.constant 1 : index
    %c0_57 = arith.constant 0 : index
    %c1_58 = arith.constant 1 : index
    %c0_59 = arith.constant 0 : index
    %c0_60 = arith.constant 0 : index
    %50 = vector.load %arg0[%c1_56, %c0_57, %c1_58, %c0_59, %c0_60] : memref<4x2x9x9x4xf32, #tpu.memory_space<vmem>>, vector<1x2x8x8x4xf32>
    %51 = vector.shape_cast %50 : vector<1x2x8x8x4xf32> to vector<2x8x8x4xf32>
    %52 = vector.shape_cast %51 : vector<2x8x8x4xf32> to vector<128x4xf32>
    %c7 = arith.constant 7 : index
    %c0_61 = arith.constant 0 : index
    %c0_62 = arith.constant 0 : index
    %53 = vector.load %arg1[%c7, %c0_61, %c0_62] : memref<9x4x8xf32, #tpu.memory_space<vmem>>, vector<1x4x8xf32>
    %54 = vector.shape_cast %53 : vector<1x4x8xf32> to vector<4x8xf32>
    %cst_63 = arith.constant dense<0.000000e+00> : vector<128x8xf32>
    %55 = tpu.matmul %52, %54, %cst_63 {dimension_numbers = #tpu.dot_dimension_numbers<[1], [0], [0], [1], [0, 0, 1, 1], [], []>} : vector<128x4xf32>, vector<4x8xf32>, vector<128x8xf32> -> vector<128x8xf32>
    %56 = arith.addf %49, %55 : vector<128x8xf32>
    %c0_64 = arith.constant 0 : index
    %c0_65 = arith.constant 0 : index
    %c1_66 = arith.constant 1 : index
    %c1_67 = arith.constant 1 : index
    %c0_68 = arith.constant 0 : index
    %57 = vector.load %arg0[%c0_64, %c0_65, %c1_66, %c1_67, %c0_68] : memref<4x2x9x9x4xf32, #tpu.memory_space<vmem>>, vector<1x2x8x8x4xf32>
    %58 = vector.shape_cast %57 : vector<1x2x8x8x4xf32> to vector<2x8x8x4xf32>
    %59 = vector.shape_cast %58 : vector<2x8x8x4xf32> to vector<128x4xf32>
    %c8 = arith.constant 8 : index
    %c0_69 = arith.constant 0 : index
    %c0_70 = arith.constant 0 : index
    %60 = vector.load %arg1[%c8, %c0_69, %c0_70] : memref<9x4x8xf32, #tpu.memory_space<vmem>>, vector<1x4x8xf32>
    %61 = vector.shape_cast %60 : vector<1x4x8xf32> to vector<4x8xf32>
    %cst_71 = arith.constant dense<0.000000e+00> : vector<128x8xf32>
    %62 = tpu.matmul %59, %61, %cst_71 {dimension_numbers = #tpu.dot_dimension_numbers<[1], [0], [0], [1], [0, 0, 1, 1], [], []>} : vector<128x4xf32>, vector<4x8xf32>, vector<128x8xf32> -> vector<128x8xf32>
    %63 = arith.addf %56, %62 : vector<128x8xf32>
    %cst_72 = arith.constant dense<0.000000e+00> : vector<8xf32>
    %64 = vector.multi_reduction <add>, %63, %cst_72 [0] : vector<128x8xf32> to vector<8xf32>
    %65 = vector.shape_cast %64 : vector<8xf32> to vector<1x8xf32>
    %cst_73 = arith.constant 1.280000e+02 : f32
    %66 = vector.broadcast %cst_73 : f32 to vector<1x8xf32>
    %67 = arith.divf %65, %66 : vector<1x8xf32>
    %68 = vector.broadcast %67 : vector<1x8xf32> to vector<128x8xf32>
    %69 = arith.subf %63, %68 : vector<128x8xf32>
    %70 = arith.mulf %69, %69 : vector<128x8xf32>
    %cst_74 = arith.constant dense<0.000000e+00> : vector<8xf32>
    %71 = vector.multi_reduction <add>, %70, %cst_74 [0] : vector<128x8xf32> to vector<8xf32>
    %72 = vector.shape_cast %71 : vector<8xf32> to vector<1x8xf32>
    %cst_75 = arith.constant 1.280000e+02 : f32
    %73 = vector.broadcast %cst_75 : f32 to vector<1x8xf32>
    %74 = arith.divf %72, %73 : vector<1x8xf32>
    %c0_76 = arith.constant 0 : index
    %c0_77 = arith.constant 0 : index
    %75 = vector.load %arg4[%c0_76, %c0_77] : memref<1x8xf32, #tpu.memory_space<vmem>>, vector<1x8xf32>
    %76 = vector.broadcast %75 : vector<1x8xf32> to vector<128x8xf32>
    %77 = arith.mulf %76, %69 : vector<128x8xf32>
    %cst_78 = arith.constant 9.99999974E-6 : f32
    %78 = vector.broadcast %cst_78 : f32 to vector<1x8xf32>
    %79 = arith.addf %74, %78 : vector<1x8xf32>
    %80 = math.rsqrt %79 : vector<1x8xf32>
    %81 = vector.broadcast %80 : vector<1x8xf32> to vector<128x8xf32>
    %82 = arith.mulf %77, %81 : vector<128x8xf32>
    %c0_79 = arith.constant 0 : index
    %c0_80 = arith.constant 0 : index
    %83 = vector.load %arg5[%c0_79, %c0_80] : memref<1x8xf32, #tpu.memory_space<vmem>>, vector<1x8xf32>
    %84 = vector.broadcast %83 : vector<1x8xf32> to vector<128x8xf32>
    %85 = arith.addf %82, %84 : vector<128x8xf32>
    %cst_81 = arith.constant 0.000000e+00 : f32
    %86 = vector.broadcast %cst_81 : f32 to vector<128x8xf32>
    %87 = arith.maximumf %85, %86 : vector<128x8xf32>
    %cst_82 = arith.constant 0.000000e+00 : f32
    %88 = vector.broadcast %cst_82 : f32 to vector<2x1x10x8xf32>
    %cst_83 = arith.constant 0.000000e+00 : f32
    %89 = vector.broadcast %cst_83 : f32 to vector<2x10x1x8xf32>
    %c0_84 = arith.constant 0 : index
    %c0_85 = arith.constant 0 : index
    %c0_86 = arith.constant 0 : index
    %c0_87 = arith.constant 0 : index
    %90 = vector.load %arg11[%c0_84, %c0_85, %c0_86, %c0_87] : memref<2x10x10x8xf32, #tpu.memory_space<vmem>>, vector<2x1x10x8xf32>
    tpu.vector_store %arg11[%c0_84, %c0_85, %c0_86, %c0_87], %88 {strides = array<i32>} : memref<2x10x10x8xf32, #tpu.memory_space<vmem>>, vector<2x1x10x8xf32>,
    %c0_88 = arith.constant 0 : index
    %c9 = arith.constant 9 : index
    %c0_89 = arith.constant 0 : index
    %c0_90 = arith.constant 0 : index
    %91 = vector.load %arg11[%c0_88, %c9, %c0_89, %c0_90] : memref<2x10x10x8xf32, #tpu.memory_space<vmem>>, vector<2x1x10x8xf32>
    tpu.vector_store %arg11[%c0_88, %c9, %c0_89, %c0_90], %88 {strides = array<i32>} : memref<2x10x10x8xf32, #tpu.memory_space<vmem>>, vector<2x1x10x8xf32>,
    %c0_91 = arith.constant 0 : index
    %c0_92 = arith.constant 0 : index
    %c0_93 = arith.constant 0 : index
    %c0_94 = arith.constant 0 : index
    %92 = vector.load %arg11[%c0_91, %c0_92, %c0_93, %c0_94] : memref<2x10x10x8xf32, #tpu.memory_space<vmem>>, vector<2x10x1x8xf32>
    tpu.vector_store %arg11[%c0_91, %c0_92, %c0_93, %c0_94], %89 {strides = array<i32>} : memref<2x10x10x8xf32, #tpu.memory_space<vmem>>, vector<2x10x1x8xf32>,
    %c0_95 = arith.constant 0 : index
    %c0_96 = arith.constant 0 : index
    %c9_97 = arith.constant 9 : index
    %c0_98 = arith.constant 0 : index
    %93 = vector.load %arg11[%c0_95, %c0_96, %c9_97, %c0_98] : memref<2x10x10x8xf32, #tpu.memory_space<vmem>>, vector<2x10x1x8xf32>
    tpu.vector_store %arg11[%c0_95, %c0_96, %c9_97, %c0_98], %89 {strides = array<i32>} : memref<2x10x10x8xf32, #tpu.memory_space<vmem>>, vector<2x10x1x8xf32>,
    %94 = vector.shape_cast %87 : vector<128x8xf32> to vector<2x8x8x8xf32>
    %c0_99 = arith.constant 0 : index
    %c1_100 = arith.constant 1 : index
    %c1_101 = arith.constant 1 : index
    %c0_102 = arith.constant 0 : index
    %95 = vector.load %arg11[%c0_99, %c1_100, %c1_101, %c0_102] : memref<2x10x10x8xf32, #tpu.memory_space<vmem>>, vector<2x8x8x8xf32>
    tpu.vector_store %arg11[%c0_99, %c1_100, %c1_101, %c0_102], %94 {strides = array<i32>} : memref<2x10x10x8xf32, #tpu.memory_space<vmem>>, vector<2x8x8x8xf32>,
    %cst_103 = arith.constant 0.000000e+00 : f32
    %96 = vector.broadcast %cst_103 : f32 to vector<128x8xf32>
    %c0_104 = arith.constant 0 : index
    %c0_105 = arith.constant 0 : index
    %c0_106 = arith.constant 0 : index
    %c0_107 = arith.constant 0 : index
    %97 = vector.load %arg11[%c0_104, %c0_105, %c0_106, %c0_107] : memref<2x10x10x8xf32, #tpu.memory_space<vmem>>, vector<2x8x8x8xf32>
    %98 = vector.shape_cast %97 : vector<2x8x8x8xf32> to vector<128x8xf32>
    %c0_108 = arith.constant 0 : index
    %c0_109 = arith.constant 0 : index
    %c0_110 = arith.constant 0 : index
    %99 = vector.load %arg2[%c0_108, %c0_109, %c0_110] : memref<9x8x8xf32, #tpu.memory_space<vmem>>, vector<1x8x8xf32>
    %100 = vector.shape_cast %99 : vector<1x8x8xf32> to vector<8x8xf32>
    %cst_111 = arith.constant dense<0.000000e+00> : vector<128x8xf32>
    %101 = tpu.matmul %98, %100, %cst_111 {dimension_numbers = #tpu.dot_dimension_numbers<[1], [0], [0], [1], [0, 0, 1, 1], [], []>} : vector<128x8xf32>, vector<8x8xf32>, vector<128x8xf32> -> vector<128x8xf32>
    %102 = arith.addf %96, %101 : vector<128x8xf32>
    %c0_112 = arith.constant 0 : index
    %c0_113 = arith.constant 0 : index
    %c1_114 = arith.constant 1 : index
    %c0_115 = arith.constant 0 : index
    %103 = vector.load %arg11[%c0_112, %c0_113, %c1_114, %c0_115] : memref<2x10x10x8xf32, #tpu.memory_space<vmem>>, vector<2x8x8x8xf32>
    %104 = vector.shape_cast %103 : vector<2x8x8x8xf32> to vector<128x8xf32>
    %c1_116 = arith.constant 1 : index
    %c0_117 = arith.constant 0 : index
    %c0_118 = arith.constant 0 : index
    %105 = vector.load %arg2[%c1_116, %c0_117, %c0_118] : memref<9x8x8xf32, #tpu.memory_space<vmem>>, vector<1x8x8xf32>
    %106 = vector.shape_cast %105 : vector<1x8x8xf32> to vector<8x8xf32>
    %cst_119 = arith.constant dense<0.000000e+00> : vector<128x8xf32>
    %107 = tpu.matmul %104, %106, %cst_119 {dimension_numbers = #tpu.dot_dimension_numbers<[1], [0], [0], [1], [0, 0, 1, 1], [], []>} : vector<128x8xf32>, vector<8x8xf32>, vector<128x8xf32> -> vector<128x8xf32>
    %108 = arith.addf %102, %107 : vector<128x8xf32>
    %c0_120 = arith.constant 0 : index
    %c0_121 = arith.constant 0 : index
    %c2_122 = arith.constant 2 : index
    %c0_123 = arith.constant 0 : index
    %109 = vector.load %arg11[%c0_120, %c0_121, %c2_122, %c0_123] : memref<2x10x10x8xf32, #tpu.memory_space<vmem>>, vector<2x8x8x8xf32>
    %110 = vector.shape_cast %109 : vector<2x8x8x8xf32> to vector<128x8xf32>
    %c2_124 = arith.constant 2 : index
    %c0_125 = arith.constant 0 : index
    %c0_126 = arith.constant 0 : index
    %111 = vector.load %arg2[%c2_124, %c0_125, %c0_126] : memref<9x8x8xf32, #tpu.memory_space<vmem>>, vector<1x8x8xf32>
    %112 = vector.shape_cast %111 : vector<1x8x8xf32> to vector<8x8xf32>
    %cst_127 = arith.constant dense<0.000000e+00> : vector<128x8xf32>
    %113 = tpu.matmul %110, %112, %cst_127 {dimension_numbers = #tpu.dot_dimension_numbers<[1], [0], [0], [1], [0, 0, 1, 1], [], []>} : vector<128x8xf32>, vector<8x8xf32>, vector<128x8xf32> -> vector<128x8xf32>
    %114 = arith.addf %108, %113 : vector<128x8xf32>
    %c0_128 = arith.constant 0 : index
    %c1_129 = arith.constant 1 : index
    %c0_130 = arith.constant 0 : index
    %c0_131 = arith.constant 0 : index
    %115 = vector.load %arg11[%c0_128, %c1_129, %c0_130, %c0_131] : memref<2x10x10x8xf32, #tpu.memory_space<vmem>>, vector<2x8x8x8xf32>
    %116 = vector.shape_cast %115 : vector<2x8x8x8xf32> to vector<128x8xf32>
    %c3_132 = arith.constant 3 : index
    %c0_133 = arith.constant 0 : index
    %c0_134 = arith.constant 0 : index
    %117 = vector.load %arg2[%c3_132, %c0_133, %c0_134] : memref<9x8x8xf32, #tpu.memory_space<vmem>>, vector<1x8x8xf32>
    %118 = vector.shape_cast %117 : vector<1x8x8xf32> to vector<8x8xf32>
    %cst_135 = arith.constant dense<0.000000e+00> : vector<128x8xf32>
    %119 = tpu.matmul %116, %118, %cst_135 {dimension_numbers = #tpu.dot_dimension_numbers<[1], [0], [0], [1], [0, 0, 1, 1], [], []>} : vector<128x8xf32>, vector<8x8xf32>, vector<128x8xf32> -> vector<128x8xf32>
    %120 = arith.addf %114, %119 : vector<128x8xf32>
    %c0_136 = arith.constant 0 : index
    %c1_137 = arith.constant 1 : index
    %c1_138 = arith.constant 1 : index
    %c0_139 = arith.constant 0 : index
    %121 = vector.load %arg11[%c0_136, %c1_137, %c1_138, %c0_139] : memref<2x10x10x8xf32, #tpu.memory_space<vmem>>, vector<2x8x8x8xf32>
    %122 = vector.shape_cast %121 : vector<2x8x8x8xf32> to vector<128x8xf32>
    %c4_140 = arith.constant 4 : index
    %c0_141 = arith.constant 0 : index
    %c0_142 = arith.constant 0 : index
    %123 = vector.load %arg2[%c4_140, %c0_141, %c0_142] : memref<9x8x8xf32, #tpu.memory_space<vmem>>, vector<1x8x8xf32>
    %124 = vector.shape_cast %123 : vector<1x8x8xf32> to vector<8x8xf32>
    %cst_143 = arith.constant dense<0.000000e+00> : vector<128x8xf32>
    %125 = tpu.matmul %122, %124, %cst_143 {dimension_numbers = #tpu.dot_dimension_numbers<[1], [0], [0], [1], [0, 0, 1, 1], [], []>} : vector<128x8xf32>, vector<8x8xf32>, vector<128x8xf32> -> vector<128x8xf32>
    %126 = arith.addf %120, %125 : vector<128x8xf32>
    %c0_144 = arith.constant 0 : index
    %c1_145 = arith.constant 1 : index
    %c2_146 = arith.constant 2 : index
    %c0_147 = arith.constant 0 : index
    %127 = vector.load %arg11[%c0_144, %c1_145, %c2_146, %c0_147] : memref<2x10x10x8xf32, #tpu.memory_space<vmem>>, vector<2x8x8x8xf32>
    %128 = vector.shape_cast %127 : vector<2x8x8x8xf32> to vector<128x8xf32>
    %c5_148 = arith.constant 5 : index
    %c0_149 = arith.constant 0 : index
    %c0_150 = arith.constant 0 : index
    %129 = vector.load %arg2[%c5_148, %c0_149, %c0_150] : memref<9x8x8xf32, #tpu.memory_space<vmem>>, vector<1x8x8xf32>
    %130 = vector.shape_cast %129 : vector<1x8x8xf32> to vector<8x8xf32>
    %cst_151 = arith.constant dense<0.000000e+00> : vector<128x8xf32>
    %131 = tpu.matmul %128, %130, %cst_151 {dimension_numbers = #tpu.dot_dimension_numbers<[1], [0], [0], [1], [0, 0, 1, 1], [], []>} : vector<128x8xf32>, vector<8x8xf32>, vector<128x8xf32> -> vector<128x8xf32>
    %132 = arith.addf %126, %131 : vector<128x8xf32>
    %c0_152 = arith.constant 0 : index
    %c2_153 = arith.constant 2 : index
    %c0_154 = arith.constant 0 : index
    %c0_155 = arith.constant 0 : index
    %133 = vector.load %arg11[%c0_152, %c2_153, %c0_154, %c0_155] : memref<2x10x10x8xf32, #tpu.memory_space<vmem>>, vector<2x8x8x8xf32>
    %134 = vector.shape_cast %133 : vector<2x8x8x8xf32> to vector<128x8xf32>
    %c6_156 = arith.constant 6 : index
    %c0_157 = arith.constant 0 : index
    %c0_158 = arith.constant 0 : index
    %135 = vector.load %arg2[%c6_156, %c0_157, %c0_158] : memref<9x8x8xf32, #tpu.memory_space<vmem>>, vector<1x8x8xf32>
    %136 = vector.shape_cast %135 : vector<1x8x8xf32> to vector<8x8xf32>
    %cst_159 = arith.constant dense<0.000000e+00> : vector<128x8xf32>
    %137 = tpu.matmul %134, %136, %cst_159 {dimension_numbers = #tpu.dot_dimension_numbers<[1], [0], [0], [1], [0, 0, 1, 1], [], []>} : vector<128x8xf32>, vector<8x8xf32>, vector<128x8xf32> -> vector<128x8xf32>
    %138 = arith.addf %132, %137 : vector<128x8xf32>
    %c0_160 = arith.constant 0 : index
    %c2_161 = arith.constant 2 : index
    %c1_162 = arith.constant 1 : index
    %c0_163 = arith.constant 0 : index
    %139 = vector.load %arg11[%c0_160, %c2_161, %c1_162, %c0_163] : memref<2x10x10x8xf32, #tpu.memory_space<vmem>>, vector<2x8x8x8xf32>
    %140 = vector.shape_cast %139 : vector<2x8x8x8xf32> to vector<128x8xf32>
    %c7_164 = arith.constant 7 : index
    %c0_165 = arith.constant 0 : index
    %c0_166 = arith.constant 0 : index
    %141 = vector.load %arg2[%c7_164, %c0_165, %c0_166] : memref<9x8x8xf32, #tpu.memory_space<vmem>>, vector<1x8x8xf32>
    %142 = vector.shape_cast %141 : vector<1x8x8xf32> to vector<8x8xf32>
    %cst_167 = arith.constant dense<0.000000e+00> : vector<128x8xf32>
    %143 = tpu.matmul %140, %142, %cst_167 {dimension_numbers = #tpu.dot_dimension_numbers<[1], [0], [0], [1], [0, 0, 1, 1], [], []>} : vector<128x8xf32>, vector<8x8xf32>, vector<128x8xf32> -> vector<128x8xf32>
    %144 = arith.addf %138, %143 : vector<128x8xf32>
    %c0_168 = arith.constant 0 : index
    %c2_169 = arith.constant 2 : index
    %c2_170 = arith.constant 2 : index
    %c0_171 = arith.constant 0 : index
    %145 = vector.load %arg11[%c0_168, %c2_169, %c2_170, %c0_171] : memref<2x10x10x8xf32, #tpu.memory_space<vmem>>, vector<2x8x8x8xf32>
    %146 = vector.shape_cast %145 : vector<2x8x8x8xf32> to vector<128x8xf32>
    %c8_172 = arith.constant 8 : index
    %c0_173 = arith.constant 0 : index
    %c0_174 = arith.constant 0 : index
    %147 = vector.load %arg2[%c8_172, %c0_173, %c0_174] : memref<9x8x8xf32, #tpu.memory_space<vmem>>, vector<1x8x8xf32>
    %148 = vector.shape_cast %147 : vector<1x8x8xf32> to vector<8x8xf32>
    %cst_175 = arith.constant dense<0.000000e+00> : vector<128x8xf32>
    %149 = tpu.matmul %146, %148, %cst_175 {dimension_numbers = #tpu.dot_dimension_numbers<[1], [0], [0], [1], [0, 0, 1, 1], [], []>} : vector<128x8xf32>, vector<8x8xf32>, vector<128x8xf32> -> vector<128x8xf32>
    %150 = arith.addf %144, %149 : vector<128x8xf32>
    %cst_176 = arith.constant dense<0.000000e+00> : vector<8xf32>
    %151 = vector.multi_reduction <add>, %150, %cst_176 [0] : vector<128x8xf32> to vector<8xf32>
    %152 = vector.shape_cast %151 : vector<8xf32> to vector<1x8xf32>
    %cst_177 = arith.constant 1.280000e+02 : f32
    %153 = vector.broadcast %cst_177 : f32 to vector<1x8xf32>
    %154 = arith.divf %152, %153 : vector<1x8xf32>
    %155 = vector.broadcast %154 : vector<1x8xf32> to vector<128x8xf32>
    %156 = arith.subf %150, %155 : vector<128x8xf32>
    %157 = arith.mulf %156, %156 : vector<128x8xf32>
    %cst_178 = arith.constant dense<0.000000e+00> : vector<8xf32>
    %158 = vector.multi_reduction <add>, %157, %cst_178 [0] : vector<128x8xf32> to vector<8xf32>
    %159 = vector.shape_cast %158 : vector<8xf32> to vector<1x8xf32>
    %cst_179 = arith.constant 1.280000e+02 : f32
    %160 = vector.broadcast %cst_179 : f32 to vector<1x8xf32>
    %161 = arith.divf %159, %160 : vector<1x8xf32>
    %c0_180 = arith.constant 0 : index
    %c0_181 = arith.constant 0 : index
    %162 = vector.load %arg6[%c0_180, %c0_181] : memref<1x8xf32, #tpu.memory_space<vmem>>, vector<1x8xf32>
    %163 = vector.broadcast %162 : vector<1x8xf32> to vector<128x8xf32>
    %164 = arith.mulf %163, %156 : vector<128x8xf32>
    %cst_182 = arith.constant 9.99999974E-6 : f32
    %165 = vector.broadcast %cst_182 : f32 to vector<1x8xf32>
    %166 = arith.addf %161, %165 : vector<1x8xf32>
    %167 = math.rsqrt %166 : vector<1x8xf32>
    %168 = vector.broadcast %167 : vector<1x8xf32> to vector<128x8xf32>
    %169 = arith.mulf %164, %168 : vector<128x8xf32>
    %c0_183 = arith.constant 0 : index
    %c0_184 = arith.constant 0 : index
    %170 = vector.load %arg7[%c0_183, %c0_184] : memref<1x8xf32, #tpu.memory_space<vmem>>, vector<1x8xf32>
    %171 = vector.broadcast %170 : vector<1x8xf32> to vector<128x8xf32>
    %172 = arith.addf %169, %171 : vector<128x8xf32>
    %c3_185 = arith.constant 3 : index
    %c0_186 = arith.constant 0 : index
    %c0_187 = arith.constant 0 : index
    %c0_188 = arith.constant 0 : index
    %c0_189 = arith.constant 0 : index
    %173 = vector.load %arg0[%c3_185, %c0_186, %c0_187, %c0_188, %c0_189] : memref<4x2x9x9x4xf32, #tpu.memory_space<vmem>>, vector<1x2x8x8x4xf32>
    %174 = vector.shape_cast %173 : vector<1x2x8x8x4xf32> to vector<2x8x8x4xf32>
    %175 = vector.shape_cast %174 : vector<2x8x8x4xf32> to vector<128x4xf32>
    %c0_190 = arith.constant 0 : index
    %c0_191 = arith.constant 0 : index
    %176 = vector.load %arg3[%c0_190, %c0_191] : memref<4x8xf32, #tpu.memory_space<vmem>>, vector<4x8xf32>
    %cst_192 = arith.constant dense<0.000000e+00> : vector<128x8xf32>
    %177 = tpu.matmul %175, %176, %cst_192 {dimension_numbers = #tpu.dot_dimension_numbers<[1], [0], [0], [1], [0, 0, 1, 1], [], []>} : vector<128x4xf32>, vector<4x8xf32>, vector<128x8xf32> -> vector<128x8xf32>
    %cst_193 = arith.constant dense<0.000000e+00> : vector<8xf32>
    %178 = vector.multi_reduction <add>, %177, %cst_193 [0] : vector<128x8xf32> to vector<8xf32>
    %179 = vector.shape_cast %178 : vector<8xf32> to vector<1x8xf32>
    %cst_194 = arith.constant 1.280000e+02 : f32
    %180 = vector.broadcast %cst_194 : f32 to vector<1x8xf32>
    %181 = arith.divf %179, %180 : vector<1x8xf32>
    %182 = vector.broadcast %181 : vector<1x8xf32> to vector<128x8xf32>
    %183 = arith.subf %177, %182 : vector<128x8xf32>
    %184 = arith.mulf %183, %183 : vector<128x8xf32>
    %cst_195 = arith.constant dense<0.000000e+00> : vector<8xf32>
    %185 = vector.multi_reduction <add>, %184, %cst_195 [0] : vector<128x8xf32> to vector<8xf32>
    %186 = vector.shape_cast %185 : vector<8xf32> to vector<1x8xf32>
    %cst_196 = arith.constant 1.280000e+02 : f32
    %187 = vector.broadcast %cst_196 : f32 to vector<1x8xf32>
    %188 = arith.divf %186, %187 : vector<1x8xf32>
    %c0_197 = arith.constant 0 : index
    %c0_198 = arith.constant 0 : index
    %189 = vector.load %arg8[%c0_197, %c0_198] : memref<1x8xf32, #tpu.memory_space<vmem>>, vector<1x8xf32>
    %190 = vector.broadcast %189 : vector<1x8xf32> to vector<128x8xf32>
    %191 = arith.mulf %190, %183 : vector<128x8xf32>
    %cst_199 = arith.constant 9.99999974E-6 : f32
    %192 = vector.broadcast %cst_199 : f32 to vector<1x8xf32>
    %193 = arith.addf %188, %192 : vector<1x8xf32>
    %194 = math.rsqrt %193 : vector<1x8xf32>
    %195 = vector.broadcast %194 : vector<1x8xf32> to vector<128x8xf32>
    %196 = arith.mulf %191, %195 : vector<128x8xf32>
    %c0_200 = arith.constant 0 : index
    %c0_201 = arith.constant 0 : index
    %197 = vector.load %arg9[%c0_200, %c0_201] : memref<1x8xf32, #tpu.memory_space<vmem>>, vector<1x8xf32>
    %198 = vector.broadcast %197 : vector<1x8xf32> to vector<128x8xf32>
    %199 = arith.addf %196, %198 : vector<128x8xf32>
    %200 = arith.addf %172, %199 : vector<128x8xf32>
    %cst_202 = arith.constant 0.000000e+00 : f32
    %201 = vector.broadcast %cst_202 : f32 to vector<128x8xf32>
    %202 = arith.maximumf %200, %201 : vector<128x8xf32>
    %c0_203 = arith.constant 0 : index
    %c0_204 = arith.constant 0 : index
    %203 = vector.load %arg10[%c0_203, %c0_204] : memref<128x8xf32, #tpu.memory_space<vmem>>, vector<128x8xf32>
    tpu.vector_store %arg10[%c0_203, %c0_204], %202 {strides = array<i32>} : memref<128x8xf32, #tpu.memory_space<vmem>>, vector<128x8xf32>,
    return
  }
}

</mosaic_0001>

<llo_original>
// kernel: tpu_custom_call.1
$region0: #{tpu_custom_call.1}
  #allocation0 [shape = 'u32[]', space=smem, size = 0x4, offset = 0x4, fixed_abs, tag = 'smem constant byte address 0x4 - core index']
  #allocation1 [shape = 'u32[72,128]{1,0:T(1,128)}', space=vmem, size = 0x9000, scoped, tag = 'internal scratch']
  #allocation2 [shape = 'f32[2,10,10,8]{3,2,1,0:T(8,128)}', space=vmem, size = 0x28000, scoped, tag = 'scratch operand']
  %s0 = inlined_call_operand.vmem [shape: f32[4,2,9,9,4], index: 0, kind: input, shape index: {}]
  %s1 = inlined_call_operand.vmem [shape: f32[9,4,8], index: 1, kind: input, shape index: {}]
  %s2 = inlined_call_operand.vmem [shape: f32[9,8,8], index: 2, kind: input, shape index: {}]
  %s3 = inlined_call_operand.vmem [shape: f32[4,8], index: 3, kind: input, shape index: {}]
  %s4 = inlined_call_operand.vmem [shape: f32[1,8], index: 4, kind: input, shape index: {}]
  %s5 = inlined_call_operand.vmem [shape: f32[1,8], index: 5, kind: input, shape index: {}]
  %s6 = inlined_call_operand.vmem [shape: f32[1,8], index: 6, kind: input, shape index: {}]
  %s7 = inlined_call_operand.vmem [shape: f32[1,8], index: 7, kind: input, shape index: {}]
  %s8 = inlined_call_operand.vmem [shape: f32[1,8], index: 8, kind: input, shape index: {}]
  %s9 = inlined_call_operand.vmem [shape: f32[1,8], index: 9, kind: input, shape index: {}]
  %s10 = inlined_call_operand.vmem [shape: f32[128,8], index: 10, kind: output, shape index: {}]
  %s11 = sld [smem:[#allocation0]]
  $region50: #{tpu_custom_call.1} parent=0
    _
  %s13 = ssub.s32 1, %s11
  %s14 = scalar_select 0, %s13, %s11
  // Predicated region
  $region2: #{tpu_custom_call.1} parent=0 // pred_check
    _
  $region3: #{tpu_custom_call.1} parent=0 // pred_check_branch
    %16 = sbr.rel (0) target = $region5
  $region4: #{tpu_custom_call.1} parent=0 // pred_region
    _
  $region5: #{tpu_custom_call.1} parent=0 // pred_fallthru
    _
  // Predicated region
  $region6: #{tpu_custom_call.1} parent=0 // pred_check
    _
  $region7: #{tpu_custom_call.1} parent=0 // pred_check_branch
    %18 = sbr.rel (0) target = $region9
  $region8: #{tpu_custom_call.1} parent=0 // pred_region
    _
  $region9: #{tpu_custom_call.1} parent=0 // pred_fallthru
    _
  // Predicated region
  $region10: #{tpu_custom_call.1} parent=0 // pred_check
    _
  $region11: #{tpu_custom_call.1} parent=0 // pred_check_branch
    %20 = sbr.rel (0) target = $region13
  $region12: #{tpu_custom_call.1} parent=0 // pred_region
    _
  $region13: #{tpu_custom_call.1} parent=0 // pred_fallthru
    _
  // Predicated region
  $region14: #{tpu_custom_call.1} parent=0 // pred_check
    _
  $region15: #{tpu_custom_call.1} parent=0 // pred_check_branch
    %22 = sbr.rel (0) target = $region17
  $region16: #{tpu_custom_call.1} parent=0 // pred_region
    _
  $region17: #{tpu_custom_call.1} parent=0 // pred_fallthru
    _
  // Predicated region
  $region18: #{tpu_custom_call.1} parent=0 // pred_check
    _
  $region19: #{tpu_custom_call.1} parent=0 // pred_check_branch
    %24 = sbr.rel (0) target = $region21
  $region20: #{tpu_custom_call.1} parent=0 // pred_region
    _
  $region21: #{tpu_custom_call.1} parent=0 // pred_fallthru
    _
  // Predicated region
  $region22: #{tpu_custom_call.1} parent=0 // pred_check
    _
  $region23: #{tpu_custom_call.1} parent=0 // pred_check_branch
    %26 = sbr.rel (0) target = $region25
  $region24: #{tpu_custom_call.1} parent=0 // pred_region
    _
  $region25: #{tpu_custom_call.1} parent=0 // pred_fallthru
    _
  // Predicated region
  $region26: #{tpu_custom_call.1} parent=0 // pred_check
    _
  $region27: #{tpu_custom_call.1} parent=0 // pred_check_branch
    %28 = sbr.rel (0) target = $region29
  $region28: #{tpu_custom_call.1} parent=0 // pred_region
    _
  $region29: #{tpu_custom_call.1} parent=0 // pred_fallthru
    _
  // Predicated region
  $region30: #{tpu_custom_call.1} parent=0 // pred_check
    _
  $region31: #{tpu_custom_call.1} parent=0 // pred_check_branch
    %30 = sbr.rel (0) target = $region33
  $region32: #{tpu_custom_call.1} parent=0 // pred_region
    _
  $region33: #{tpu_custom_call.1} parent=0 // pred_fallthru
    _
  // Predicated region
  $region34: #{tpu_custom_call.1} parent=0 // pred_check
    _
  $region35: #{tpu_custom_call.1} parent=0 // pred_check_branch
    %32 = sbr.rel (0) target = $region37
  $region36: #{tpu_custom_call.1} parent=0 // pred_region
    _
  $region37: #{tpu_custom_call.1} parent=0 // pred_fallthru
    _
  // Predicated region
  $region38: #{tpu_custom_call.1} parent=0 // pred_check
    _
  $region39: #{tpu_custom_call.1} parent=0 // pred_check_branch
    %34 = sbr.rel (0) target = $region41
  $region40: #{tpu_custom_call.1} parent=0 // pred_region
    _
  $region41: #{tpu_custom_call.1} parent=0 // pred_fallthru
    _
  %v35 = vld [vmem:[%s0] sm:$0xff]
  %v36 = vld [vmem:[%s0 + $0x10] sm:$0xff]
  %v37 = vld [vmem:[%s0 + $0x20] sm:$0xff]
  %v38 = vld [vmem:[%s0 + $0x30] sm:$0xff]
  %v39 = vld [vmem:[%s0 + $0x40] sm:$0xff]
  %v40 = vld [vmem:[%s0 + $0x50] sm:$0xff]
  %v41 = vld [vmem:[%s0 + $0x60] sm:$0xff]
  %v42 = vld [vmem:[%s0 + $0x70] sm:$0xff]
  %v43 = vld [vmem:[%s0 + $0x90] sm:$0xff]
  %v44 = vld [vmem:[%s0 + $0xa0] sm:$0xff]
  %v45 = vld [vmem:[%s0 + $0xb0] sm:$0xff]
  %v46 = vld [vmem:[%s0 + $0xc0] sm:$0xff]
  %v47 = vld [vmem:[%s0 + $0xd0] sm:$0xff]
  %v48 = vld [vmem:[%s0 + $0xe0] sm:$0xff]
  %v49 = vld [vmem:[%s0 + $0xf0] sm:$0xff]
  %v50 = vld [vmem:[%s0 + $0x100] sm:$0xff]
  %v51 = vld [vmem:[%s1] sm:$0xf]
  %s52 = scalar_lea.vmem %s0, 288
  %v53 = vld [vmem:[%s52] sm:$0xff]
  %v54 = vld [vmem:[%s52 + $0x10] sm:$0xff]
  %v55 = vld [vmem:[%s52 + $0x20] sm:$0xff]
  %v56 = vld [vmem:[%s52 + $0x30] sm:$0xff]
  %v57 = vld [vmem:[%s52 + $0x40] sm:$0xff]
  %v58 = vld [vmem:[%s52 + $0x50] sm:$0xff]
  %v59 = vld [vmem:[%s52 + $0x60] sm:$0xff]
  %v60 = vld [vmem:[%s52 + $0x70] sm:$0xff]
  %v61 = vld [vmem:[%s52 + $0x90] sm:$0xff]
  %v62 = vld [vmem:[%s52 + $0xa0] sm:$0xff]
  %v63 = vld [vmem:[%s52 + $0xb0] sm:$0xff]
  %v64 = vld [vmem:[%s52 + $0xc0] sm:$0xff]
  %v65 = vld [vmem:[%s52 + $0xd0] sm:$0xff]
  %v66 = vld [vmem:[%s52 + $0xe0] sm:$0xff]
  %v67 = vld [vmem:[%s52 + $0xf0] sm:$0xff]
  %v68 = vld [vmem:[%s52 + $0x100] sm:$0xff]
  %s69 = scalar_lea.vmem %s1, 4
  %v70 = vld [vmem:[%s69] sm:$0xf]
  %vm71 = vcmask 31744
  %v73 = vsel %vm71, %v53, 0
  %v76 = vsel %vm71, %v54, 0
  %v79 = vsel %vm71, %v55, 0
  %v82 = vsel %vm71, %v56, 0
  %v85 = vsel %vm71, %v57, 0
  %v88 = vsel %vm71, %v58, 0
  %v91 = vsel %vm71, %v59, 0
  %v94 = vsel %vm71, %v60, 0
  %v97 = vsel %vm71, %v61, 0
  %v100 = vsel %vm71, %v62, 0
  %v103 = vsel %vm71, %v63, 0
  %v106 = vsel %vm71, %v64, 0
  %v109 = vsel %vm71, %v65, 0
  %v112 = vsel %vm71, %v66, 0
  %v115 = vsel %vm71, %v67, 0
  %v118 = vsel %vm71, %v68, 0
  %vm120 = vcmask 1043456
  %v122 = vsel %vm120, %v70, 0
  %124 = vmatpush.msra.mxu0 0.0
  %125 = vmatpush.msra.mxu0 0.0
  %126 = vmatpush.msra.mxu0 0.0
  %127 = vmatpush.msra.mxu0 0.0
  %128 = vmatpush.msra.mxu0 0.0
  %129 = vmatpush.msra.mxu0 0.0
  %130 = vmatpush.msra.mxu0 0.0
  %131 = vmatpush.msra.mxu0 0.0
  %132 = vmatpush.msra.mxu0 0.0
  %133 = vmatpush.msra.mxu0 0.0
  %134 = vmatpush.msra.mxu0 0.0
  %135 = vmatpush.msra.mxu0 0.0
  %136 = vmatpush.msra.mxu0 0.0
  %137 = vmatpush.msra.mxu0 0.0
  %138 = vmatpush.msra.mxu0 0.0
  %139 = vmatpush.msra.mxu0 %v122
  %140 = vmatmul.f32.gmra.mxu0 %v73
  %v141 = vpop.f32.mrf.mxu0
  %v142 = vadd.f32 0.0, %v141
  %143 = vmatmul.f32.gmra.mxu0 %v76
  %v144 = vpop.f32.mrf.mxu0
  %v145 = vadd.f32 0.0, %v144
  %146 = vmatmul.f32.gmra.mxu0 %v79
  %v147 = vpop.f32.mrf.mxu0
  %v148 = vadd.f32 0.0, %v147
  %149 = vmatmul.f32.gmra.mxu0 %v82
  %v150 = vpop.f32.mrf.mxu0
  %v151 = vadd.f32 0.0, %v150
  %152 = vmatmul.f32.gmra.mxu0 %v85
  %v153 = vpop.f32.mrf.mxu0
  %v154 = vadd.f32 0.0, %v153
  %155 = vmatmul.f32.gmra.mxu0 %v88
  %v156 = vpop.f32.mrf.mxu0
  %v157 = vadd.f32 0.0, %v156
  %158 = vmatmul.f32.gmra.mxu0 %v91
  %v159 = vpop.f32.mrf.mxu0
  %v160 = vadd.f32 0.0, %v159
  %161 = vmatmul.f32.gmra.mxu0 %v94
  %v162 = vpop.f32.mrf.mxu0
  %v163 = vadd.f32 0.0, %v162
  %164 = vmatmul.f32.gmra.mxu0 %v97
  %v165 = vpop.f32.mrf.mxu0
  %v166 = vadd.f32 0.0, %v165
  %167 = vmatmul.f32.gmra.mxu0 %v100
  %v168 = vpop.f32.mrf.mxu0
  %v169 = vadd.f32 0.0, %v168
  %170 = vmatmul.f32.gmra.mxu0 %v103
  %v171 = vpop.f32.mrf.mxu0
  %v172 = vadd.f32 0.0, %v171
  %173 = vmatmul.f32.gmra.mxu0 %v106
  %v174 = vpop.f32.mrf.mxu0
  %v175 = vadd.f32 0.0, %v174
  %176 = vmatmul.f32.gmra.mxu0 %v109
  %v177 = vpop.f32.mrf.mxu0
  %v178 = vadd.f32 0.0, %v177
  %179 = vmatmul.f32.gmra.mxu0 %v112
  %v180 = vpop.f32.mrf.mxu0
  %v181 = vadd.f32 0.0, %v180
  %182 = vmatmul.f32.gmra.mxu0 %v115
  %v183 = vpop.f32.mrf.mxu0
  %v184 = vadd.f32 0.0, %v183
  %185 = vmatmul.f32.gmra.mxu0 %v118
  %v186 = vpop.f32.mrf.mxu0
  %v187 = vadd.f32 0.0, %v186
  %188 = vdwg.mxu0
  %v190 = vsel %vm71, %v35, 0
  %v193 = vsel %vm71, %v36, 0
  %v196 = vsel %vm71, %v37, 0
  %v199 = vsel %vm71, %v38, 0
  %v202 = vsel %vm71, %v39, 0
  %v205 = vsel %vm71, %v40, 0
  %v208 = vsel %vm71, %v41, 0
  %v211 = vsel %vm71, %v42, 0
  %v214 = vsel %vm71, %v43, 0
  %v217 = vsel %vm71, %v44, 0
  %v220 = vsel %vm71, %v45, 0
  %v223 = vsel %vm71, %v46, 0
  %v226 = vsel %vm71, %v47, 0
  %v229 = vsel %vm71, %v48, 0
  %v232 = vsel %vm71, %v49, 0
  %v235 = vsel %vm71, %v50, 0
  %v238 = vsel %vm120, %v51, 0
  %240 = vmatpush.msra.mxu0 0.0
  %241 = vmatpush.msra.mxu0 0.0
  %242 = vmatpush.msra.mxu0 0.0
  %243 = vmatpush.msra.mxu0 0.0
  %244 = vmatpush.msra.mxu0 0.0
  %245 = vmatpush.msra.mxu0 0.0
  %246 = vmatpush.msra.mxu0 0.0
  %247 = vmatpush.msra.mxu0 0.0
  %248 = vmatpush.msra.mxu0 0.0
  %249 = vmatpush.msra.mxu0 0.0
  %250 = vmatpush.msra.mxu0 0.0
  %251 = vmatpush.msra.mxu0 0.0
  %252 = vmatpush.msra.mxu0 0.0
  %253 = vmatpush.msra.mxu0 0.0
  %254 = vmatpush.msra.mxu0 0.0
  %255 = vmatpush.msra.mxu0 %v238
  %256 = vmatmul.f32.gmra.mxu0 %v190
  %v257 = vpop.f32.mrf.mxu0
  %v258 = vadd.f32 %v142, %v257
  %259 = vmatmul.f32.gmra.mxu0 %v193
  %v260 = vpop.f32.mrf.mxu0
  %v261 = vadd.f32 %v145, %v260
  %262 = vmatmul.f32.gmra.mxu0 %v196
  %v263 = vpop.f32.mrf.mxu0
  %v264 = vadd.f32 %v148, %v263
  %265 = vmatmul.f32.gmra.mxu0 %v199
  %v266 = vpop.f32.mrf.mxu0
  %v267 = vadd.f32 %v151, %v266
  %268 = vmatmul.f32.gmra.mxu0 %v202
  %v269 = vpop.f32.mrf.mxu0
  %v270 = vadd.f32 %v154, %v269
  %271 = vmatmul.f32.gmra.mxu0 %v205
  %v272 = vpop.f32.mrf.mxu0
  %v273 = vadd.f32 %v157, %v272
  %274 = vmatmul.f32.gmra.mxu0 %v208
  %v275 = vpop.f32.mrf.mxu0
  %v276 = vadd.f32 %v160, %v275
  %277 = vmatmul.f32.gmra.mxu0 %v211
  %v278 = vpop.f32.mrf.mxu0
  %v279 = vadd.f32 %v163, %v278
  %280 = vmatmul.f32.gmra.mxu0 %v214
  %v281 = vpop.f32.mrf.mxu0
  %v282 = vadd.f32 %v166, %v281
  %283 = vmatmul.f32.gmra.mxu0 %v217
  %v284 = vpop.f32.mrf.mxu0
  %v285 = vadd.f32 %v169, %v284
  %286 = vmatmul.f32.gmra.mxu0 %v220
  %v287 = vpop.f32.mrf.mxu0
  %v288 = vadd.f32 %v172, %v287
  %289 = vmatmul.f32.gmra.mxu0 %v223
  %v290 = vpop.f32.mrf.mxu0
  %v291 = vadd.f32 %v175, %v290
  %292 = vmatmul.f32.gmra.mxu0 %v226
  %v293 = vpop.f32.mrf.mxu0
  %v294 = vadd.f32 %v178, %v293
  %295 = vmatmul.f32.gmra.mxu0 %v229
  %v296 = vpop.f32.mrf.mxu0
  %v297 = vadd.f32 %v181, %v296
  %298 = vmatmul.f32.gmra.mxu0 %v232
  %v299 = vpop.f32.mrf.mxu0
  %v300 = vadd.f32 %v184, %v299
  %301 = vmatmul.f32.gmra.mxu0 %v235
  %v302 = vpop.f32.mrf.mxu0
  %v303 = vadd.f32 %v187, %v302
  %304 = vdwg.mxu0
  %v305 = vld [vmem:[%s0 + $0x1] sm:$0xff]
  %v306 = vld [vmem:[%s0 + $0x11] sm:$0xff]
  %v307 = vld [vmem:[%s0 + $0x21] sm:$0xff]
  %v308 = vld [vmem:[%s0 + $0x31] sm:$0xff]
  %v309 = vld [vmem:[%s0 + $0x41] sm:$0xff]
  %v310 = vld [vmem:[%s0 + $0x51] sm:$0xff]
  %v311 = vld [vmem:[%s0 + $0x61] sm:$0xff]
  %v312 = vld [vmem:[%s0 + $0x71] sm:$0xff]
  %v313 = vld [vmem:[%s0 + $0x91] sm:$0xff]
  %v314 = vld [vmem:[%s0 + $0xa1] sm:$0xff]
  %v315 = vld [vmem:[%s0 + $0xb1] sm:$0xff]
  %v316 = vld [vmem:[%s0 + $0xc1] sm:$0xff]
  %v317 = vld [vmem:[%s0 + $0xd1] sm:$0xff]
  %v318 = vld [vmem:[%s0 + $0xe1] sm:$0xff]
  %v319 = vld [vmem:[%s0 + $0xf1] sm:$0xff]
  %v320 = vld [vmem:[%s0 + $0x101] sm:$0xff]
  %s321 = scalar_lea.vmem %s1, 8
  %v322 = vld [vmem:[%s321] sm:$0xf]
  %v324 = vsel %vm71, %v305, 0
  %v327 = vsel %vm71, %v306, 0
  %v330 = vsel %vm71, %v307, 0
  %v333 = vsel %vm71, %v308, 0
  %v336 = vsel %vm71, %v309, 0
  %v339 = vsel %vm71, %v310, 0
  %v342 = vsel %vm71, %v311, 0
  %v345 = vsel %vm71, %v312, 0
  %v348 = vsel %vm71, %v313, 0
  %v351 = vsel %vm71, %v314, 0
  %v354 = vsel %vm71, %v315, 0
  %v357 = vsel %vm71, %v316, 0
  %v360 = vsel %vm71, %v317, 0
  %v363 = vsel %vm71, %v318, 0
  %v366 = vsel %vm71, %v319, 0
  %v369 = vsel %vm71, %v320, 0
  %v372 = vsel %vm120, %v322, 0
  %374 = vmatpush.msra.mxu0 0.0
  %375 = vmatpush.msra.mxu0 0.0
  %376 = vmatpush.msra.mxu0 0.0
  %377 = vmatpush.msra.mxu0 0.0
  %378 = vmatpush.msra.mxu0 0.0
  %379 = vmatpush.msra.mxu0 0.0
  %380 = vmatpush.msra.mxu0 0.0
  %381 = vmatpush.msra.mxu0 0.0
  %382 = vmatpush.msra.mxu0 0.0
  %383 = vmatpush.msra.mxu0 0.0
  %384 = vmatpush.msra.mxu0 0.0
  %385 = vmatpush.msra.mxu0 0.0
  %386 = vmatpush.msra.mxu0 0.0
  %387 = vmatpush.msra.mxu0 0.0
  %388 = vmatpush.msra.mxu0 0.0
  %389 = vmatpush.msra.mxu0 %v372
  %390 = vmatmul.f32.gmra.mxu0 %v324
  %v391 = vpop.f32.mrf.mxu0
  %v392 = vadd.f32 0.0, %v391
  %393 = vmatmul.f32.gmra.mxu0 %v327
  %v394 = vpop.f32.mrf.mxu0
  %v395 = vadd.f32 0.0, %v394
  %396 = vmatmul.f32.gmra.mxu0 %v330
  %v397 = vpop.f32.mrf.mxu0
  %v398 = vadd.f32 0.0, %v397
  %399 = vmatmul.f32.gmra.mxu0 %v333
  %v400 = vpop.f32.mrf.mxu0
  %v401 = vadd.f32 0.0, %v400
  %402 = vmatmul.f32.gmra.mxu0 %v336
  %v403 = vpop.f32.mrf.mxu0
  %v404 = vadd.f32 0.0, %v403
  %405 = vmatmul.f32.gmra.mxu0 %v339
  %v406 = vpop.f32.mrf.mxu0
  %v407 = vadd.f32 0.0, %v406
  %408 = vmatmul.f32.gmra.mxu0 %v342
  %v409 = vpop.f32.mrf.mxu0
  %v410 = vadd.f32 0.0, %v409
  %411 = vmatmul.f32.gmra.mxu0 %v345
  %v412 = vpop.f32.mrf.mxu0
  %v413 = vadd.f32 0.0, %v412
  %414 = vmatmul.f32.gmra.mxu0 %v348
  %v415 = vpop.f32.mrf.mxu0
  %v416 = vadd.f32 0.0, %v415
  %417 = vmatmul.f32.gmra.mxu0 %v351
  %v418 = vpop.f32.mrf.mxu0
  %v419 = vadd.f32 0.0, %v418
  %420 = vmatmul.f32.gmra.mxu0 %v354
  %v421 = vpop.f32.mrf.mxu0
  %v422 = vadd.f32 0.0, %v421
  %423 = vmatmul.f32.gmra.mxu0 %v357
  %v424 = vpop.f32.mrf.mxu0
  %v425 = vadd.f32 0.0, %v424
  %426 = vmatmul.f32.gmra.mxu0 %v360
  %v427 = vpop.f32.mrf.mxu0
  %v428 = vadd.f32 0.0, %v427
  %429 = vmatmul.f32.gmra.mxu0 %v363
  %v430 = vpop.f32.mrf.mxu0
  %v431 = vadd.f32 0.0, %v430
  %432 = vmatmul.f32.gmra.mxu0 %v366
  %v433 = vpop.f32.mrf.mxu0
  %v434 = vadd.f32 0.0, %v433
  %435 = vmatmul.f32.gmra.mxu0 %v369
  %v436 = vpop.f32.mrf.mxu0
  %v437 = vadd.f32 0.0, %v436
  %438 = vdwg.mxu0
  %v439 = vadd.f32 %v258, %v392
  %v440 = vadd.f32 %v261, %v395
  %v441 = vadd.f32 %v264, %v398
  %v442 = vadd.f32 %v267, %v401
  %v443 = vadd.f32 %v270, %v404
  %v444 = vadd.f32 %v273, %v407
  %v445 = vadd.f32 %v276, %v410
  %v446 = vadd.f32 %v279, %v413
  %v447 = vadd.f32 %v282, %v416
  %v448 = vadd.f32 %v285, %v419
  %v449 = vadd.f32 %v288, %v422
  %v450 = vadd.f32 %v291, %v425
  %v451 = vadd.f32 %v294, %v428
  %v452 = vadd.f32 %v297, %v431
  %v453 = vadd.f32 %v300, %v434
  %v454 = vadd.f32 %v303, %v437
  %s455 = scalar_lea.vmem %s0, 576
  %v456 = vld [vmem:[%s455] sm:$0xff]
  %v457 = vld [vmem:[%s455 + $0x10] sm:$0xff]
  %v458 = vld [vmem:[%s455 + $0x20] sm:$0xff]
  %v459 = vld [vmem:[%s455 + $0x30] sm:$0xff]
  %v460 = vld [vmem:[%s455 + $0x40] sm:$0xff]
  %v461 = vld [vmem:[%s455 + $0x50] sm:$0xff]
  %v462 = vld [vmem:[%s455 + $0x60] sm:$0xff]
  %v463 = vld [vmem:[%s455 + $0x70] sm:$0xff]
  %v464 = vld [vmem:[%s455 + $0x90] sm:$0xff]
  %v465 = vld [vmem:[%s455 + $0xa0] sm:$0xff]
  %v466 = vld [vmem:[%s455 + $0xb0] sm:$0xff]
  %v467 = vld [vmem:[%s455 + $0xc0] sm:$0xff]
  %v468 = vld [vmem:[%s455 + $0xd0] sm:$0xff]
  %v469 = vld [vmem:[%s455 + $0xe0] sm:$0xff]
  %v470 = vld [vmem:[%s455 + $0xf0] sm:$0xff]
  %v471 = vld [vmem:[%s455 + $0x100] sm:$0xff]
  %s472 = scalar_lea.vmem %s1, 12
  %v473 = vld [vmem:[%s472] sm:$0xf]
  %v475 = vsel %vm71, %v456, 0
  %v478 = vsel %vm71, %v457, 0
  %v481 = vsel %vm71, %v458, 0
  %v484 = vsel %vm71, %v459, 0
  %v487 = vsel %vm71, %v460, 0
  %v490 = vsel %vm71, %v461, 0
  %v493 = vsel %vm71, %v462, 0
  %v496 = vsel %vm71, %v463, 0
  %v499 = vsel %vm71, %v464, 0
  %v502 = vsel %vm71, %v465, 0
  %v505 = vsel %vm71, %v466, 0
  %v508 = vsel %vm71, %v467, 0
  %v511 = vsel %vm71, %v468, 0
  %v514 = vsel %vm71, %v469, 0
  %v517 = vsel %vm71, %v470, 0
  %v520 = vsel %vm71, %v471, 0
  %v523 = vsel %vm120, %v473, 0
  %525 = vmatpush.msra.mxu0 0.0
  %526 = vmatpush.msra.mxu0 0.0
  %527 = vmatpush.msra.mxu0 0.0
  %528 = vmatpush.msra.mxu0 0.0
  %529 = vmatpush.msra.mxu0 0.0
  %530 = vmatpush.msra.mxu0 0.0
  %531 = vmatpush.msra.mxu0 0.0
  %532 = vmatpush.msra.mxu0 0.0
  %533 = vmatpush.msra.mxu0 0.0
  %534 = vmatpush.msra.mxu0 0.0
  %535 = vmatpush.msra.mxu0 0.0
  %536 = vmatpush.msra.mxu0 0.0
  %537 = vmatpush.msra.mxu0 0.0
  %538 = vmatpush.msra.mxu0 0.0
  %539 = vmatpush.msra.mxu0 0.0
  %540 = vmatpush.msra.mxu0 %v523
  %541 = vmatmul.f32.gmra.mxu0 %v475
  %v542 = vpop.f32.mrf.mxu0
  %v543 = vadd.f32 0.0, %v542
  %544 = vmatmul.f32.gmra.mxu0 %v478
  %v545 = vpop.f32.mrf.mxu0
  %v546 = vadd.f32 0.0, %v545
  %547 = vmatmul.f32.gmra.mxu0 %v481
  %v548 = vpop.f32.mrf.mxu0
  %v549 = vadd.f32 0.0, %v548
  %550 = vmatmul.f32.gmra.mxu0 %v484
  %v551 = vpop.f32.mrf.mxu0
  %v552 = vadd.f32 0.0, %v551
  %553 = vmatmul.f32.gmra.mxu0 %v487
  %v554 = vpop.f32.mrf.mxu0
  %v555 = vadd.f32 0.0, %v554
  %556 = vmatmul.f32.gmra.mxu0 %v490
  %v557 = vpop.f32.mrf.mxu0
  %v558 = vadd.f32 0.0, %v557
  %559 = vmatmul.f32.gmra.mxu0 %v493
  %v560 = vpop.f32.mrf.mxu0
  %v561 = vadd.f32 0.0, %v560
  %562 = vmatmul.f32.gmra.mxu0 %v496
  %v563 = vpop.f32.mrf.mxu0
  %v564 = vadd.f32 0.0, %v563
  %565 = vmatmul.f32.gmra.mxu0 %v499
  %v566 = vpop.f32.mrf.mxu0
  %v567 = vadd.f32 0.0, %v566
  %568 = vmatmul.f32.gmra.mxu0 %v502
  %v569 = vpop.f32.mrf.mxu0
  %v570 = vadd.f32 0.0, %v569
  %571 = vmatmul.f32.gmra.mxu0 %v505
  %v572 = vpop.f32.mrf.mxu0
  %v573 = vadd.f32 0.0, %v572
  %574 = vmatmul.f32.gmra.mxu0 %v508
  %v575 = vpop.f32.mrf.mxu0
  %v576 = vadd.f32 0.0, %v575
  %577 = vmatmul.f32.gmra.mxu0 %v511
  %v578 = vpop.f32.mrf.mxu0
  %v579 = vadd.f32 0.0, %v578
  %580 = vmatmul.f32.gmra.mxu0 %v514
  %v581 = vpop.f32.mrf.mxu0
  %v582 = vadd.f32 0.0, %v581
  %583 = vmatmul.f32.gmra.mxu0 %v517
  %v584 = vpop.f32.mrf.mxu0
  %v585 = vadd.f32 0.0, %v584
  %586 = vmatmul.f32.gmra.mxu0 %v520
  %v587 = vpop.f32.mrf.mxu0
  %v588 = vadd.f32 0.0, %v587
  %589 = vdwg.mxu0
  %v590 = vadd.f32 %v439, %v543
  %v591 = vadd.f32 %v440, %v546
  %v592 = vadd.f32 %v441, %v549
  %v593 = vadd.f32 %v442, %v552
  %v594 = vadd.f32 %v443, %v555
  %v595 = vadd.f32 %v444, %v558
  %v596 = vadd.f32 %v445, %v561
  %v597 = vadd.f32 %v446, %v564
  %v598 = vadd.f32 %v447, %v567
  %v599 = vadd.f32 %v448, %v570
  %v600 = vadd.f32 %v449, %v573
  %v601 = vadd.f32 %v450, %v576
  %v602 = vadd.f32 %v451, %v579
  %v603 = vadd.f32 %v452, %v582
  %v604 = vadd.f32 %v453, %v585
  %v605 = vadd.f32 %v454, %v588
  %s606 = scalar_lea.vmem %s0, 864
  %v607 = vld [vmem:[%s606] sm:$0xff]
  %v608 = vld [vmem:[%s606 + $0x10] sm:$0xff]
  %v609 = vld [vmem:[%s606 + $0x20] sm:$0xff]
  %v610 = vld [vmem:[%s606 + $0x30] sm:$0xff]
  %v611 = vld [vmem:[%s606 + $0x40] sm:$0xff]
  %v612 = vld [vmem:[%s606 + $0x50] sm:$0xff]
  %v613 = vld [vmem:[%s606 + $0x60] sm:$0xff]
  %v614 = vld [vmem:[%s606 + $0x70] sm:$0xff]
  %v615 = vld [vmem:[%s606 + $0x90] sm:$0xff]
  %v616 = vld [vmem:[%s606 + $0xa0] sm:$0xff]
  %v617 = vld [vmem:[%s606 + $0xb0] sm:$0xff]
  %v618 = vld [vmem:[%s606 + $0xc0] sm:$0xff]
  %v619 = vld [vmem:[%s606 + $0xd0] sm:$0xff]
  %v620 = vld [vmem:[%s606 + $0xe0] sm:$0xff]
  %v621 = vld [vmem:[%s606 + $0xf0] sm:$0xff]
  %v622 = vld [vmem:[%s606 + $0x100] sm:$0xff]
  %s623 = scalar_lea.vmem %s1, 16
  %v624 = vld [vmem:[%s623] sm:$0xf]
  %v626 = vsel %vm71, %v607, 0
  %v629 = vsel %vm71, %v608, 0
  %v632 = vsel %vm71, %v609, 0
  %v635 = vsel %vm71, %v610, 0
  %v638 = vsel %vm71, %v611, 0
  %v641 = vsel %vm71, %v612, 0
  %v644 = vsel %vm71, %v613, 0
  %v647 = vsel %vm71, %v614, 0
  %v650 = vsel %vm71, %v615, 0
  %v653 = vsel %vm71, %v616, 0
  %v656 = vsel %vm71, %v617, 0
  %v659 = vsel %vm71, %v618, 0
  %v662 = vsel %vm71, %v619, 0
  %v665 = vsel %vm71, %v620, 0
  %v668 = vsel %vm71, %v621, 0
  %v671 = vsel %vm71, %v622, 0
  %v674 = vsel %vm120, %v624, 0
  %676 = vmatpush.msra.mxu0 0.0
  %677 = vmatpush.msra.mxu0 0.0
  %678 = vmatpush.msra.mxu0 0.0
  %679 = vmatpush.msra.mxu0 0.0
  %680 = vmatpush.msra.mxu0 0.0
  %681 = vmatpush.msra.mxu0 0.0
  %682 = vmatpush.msra.mxu0 0.0
  %683 = vmatpush.msra.mxu0 0.0
  %684 = vmatpush.msra.mxu0 0.0
  %685 = vmatpush.msra.mxu0 0.0
  %686 = vmatpush.msra.mxu0 0.0
  %687 = vmatpush.msra.mxu0 0.0
  %688 = vmatpush.msra.mxu0 0.0
  %689 = vmatpush.msra.mxu0 0.0
  %690 = vmatpush.msra.mxu0 0.0
  %691 = vmatpush.msra.mxu0 %v674
  %692 = vmatmul.f32.gmra.mxu0 %v626
  %v693 = vpop.f32.mrf.mxu0
  %v694 = vadd.f32 0.0, %v693
  %695 = vmatmul.f32.gmra.mxu0 %v629
  %v696 = vpop.f32.mrf.mxu0
  %v697 = vadd.f32 0.0, %v696
  %698 = vmatmul.f32.gmra.mxu0 %v632
  %v699 = vpop.f32.mrf.mxu0
  %v700 = vadd.f32 0.0, %v699
  %701 = vmatmul.f32.gmra.mxu0 %v635
  %v702 = vpop.f32.mrf.mxu0
  %v703 = vadd.f32 0.0, %v702
  %704 = vmatmul.f32.gmra.mxu0 %v638
  %v705 = vpop.f32.mrf.mxu0
  %v706 = vadd.f32 0.0, %v705
  %707 = vmatmul.f32.gmra.mxu0 %v641
  %v708 = vpop.f32.mrf.mxu0
  %v709 = vadd.f32 0.0, %v708
  %710 = vmatmul.f32.gmra.mxu0 %v644
  %v711 = vpop.f32.mrf.mxu0
  %v712 = vadd.f32 0.0, %v711
  %713 = vmatmul.f32.gmra.mxu0 %v647
  %v714 = vpop.f32.mrf.mxu0
  %v715 = vadd.f32 0.0, %v714
  %716 = vmatmul.f32.gmra.mxu0 %v650
  %v717 = vpop.f32.mrf.mxu0
  %v718 = vadd.f32 0.0, %v717
  %719 = vmatmul.f32.gmra.mxu0 %v653
  %v720 = vpop.f32.mrf.mxu0
  %v721 = vadd.f32 0.0, %v720
  %722 = vmatmul.f32.gmra.mxu0 %v656
  %v723 = vpop.f32.mrf.mxu0
  %v724 = vadd.f32 0.0, %v723
  %725 = vmatmul.f32.gmra.mxu0 %v659
  %v726 = vpop.f32.mrf.mxu0
  %v727 = vadd.f32 0.0, %v726
  %728 = vmatmul.f32.gmra.mxu0 %v662
  %v729 = vpop.f32.mrf.mxu0
  %v730 = vadd.f32 0.0, %v729
  %731 = vmatmul.f32.gmra.mxu0 %v665
  %v732 = vpop.f32.mrf.mxu0
  %v733 = vadd.f32 0.0, %v732
  %734 = vmatmul.f32.gmra.mxu0 %v668
  %v735 = vpop.f32.mrf.mxu0
  %v736 = vadd.f32 0.0, %v735
  %737 = vmatmul.f32.gmra.mxu0 %v671
  %v738 = vpop.f32.mrf.mxu0
  %v739 = vadd.f32 0.0, %v738
  %740 = vdwg.mxu0
  %v741 = vadd.f32 %v590, %v694
  %v742 = vadd.f32 %v591, %v697
  %v743 = vadd.f32 %v592, %v700
  %v744 = vadd.f32 %v593, %v703
  %v745 = vadd.f32 %v594, %v706
  %v746 = vadd.f32 %v595, %v709
  %v747 = vadd.f32 %v596, %v712
  %v748 = vadd.f32 %v597, %v715
  %v749 = vadd.f32 %v598, %v718
  %v750 = vadd.f32 %v599, %v721
  %v751 = vadd.f32 %v600, %v724
  %v752 = vadd.f32 %v601, %v727
  %v753 = vadd.f32 %v602, %v730
  %v754 = vadd.f32 %v603, %v733
  %v755 = vadd.f32 %v604, %v736
  %v756 = vadd.f32 %v605, %v739
  %v757 = vld [vmem:[%s455 + $0x1] sm:$0xff]
  %v758 = vld [vmem:[%s455 + $0x11] sm:$0xff]
  %v759 = vld [vmem:[%s455 + $0x21] sm:$0xff]
  %v760 = vld [vmem:[%s455 + $0x31] sm:$0xff]
  %v761 = vld [vmem:[%s455 + $0x41] sm:$0xff]
  %v762 = vld [vmem:[%s455 + $0x51] sm:$0xff]
  %v763 = vld [vmem:[%s455 + $0x61] sm:$0xff]
  %v764 = vld [vmem:[%s455 + $0x71] sm:$0xff]
  %v765 = vld [vmem:[%s455 + $0x91] sm:$0xff]
  %v766 = vld [vmem:[%s455 + $0xa1] sm:$0xff]
  %v767 = vld [vmem:[%s455 + $0xb1] sm:$0xff]
  %v768 = vld [vmem:[%s455 + $0xc1] sm:$0xff]
  %v769 = vld [vmem:[%s455 + $0xd1] sm:$0xff]
  %v770 = vld [vmem:[%s455 + $0xe1] sm:$0xff]
  %v771 = vld [vmem:[%s455 + $0xf1] sm:$0xff]
  %v772 = vld [vmem:[%s455 + $0x101] sm:$0xff]
  %s773 = scalar_lea.vmem %s1, 20
  %v774 = vld [vmem:[%s773] sm:$0xf]
  %v776 = vsel %vm71, %v757, 0
  %v779 = vsel %vm71, %v758, 0
  %v782 = vsel %vm71, %v759, 0
  %v785 = vsel %vm71, %v760, 0
  %v788 = vsel %vm71, %v761, 0
  %v791 = vsel %vm71, %v762, 0
  %v794 = vsel %vm71, %v763, 0
  %v797 = vsel %vm71, %v764, 0
  %v800 = vsel %vm71, %v765, 0
  %v803 = vsel %vm71, %v766, 0
  %v806 = vsel %vm71, %v767, 0
  %v809 = vsel %vm71, %v768, 0
  %v812 = vsel %vm71, %v769, 0
  %v815 = vsel %vm71, %v770, 0
  %v818 = vsel %vm71, %v771, 0
  %v821 = vsel %vm71, %v772, 0
  %v824 = vsel %vm120, %v774, 0
  %826 = vmatpush.msra.mxu0 0.0
  %827 = vmatpush.msra.mxu0 0.0
  %828 = vmatpush.msra.mxu0 0.0
  %829 = vmatpush.msra.mxu0 0.0
  %830 = vmatpush.msra.mxu0 0.0
  %831 = vmatpush.msra.mxu0 0.0
  %832 = vmatpush.msra.mxu0 0.0
  %833 = vmatpush.msra.mxu0 0.0
  %834 = vmatpush.msra.mxu0 0.0
  %835 = vmatpush.msra.mxu0 0.0
  %836 = vmatpush.msra.mxu0 0.0
  %837 = vmatpush.msra.mxu0 0.0
  %838 = vmatpush.msra.mxu0 0.0
  %839 = vmatpush.msra.mxu0 0.0
  %840 = vmatpush.msra.mxu0 0.0
  %841 = vmatpush.msra.mxu0 %v824
  %842 = vmatmul.f32.gmra.mxu0 %v776
  %v843 = vpop.f32.mrf.mxu0
  %v844 = vadd.f32 0.0, %v843
  %845 = vmatmul.f32.gmra.mxu0 %v779
  %v846 = vpop.f32.mrf.mxu0
  %v847 = vadd.f32 0.0, %v846
  %848 = vmatmul.f32.gmra.mxu0 %v782
  %v849 = vpop.f32.mrf.mxu0
  %v850 = vadd.f32 0.0, %v849
  %851 = vmatmul.f32.gmra.mxu0 %v785
  %v852 = vpop.f32.mrf.mxu0
  %v853 = vadd.f32 0.0, %v852
  %854 = vmatmul.f32.gmra.mxu0 %v788
  %v855 = vpop.f32.mrf.mxu0
  %v856 = vadd.f32 0.0, %v855
  %857 = vmatmul.f32.gmra.mxu0 %v791
  %v858 = vpop.f32.mrf.mxu0
  %v859 = vadd.f32 0.0, %v858
  %860 = vmatmul.f32.gmra.mxu0 %v794
  %v861 = vpop.f32.mrf.mxu0
  %v862 = vadd.f32 0.0, %v861
  %863 = vmatmul.f32.gmra.mxu0 %v797
  %v864 = vpop.f32.mrf.mxu0
  %v865 = vadd.f32 0.0, %v864
  %866 = vmatmul.f32.gmra.mxu0 %v800
  %v867 = vpop.f32.mrf.mxu0
  %v868 = vadd.f32 0.0, %v867
  %869 = vmatmul.f32.gmra.mxu0 %v803
  %v870 = vpop.f32.mrf.mxu0
  %v871 = vadd.f32 0.0, %v870
  %872 = vmatmul.f32.gmra.mxu0 %v806
  %v873 = vpop.f32.mrf.mxu0
  %v874 = vadd.f32 0.0, %v873
  %875 = vmatmul.f32.gmra.mxu0 %v809
  %v876 = vpop.f32.mrf.mxu0
  %v877 = vadd.f32 0.0, %v876
  %878 = vmatmul.f32.gmra.mxu0 %v812
  %v879 = vpop.f32.mrf.mxu0
  %v880 = vadd.f32 0.0, %v879
  %881 = vmatmul.f32.gmra.mxu0 %v815
  %v882 = vpop.f32.mrf.mxu0
  %v883 = vadd.f32 0.0, %v882
  %884 = vmatmul.f32.gmra.mxu0 %v818
  %v885 = vpop.f32.mrf.mxu0
  %v886 = vadd.f32 0.0, %v885
  %887 = vmatmul.f32.gmra.mxu0 %v821
  %v888 = vpop.f32.mrf.mxu0
  %v889 = vadd.f32 0.0, %v888
  %890 = vdwg.mxu0
  %v891 = vadd.f32 %v741, %v844
  %v892 = vadd.f32 %v742, %v847
  %v893 = vadd.f32 %v743, %v850
  %v894 = vadd.f32 %v744, %v853
  %v895 = vadd.f32 %v745, %v856
  %v896 = vadd.f32 %v746, %v859
  %v897 = vadd.f32 %v747, %v862
  %v898 = vadd.f32 %v748, %v865
  %v899 = vadd.f32 %v749, %v868
  %v900 = vadd.f32 %v750, %v871
  %v901 = vadd.f32 %v751, %v874
  %v902 = vadd.f32 %v752, %v877
  %v903 = vadd.f32 %v753, %v880
  %v904 = vadd.f32 %v754, %v883
  %v905 = vadd.f32 %v755, %v886
  %v906 = vadd.f32 %v756, %v889
  %s907 = scalar_lea.vmem %s0, 16
  %v908 = vld [vmem:[%s907] sm:$0xff]
  %v909 = vld [vmem:[%s907 + $0x10] sm:$0xff]
  %v910 = vld [vmem:[%s907 + $0x20] sm:$0xff]
  %v911 = vld [vmem:[%s907 + $0x30] sm:$0xff]
  %v912 = vld [vmem:[%s907 + $0x40] sm:$0xff]
  %v913 = vld [vmem:[%s907 + $0x50] sm:$0xff]
  %v914 = vld [vmem:[%s907 + $0x60] sm:$0xff]
  %v915 = vld [vmem:[%s907 + $0x70] sm:$0xff]
  %v916 = vld [vmem:[%s907 + $0x90] sm:$0xff]
  %v917 = vld [vmem:[%s907 + $0xa0] sm:$0xff]
  %v918 = vld [vmem:[%s907 + $0xb0] sm:$0xff]
  %v919 = vld [vmem:[%s907 + $0xc0] sm:$0xff]
  %v920 = vld [vmem:[%s907 + $0xd0] sm:$0xff]
  %v921 = vld [vmem:[%s907 + $0xe0] sm:$0xff]
  %v922 = vld [vmem:[%s907 + $0xf0] sm:$0xff]
  %v923 = vld [vmem:[%s907 + $0x100] sm:$0xff]
  %s924 = scalar_lea.vmem %s1, 24
  %v925 = vld [vmem:[%s924] sm:$0xf]
  %v927 = vsel %vm71, %v908, 0
  %v930 = vsel %vm71, %v909, 0
  %v933 = vsel %vm71, %v910, 0
  %v936 = vsel %vm71, %v911, 0
  %v939 = vsel %vm71, %v912, 0
  %v942 = vsel %vm71, %v913, 0
  %v945 = vsel %vm71, %v914, 0
  %v948 = vsel %vm71, %v915, 0
  %v951 = vsel %vm71, %v916, 0
  %v954 = vsel %vm71, %v917, 0
  %v957 = vsel %vm71, %v918, 0
  %v960 = vsel %vm71, %v919, 0
  %v963 = vsel %vm71, %v920, 0
  %v966 = vsel %vm71, %v921, 0
  %v969 = vsel %vm71, %v922, 0
  %v972 = vsel %vm71, %v923, 0
  %v975 = vsel %vm120, %v925, 0
  %977 = vmatpush.msra.mxu0 0.0
  %978 = vmatpush.msra.mxu0 0.0
  %979 = vmatpush.msra.mxu0 0.0
  %980 = vmatpush.msra.mxu0 0.0
  %981 = vmatpush.msra.mxu0 0.0
  %982 = vmatpush.msra.mxu0 0.0
  %983 = vmatpush.msra.mxu0 0.0
  %984 = vmatpush.msra.mxu0 0.0
  %985 = vmatpush.msra.mxu0 0.0
  %986 = vmatpush.msra.mxu0 0.0
  %987 = vmatpush.msra.mxu0 0.0
  %988 = vmatpush.msra.mxu0 0.0
  %989 = vmatpush.msra.mxu0 0.0
  %990 = vmatpush.msra.mxu0 0.0
  %991 = vmatpush.msra.mxu0 0.0
  %992 = vmatpush.msra.mxu0 %v975
  %993 = vmatmul.f32.gmra.mxu0 %v927
  %v994 = vpop.f32.mrf.mxu0
  %v995 = vadd.f32 0.0, %v994
  %996 = vmatmul.f32.gmra.mxu0 %v930
  %v997 = vpop.f32.mrf.mxu0
  %v998 = vadd.f32 0.0, %v997
  %999 = vmatmul.f32.gmra.mxu0 %v933
  %v1000 = vpop.f32.mrf.mxu0
  %v1001 = vadd.f32 0.0, %v1000
  %1002 = vmatmul.f32.gmra.mxu0 %v936
  %v1003 = vpop.f32.mrf.mxu0
  %v1004 = vadd.f32 0.0, %v1003
  %1005 = vmatmul.f32.gmra.mxu0 %v939
  %v1006 = vpop.f32.mrf.mxu0
  %v1007 = vadd.f32 0.0, %v1006
  %1008 = vmatmul.f32.gmra.mxu0 %v942
  %v1009 = vpop.f32.mrf.mxu0
  %v1010 = vadd.f32 0.0, %v1009
  %1011 = vmatmul.f32.gmra.mxu0 %v945
  %v1012 = vpop.f32.mrf.mxu0
  %v1013 = vadd.f32 0.0, %v1012
  %1014 = vmatmul.f32.gmra.mxu0 %v948
  %v1015 = vpop.f32.mrf.mxu0
  %v1016 = vadd.f32 0.0, %v1015
  %1017 = vmatmul.f32.gmra.mxu0 %v951
  %v1018 = vpop.f32.mrf.mxu0
  %v1019 = vadd.f32 0.0, %v1018
  %1020 = vmatmul.f32.gmra.mxu0 %v954
  %v1021 = vpop.f32.mrf.mxu0
  %v1022 = vadd.f32 0.0, %v1021
  %1023 = vmatmul.f32.gmra.mxu0 %v957
  %v1024 = vpop.f32.mrf.mxu0
  %v1025 = vadd.f32 0.0, %v1024
  %1026 = vmatmul.f32.gmra.mxu0 %v960
  %v1027 = vpop.f32.mrf.mxu0
  %v1028 = vadd.f32 0.0, %v1027
  %1029 = vmatmul.f32.gmra.mxu0 %v963
  %v1030 = vpop.f32.mrf.mxu0
  %v1031 = vadd.f32 0.0, %v1030
  %1032 = vmatmul.f32.gmra.mxu0 %v966
  %v1033 = vpop.f32.mrf.mxu0
  %v1034 = vadd.f32 0.0, %v1033
  %1035 = vmatmul.f32.gmra.mxu0 %v969
  %v1036 = vpop.f32.mrf.mxu0
  %v1037 = vadd.f32 0.0, %v1036
  %1038 = vmatmul.f32.gmra.mxu0 %v972
  %v1039 = vpop.f32.mrf.mxu0
  %v1040 = vadd.f32 0.0, %v1039
  %1041 = vdwg.mxu0
  %v1042 = vadd.f32 %v891, %v995
  %v1043 = vadd.f32 %v892, %v998
  %v1044 = vadd.f32 %v893, %v1001
  %v1045 = vadd.f32 %v894, %v1004
  %v1046 = vadd.f32 %v895, %v1007
  %v1047 = vadd.f32 %v896, %v1010
  %v1048 = vadd.f32 %v897, %v1013
  %v1049 = vadd.f32 %v898, %v1016
  %v1050 = vadd.f32 %v899, %v1019
  %v1051 = vadd.f32 %v900, %v1022
  %v1052 = vadd.f32 %v901, %v1025
  %v1053 = vadd.f32 %v902, %v1028
  %v1054 = vadd.f32 %v903, %v1031
  %v1055 = vadd.f32 %v904, %v1034
  %v1056 = vadd.f32 %v905, %v1037
  %v1057 = vadd.f32 %v906, %v1040
  %s1058 = scalar_lea.vmem %s0, 304
  %v1059 = vld [vmem:[%s1058] sm:$0xff]
  %v1060 = vld [vmem:[%s1058 + $0x10] sm:$0xff]
  %v1061 = vld [vmem:[%s1058 + $0x20] sm:$0xff]
  %v1062 = vld [vmem:[%s1058 + $0x30] sm:$0xff]
  %v1063 = vld [vmem:[%s1058 + $0x40] sm:$0xff]
  %v1064 = vld [vmem:[%s1058 + $0x50] sm:$0xff]
  %v1065 = vld [vmem:[%s1058 + $0x60] sm:$0xff]
  %v1066 = vld [vmem:[%s1058 + $0x70] sm:$0xff]
  %v1067 = vld [vmem:[%s1058 + $0x90] sm:$0xff]
  %v1068 = vld [vmem:[%s1058 + $0xa0] sm:$0xff]
  %v1069 = vld [vmem:[%s1058 + $0xb0] sm:$0xff]
  %v1070 = vld [vmem:[%s1058 + $0xc0] sm:$0xff]
  %v1071 = vld [vmem:[%s1058 + $0xd0] sm:$0xff]
  %v1072 = vld [vmem:[%s1058 + $0xe0] sm:$0xff]
  %v1073 = vld [vmem:[%s1058 + $0xf0] sm:$0xff]
  %v1074 = vld [vmem:[%s1058 + $0x100] sm:$0xff]
  %s1075 = scalar_lea.vmem %s1, 28
  %v1076 = vld [vmem:[%s1075] sm:$0xf]
  %v1078 = vsel %vm71, %v1059, 0
  %v1081 = vsel %vm71, %v1060, 0
  %v1084 = vsel %vm71, %v1061, 0
  %v1087 = vsel %vm71, %v1062, 0
  %v1090 = vsel %vm71, %v1063, 0
  %v1093 = vsel %vm71, %v1064, 0
  %v1096 = vsel %vm71, %v1065, 0
  %v1099 = vsel %vm71, %v1066, 0
  %v1102 = vsel %vm71, %v1067, 0
  %v1105 = vsel %vm71, %v1068, 0
  %v1108 = vsel %vm71, %v1069, 0
  %v1111 = vsel %vm71, %v1070, 0
  %v1114 = vsel %vm71, %v1071, 0
  %v1117 = vsel %vm71, %v1072, 0
  %v1120 = vsel %vm71, %v1073, 0
  %v1123 = vsel %vm71, %v1074, 0
  %v1126 = vsel %vm120, %v1076, 0
  %1128 = vmatpush.msra.mxu0 0.0
  %1129 = vmatpush.msra.mxu0 0.0
  %1130 = vmatpush.msra.mxu0 0.0
  %1131 = vmatpush.msra.mxu0 0.0
  %1132 = vmatpush.msra.mxu0 0.0
  %1133 = vmatpush.msra.mxu0 0.0
  %1134 = vmatpush.msra.mxu0 0.0
  %1135 = vmatpush.msra.mxu0 0.0
  %1136 = vmatpush.msra.mxu0 0.0
  %1137 = vmatpush.msra.mxu0 0.0
  %1138 = vmatpush.msra.mxu0 0.0
  %1139 = vmatpush.msra.mxu0 0.0
  %1140 = vmatpush.msra.mxu0 0.0
  %1141 = vmatpush.msra.mxu0 0.0
  %1142 = vmatpush.msra.mxu0 0.0
  %1143 = vmatpush.msra.mxu0 %v1126
  %1144 = vmatmul.f32.gmra.mxu0 %v1078
  %v1145 = vpop.f32.mrf.mxu0
  %v1146 = vadd.f32 0.0, %v1145
  %1147 = vmatmul.f32.gmra.mxu0 %v1081
  %v1148 = vpop.f32.mrf.mxu0
  %v1149 = vadd.f32 0.0, %v1148
  %1150 = vmatmul.f32.gmra.mxu0 %v1084
  %v1151 = vpop.f32.mrf.mxu0
  %v1152 = vadd.f32 0.0, %v1151
  %1153 = vmatmul.f32.gmra.mxu0 %v1087
  %v1154 = vpop.f32.mrf.mxu0
  %v1155 = vadd.f32 0.0, %v1154
  %1156 = vmatmul.f32.gmra.mxu0 %v1090
  %v1157 = vpop.f32.mrf.mxu0
  %v1158 = vadd.f32 0.0, %v1157
  %1159 = vmatmul.f32.gmra.mxu0 %v1093
  %v1160 = vpop.f32.mrf.mxu0
  %v1161 = vadd.f32 0.0, %v1160
  %1162 = vmatmul.f32.gmra.mxu0 %v1096
  %v1163 = vpop.f32.mrf.mxu0
  %v1164 = vadd.f32 0.0, %v1163
  %1165 = vmatmul.f32.gmra.mxu0 %v1099
  %v1166 = vpop.f32.mrf.mxu0
  %v1167 = vadd.f32 0.0, %v1166
  %1168 = vmatmul.f32.gmra.mxu0 %v1102
  %v1169 = vpop.f32.mrf.mxu0
  %v1170 = vadd.f32 0.0, %v1169
  %1171 = vmatmul.f32.gmra.mxu0 %v1105
  %v1172 = vpop.f32.mrf.mxu0
  %v1173 = vadd.f32 0.0, %v1172
  %1174 = vmatmul.f32.gmra.mxu0 %v1108
  %v1175 = vpop.f32.mrf.mxu0
  %v1176 = vadd.f32 0.0, %v1175
  %1177 = vmatmul.f32.gmra.mxu0 %v1111
  %v1178 = vpop.f32.mrf.mxu0
  %v1179 = vadd.f32 0.0, %v1178
  %1180 = vmatmul.f32.gmra.mxu0 %v1114
  %v1181 = vpop.f32.mrf.mxu0
  %v1182 = vadd.f32 0.0, %v1181
  %1183 = vmatmul.f32.gmra.mxu0 %v1117
  %v1184 = vpop.f32.mrf.mxu0
  %v1185 = vadd.f32 0.0, %v1184
  %1186 = vmatmul.f32.gmra.mxu0 %v1120
  %v1187 = vpop.f32.mrf.mxu0
  %v1188 = vadd.f32 0.0, %v1187
  %1189 = vmatmul.f32.gmra.mxu0 %v1123
  %v1190 = vpop.f32.mrf.mxu0
  %v1191 = vadd.f32 0.0, %v1190
  %1192 = vdwg.mxu0
  %v1193 = vadd.f32 %v1042, %v1146
  %v1194 = vadd.f32 %v1043, %v1149
  %v1195 = vadd.f32 %v1044, %v1152
  %v1196 = vadd.f32 %v1045, %v1155
  %v1197 = vadd.f32 %v1046, %v1158
  %v1198 = vadd.f32 %v1047, %v1161
  %v1199 = vadd.f32 %v1048, %v1164
  %v1200 = vadd.f32 %v1049, %v1167
  %v1201 = vadd.f32 %v1050, %v1170
  %v1202 = vadd.f32 %v1051, %v1173
  %v1203 = vadd.f32 %v1052, %v1176
  %v1204 = vadd.f32 %v1053, %v1179
  %v1205 = vadd.f32 %v1054, %v1182
  %v1206 = vadd.f32 %v1055, %v1185
  %v1207 = vadd.f32 %v1056, %v1188
  %v1208 = vadd.f32 %v1057, %v1191
  %v1209 = vld [vmem:[%s907 + $0x1] sm:$0xff]
  %v1210 = vld [vmem:[%s907 + $0x11] sm:$0xff]
  %v1211 = vld [vmem:[%s907 + $0x21] sm:$0xff]
  %v1212 = vld [vmem:[%s907 + $0x31] sm:$0xff]
  %v1213 = vld [vmem:[%s907 + $0x41] sm:$0xff]
  %v1214 = vld [vmem:[%s907 + $0x51] sm:$0xff]
  %v1215 = vld [vmem:[%s907 + $0x61] sm:$0xff]
  %v1216 = vld [vmem:[%s907 + $0x71] sm:$0xff]
  %v1217 = vld [vmem:[%s907 + $0x91] sm:$0xff]
  %v1218 = vld [vmem:[%s907 + $0xa1] sm:$0xff]
  %v1219 = vld [vmem:[%s907 + $0xb1] sm:$0xff]
  %v1220 = vld [vmem:[%s907 + $0xc1] sm:$0xff]
  %v1221 = vld [vmem:[%s907 + $0xd1] sm:$0xff]
  %v1222 = vld [vmem:[%s907 + $0xe1] sm:$0xff]
  %v1223 = vld [vmem:[%s907 + $0xf1] sm:$0xff]
  %v1224 = vld [vmem:[%s907 + $0x101] sm:$0xff]
  %s1225 = scalar_lea.vmem %s1, 32
  %v1226 = vld [vmem:[%s1225] sm:$0xf]
  %v1228 = vsel %vm71, %v1209, 0
  %v1231 = vsel %vm71, %v1210, 0
  %v1234 = vsel %vm71, %v1211, 0
  %v1237 = vsel %vm71, %v1212, 0
  %v1240 = vsel %vm71, %v1213, 0
  %v1243 = vsel %vm71, %v1214, 0
  %v1246 = vsel %vm71, %v1215, 0
  %v1249 = vsel %vm71, %v1216, 0
  %v1252 = vsel %vm71, %v1217, 0
  %v1255 = vsel %vm71, %v1218, 0
  %v1258 = vsel %vm71, %v1219, 0
  %v1261 = vsel %vm71, %v1220, 0
  %v1264 = vsel %vm71, %v1221, 0
  %v1267 = vsel %vm71, %v1222, 0
  %v1270 = vsel %vm71, %v1223, 0
  %v1273 = vsel %vm71, %v1224, 0
  %v1276 = vsel %vm120, %v1226, 0
  %1278 = vmatpush.msra.mxu0 0.0
  %1279 = vmatpush.msra.mxu0 0.0
  %1280 = vmatpush.msra.mxu0 0.0
  %1281 = vmatpush.msra.mxu0 0.0
  %1282 = vmatpush.msra.mxu0 0.0
  %1283 = vmatpush.msra.mxu0 0.0
  %1284 = vmatpush.msra.mxu0 0.0
  %1285 = vmatpush.msra.mxu0 0.0
  %1286 = vmatpush.msra.mxu0 0.0
  %1287 = vmatpush.msra.mxu0 0.0
  %1288 = vmatpush.msra.mxu0 0.0
  %1289 = vmatpush.msra.mxu0 0.0
  %1290 = vmatpush.msra.mxu0 0.0
  %1291 = vmatpush.msra.mxu0 0.0
  %1292 = vmatpush.msra.mxu0 0.0
  %1293 = vmatpush.msra.mxu0 %v1276
  %1294 = vmatmul.f32.gmra.mxu0 %v1228
  %v1295 = vpop.f32.mrf.mxu0
  %v1296 = vadd.f32 0.0, %v1295
  %1297 = vmatmul.f32.gmra.mxu0 %v1231
  %v1298 = vpop.f32.mrf.mxu0
  %v1299 = vadd.f32 0.0, %v1298
  %1300 = vmatmul.f32.gmra.mxu0 %v1234
  %v1301 = vpop.f32.mrf.mxu0
  %v1302 = vadd.f32 0.0, %v1301
  %1303 = vmatmul.f32.gmra.mxu0 %v1237
  %v1304 = vpop.f32.mrf.mxu0
  %v1305 = vadd.f32 0.0, %v1304
  %1306 = vmatmul.f32.gmra.mxu0 %v1240
  %v1307 = vpop.f32.mrf.mxu0
  %v1308 = vadd.f32 0.0, %v1307
  %1309 = vmatmul.f32.gmra.mxu0 %v1243
  %v1310 = vpop.f32.mrf.mxu0
  %v1311 = vadd.f32 0.0, %v1310
  %1312 = vmatmul.f32.gmra.mxu0 %v1246
  %v1313 = vpop.f32.mrf.mxu0
  %v1314 = vadd.f32 0.0, %v1313
  %1315 = vmatmul.f32.gmra.mxu0 %v1249
  %v1316 = vpop.f32.mrf.mxu0
  %v1317 = vadd.f32 0.0, %v1316
  %1318 = vmatmul.f32.gmra.mxu0 %v1252
  %v1319 = vpop.f32.mrf.mxu0
  %v1320 = vadd.f32 0.0, %v1319
  %1321 = vmatmul.f32.gmra.mxu0 %v1255
  %v1322 = vpop.f32.mrf.mxu0
  %v1323 = vadd.f32 0.0, %v1322
  %1324 = vmatmul.f32.gmra.mxu0 %v1258
  %v1325 = vpop.f32.mrf.mxu0
  %v1326 = vadd.f32 0.0, %v1325
  %1327 = vmatmul.f32.gmra.mxu0 %v1261
  %v1328 = vpop.f32.mrf.mxu0
  %v1329 = vadd.f32 0.0, %v1328
  %1330 = vmatmul.f32.gmra.mxu0 %v1264
  %v1331 = vpop.f32.mrf.mxu0
  %v1332 = vadd.f32 0.0, %v1331
  %1333 = vmatmul.f32.gmra.mxu0 %v1267
  %v1334 = vpop.f32.mrf.mxu0
  %v1335 = vadd.f32 0.0, %v1334
  %1336 = vmatmul.f32.gmra.mxu0 %v1270
  %v1337 = vpop.f32.mrf.mxu0
  %v1338 = vadd.f32 0.0, %v1337
  %1339 = vmatmul.f32.gmra.mxu0 %v1273
  %v1340 = vpop.f32.mrf.mxu0
  %v1341 = vadd.f32 0.0, %v1340
  %1342 = vdwg.mxu0
  %v1343 = vadd.f32 %v1193, %v1296
  %v1344 = vadd.f32 %v1194, %v1299
  %v1345 = vadd.f32 %v1195, %v1302
  %v1346 = vadd.f32 %v1196, %v1305
  %v1347 = vadd.f32 %v1197, %v1308
  %v1348 = vadd.f32 %v1198, %v1311
  %v1349 = vadd.f32 %v1199, %v1314
  %v1350 = vadd.f32 %v1200, %v1317
  %v1351 = vadd.f32 %v1201, %v1320
  %v1352 = vadd.f32 %v1202, %v1323
  %v1353 = vadd.f32 %v1203, %v1326
  %v1354 = vadd.f32 %v1204, %v1329
  %v1355 = vadd.f32 %v1205, %v1332
  %v1356 = vadd.f32 %v1206, %v1335
  %v1357 = vadd.f32 %v1207, %v1338
  %v1358 = vadd.f32 %v1208, %v1341
  %vm1359 = vcmask 64512
  %v1360 = vsel %vm1359, %v1343, 0.0
  %v1361 = vsel %vm1359, %v1344, 0.0
  %v1362 = vadd.f32 %v1360, %v1361
  %v1363 = vsel %vm1359, %v1345, 0.0
  %v1364 = vadd.f32 %v1362, %v1363
  %v1365 = vsel %vm1359, %v1346, 0.0
  %v1366 = vadd.f32 %v1364, %v1365
  %v1367 = vsel %vm1359, %v1347, 0.0
  %v1368 = vadd.f32 %v1366, %v1367
  %v1369 = vsel %vm1359, %v1348, 0.0
  %v1370 = vadd.f32 %v1368, %v1369
  %v1371 = vsel %vm1359, %v1349, 0.0
  %v1372 = vadd.f32 %v1370, %v1371
  %v1373 = vsel %vm1359, %v1350, 0.0
  %v1374 = vadd.f32 %v1372, %v1373
  %v1375 = vsel %vm1359, %v1351, 0.0
  %v1376 = vadd.f32 %v1374, %v1375
  %v1377 = vsel %vm1359, %v1352, 0.0
  %v1378 = vadd.f32 %v1376, %v1377
  %v1379 = vsel %vm1359, %v1353, 0.0
  %v1380 = vadd.f32 %v1378, %v1379
  %v1381 = vsel %vm1359, %v1354, 0.0
  %v1382 = vadd.f32 %v1380, %v1381
  %v1383 = vsel %vm1359, %v1355, 0.0
  %v1384 = vadd.f32 %v1382, %v1383
  %v1385 = vsel %vm1359, %v1356, 0.0
  %v1386 = vadd.f32 %v1384, %v1385
  %v1387 = vsel %vm1359, %v1357, 0.0
  %v1388 = vadd.f32 %v1386, %v1387
  %v1389 = vsel %vm1359, %v1358, 0.0
  %v1390 = vadd.f32 %v1388, %v1389
  %v1391 = vrot.slane %v1390, 4
  %v1392 = vadd.f32 %v1390, %v1391
  %v1393 = vrot.slane %v1392, 2
  %v1394 = vadd.f32 %v1392, %v1393
  %v1395 = vrot.slane %v1394, 1
  %v1396 = vadd.f32 %v1394, %v1395
  %v1397 = vrcp.pop 128.0
  %v1398 = vmul.f32 128.0, %v1397
  %v1399 = vsub.f32 1.0, %v1398
  %v1400 = vmul.f32 %v1397, %v1399
  %v1401 = vadd.f32 %v1397, %v1400
  %vm1402 = vweird.f32 %v1397
  %v1403 = vsel %vm1402, %v1397, %v1401
  %v1404 = vmul.f32 %v1396, %v1403
  %v1405 = vsub.f32 %v1343, %v1404
  %v1406 = vsub.f32 %v1344, %v1404
  %v1407 = vsub.f32 %v1345, %v1404
  %v1408 = vsub.f32 %v1346, %v1404
  %v1409 = vsub.f32 %v1347, %v1404
  %v1410 = vsub.f32 %v1348, %v1404
  %v1411 = vsub.f32 %v1349, %v1404
  %v1412 = vsub.f32 %v1350, %v1404
  %v1413 = vsub.f32 %v1351, %v1404
  %v1414 = vsub.f32 %v1352, %v1404
  %v1415 = vsub.f32 %v1353, %v1404
  %v1416 = vsub.f32 %v1354, %v1404
  %v1417 = vsub.f32 %v1355, %v1404
  %v1418 = vsub.f32 %v1356, %v1404
  %v1419 = vsub.f32 %v1357, %v1404
  %v1420 = vsub.f32 %v1358, %v1404
  %v1421 = vmul.f32 %v1405, %v1405
  %v1422 = vmul.f32 %v1406, %v1406
  %v1423 = vmul.f32 %v1407, %v1407
  %v1424 = vmul.f32 %v1408, %v1408
  %v1425 = vmul.f32 %v1409, %v1409
  %v1426 = vmul.f32 %v1410, %v1410
  %v1427 = vmul.f32 %v1411, %v1411
  %v1428 = vmul.f32 %v1412, %v1412
  %v1429 = vmul.f32 %v1413, %v1413
  %v1430 = vmul.f32 %v1414, %v1414
  %v1431 = vmul.f32 %v1415, %v1415
  %v1432 = vmul.f32 %v1416, %v1416
  %v1433 = vmul.f32 %v1417, %v1417
  %v1434 = vmul.f32 %v1418, %v1418
  %v1435 = vmul.f32 %v1419, %v1419
  %v1436 = vmul.f32 %v1420, %v1420
  %v1437 = vsel %vm1359, %v1421, 0.0
  %v1438 = vsel %vm1359, %v1422, 0.0
  %v1439 = vadd.f32 %v1437, %v1438
  %v1440 = vsel %vm1359, %v1423, 0.0
  %v1441 = vadd.f32 %v1439, %v1440
  %v1442 = vsel %vm1359, %v1424, 0.0
  %v1443 = vadd.f32 %v1441, %v1442
  %v1444 = vsel %vm1359, %v1425, 0.0
  %v1445 = vadd.f32 %v1443, %v1444
  %v1446 = vsel %vm1359, %v1426, 0.0
  %v1447 = vadd.f32 %v1445, %v1446
  %v1448 = vsel %vm1359, %v1427, 0.0
  %v1449 = vadd.f32 %v1447, %v1448
  %v1450 = vsel %vm1359, %v1428, 0.0
  %v1451 = vadd.f32 %v1449, %v1450
  %v1452 = vsel %vm1359, %v1429, 0.0
  %v1453 = vadd.f32 %v1451, %v1452
  %v1454 = vsel %vm1359, %v1430, 0.0
  %v1455 = vadd.f32 %v1453, %v1454
  %v1456 = vsel %vm1359, %v1431, 0.0
  %v1457 = vadd.f32 %v1455, %v1456
  %v1458 = vsel %vm1359, %v1432, 0.0
  %v1459 = vadd.f32 %v1457, %v1458
  %v1460 = vsel %vm1359, %v1433, 0.0
  %v1461 = vadd.f32 %v1459, %v1460
  %v1462 = vsel %vm1359, %v1434, 0.0
  %v1463 = vadd.f32 %v1461, %v1462
  %v1464 = vsel %vm1359, %v1435, 0.0
  %v1465 = vadd.f32 %v1463, %v1464
  %v1466 = vsel %vm1359, %v1436, 0.0
  %v1467 = vadd.f32 %v1465, %v1466
  %v1468 = vrot.slane %v1467, 4
  %v1469 = vadd.f32 %v1467, %v1468
  %v1470 = vrot.slane %v1469, 2
  %v1471 = vadd.f32 %v1469, %v1470
  %v1472 = vrot.slane %v1471, 1
  %v1473 = vadd.f32 %v1471, %v1472
  %v1474 = vmul.f32 %v1473, %v1403
  %v1475 = vld [vmem:[%s4] sm:$0x1]
  %v1477 = vperm.slane %v1475, 0
  %v1479 = vmul.f32 %v1477, %v1405
  %v1480 = vmul.f32 %v1477, %v1406
  %v1481 = vmul.f32 %v1477, %v1407
  %v1482 = vmul.f32 %v1477, %v1408
  %v1483 = vmul.f32 %v1477, %v1409
  %v1484 = vmul.f32 %v1477, %v1410
  %v1485 = vmul.f32 %v1477, %v1411
  %v1486 = vmul.f32 %v1477, %v1412
  %v1487 = vmul.f32 %v1477, %v1413
  %v1488 = vmul.f32 %v1477, %v1414
  %v1489 = vmul.f32 %v1477, %v1415
  %v1490 = vmul.f32 %v1477, %v1416
  %v1491 = vmul.f32 %v1477, %v1417
  %v1492 = vmul.f32 %v1477, %v1418
  %v1493 = vmul.f32 %v1477, %v1419
  %v1494 = vmul.f32 %v1477, %v1420
  %v1495 = vadd.f32 %v1474, 1e-05
  %v1496 = vrsqrt.pop %v1495
  %v1497 = vmul.f32 %v1496, %v1495
  %v1498 = vmul.f32 %v1497, %v1496
  %v1499 = vmul.f32 0.5, %v1498
  %v1500 = vsub.f32 1.5, %v1499
  %v1501 = vmul.f32 %v1496, %v1500
  %vm1502 = vweird.f32 %v1495
  %vm1503 = vweird.f32 %v1496
  %vm1504 = vmor %vm1502, %vm1503
  %v1505 = vsel %vm1504, %v1496, %v1501
  %v1506 = vmul.f32 %v1479, %v1505
  %v1507 = vmul.f32 %v1480, %v1505
  %v1508 = vmul.f32 %v1481, %v1505
  %v1509 = vmul.f32 %v1482, %v1505
  %v1510 = vmul.f32 %v1483, %v1505
  %v1511 = vmul.f32 %v1484, %v1505
  %v1512 = vmul.f32 %v1485, %v1505
  %v1513 = vmul.f32 %v1486, %v1505
  %v1514 = vmul.f32 %v1487, %v1505
  %v1515 = vmul.f32 %v1488, %v1505
  %v1516 = vmul.f32 %v1489, %v1505
  %v1517 = vmul.f32 %v1490, %v1505
  %v1518 = vmul.f32 %v1491, %v1505
  %v1519 = vmul.f32 %v1492, %v1505
  %v1520 = vmul.f32 %v1493, %v1505
  %v1521 = vmul.f32 %v1494, %v1505
  %v1522 = vld [vmem:[%s5] sm:$0x1]
  %v1524 = vperm.slane %v1522, 0
  %v1526 = vadd.f32 %v1506, %v1524
  %v1527 = vadd.f32 %v1507, %v1524
  %v1528 = vadd.f32 %v1508, %v1524
  %v1529 = vadd.f32 %v1509, %v1524
  %v1530 = vadd.f32 %v1510, %v1524
  %v1531 = vadd.f32 %v1511, %v1524
  %v1532 = vadd.f32 %v1512, %v1524
  %v1533 = vadd.f32 %v1513, %v1524
  %v1534 = vadd.f32 %v1514, %v1524
  %v1535 = vadd.f32 %v1515, %v1524
  %v1536 = vadd.f32 %v1516, %v1524
  %v1537 = vadd.f32 %v1517, %v1524
  %v1538 = vadd.f32 %v1518, %v1524
  %v1539 = vadd.f32 %v1519, %v1524
  %v1540 = vadd.f32 %v1520, %v1524
  %v1541 = vadd.f32 %v1521, %v1524
  %v1542 = vmax.f32 %v1526, 0.0
  %v1543 = vmax.f32 %v1527, 0.0
  %v1544 = vmax.f32 %v1528, 0.0
  %v1545 = vmax.f32 %v1529, 0.0
  %v1546 = vmax.f32 %v1530, 0.0
  %v1547 = vmax.f32 %v1531, 0.0
  %v1548 = vmax.f32 %v1532, 0.0
  %v1549 = vmax.f32 %v1533, 0.0
  %v1550 = vmax.f32 %v1534, 0.0
  %v1551 = vmax.f32 %v1535, 0.0
  %v1552 = vmax.f32 %v1536, 0.0
  %v1553 = vmax.f32 %v1537, 0.0
  %v1554 = vmax.f32 %v1538, 0.0
  %v1555 = vmax.f32 %v1539, 0.0
  %v1556 = vmax.f32 %v1540, 0.0
  %v1557 = vmax.f32 %v1541, 0.0
  %1558 = vst.msk [vmem:[#allocation2] sm:$0xff] %vm1359, 0.0
  %vm1559 = vcmask 58368
  %1560 = vst.msk [vmem:[#allocation2 + $0x8] sm:$0x3] %vm1559, 0.0
  %1561 = vst.msk [vmem:[#allocation2 + $0xa0] sm:$0xff] %vm1359, 0.0
  %1562 = vst.msk [vmem:[#allocation2 + $0xa8] sm:$0x3] %vm1559, 0.0
  %s1563 = scalar_lea.vmem [#allocation2], 144
  %1564 = vst.msk [vmem:[%s1563] sm:$0xff] %vm1359, 0.0
  %1565 = vst.msk [vmem:[%s1563 + $0x8] sm:$0x3] %vm1559, 0.0
  %1566 = vst.msk [vmem:[%s1563 + $0xa0] sm:$0xff] %vm1359, 0.0
  %1567 = vst.msk [vmem:[%s1563 + $0xa8] sm:$0x3] %vm1559, 0.0
  %vm1568 = vcmask 57344
  %1569 = vst.msk [vmem:[#allocation2] sm:$0x1] %vm1568, 0.0
  %1570 = vst.msk [vmem:[#allocation2 + $0x10] sm:$0x1] %vm1568, 0.0
  %1571 = vst.msk [vmem:[#allocation2 + $0x20] sm:$0x1] %vm1568, 0.0
  %1572 = vst.msk [vmem:[#allocation2 + $0x30] sm:$0x1] %vm1568, 0.0
  %1573 = vst.msk [vmem:[#allocation2 + $0x40] sm:$0x1] %vm1568, 0.0
  %1574 = vst.msk [vmem:[#allocation2 + $0x50] sm:$0x1] %vm1568, 0.0
  %1575 = vst.msk [vmem:[#allocation2 + $0x60] sm:$0x1] %vm1568, 0.0
  %1576 = vst.msk [vmem:[#allocation2 + $0x70] sm:$0x1] %vm1568, 0.0
  %1577 = vst.msk [vmem:[#allocation2 + $0x80] sm:$0x1] %vm1568, 0.0
  %1578 = vst.msk [vmem:[#allocation2 + $0x90] sm:$0x1] %vm1568, 0.0
  %1579 = vst.msk [vmem:[#allocation2 + $0xa0] sm:$0x1] %vm1568, 0.0
  %1580 = vst.msk [vmem:[#allocation2 + $0xb0] sm:$0x1] %vm1568, 0.0
  %1581 = vst.msk [vmem:[#allocation2 + $0xc0] sm:$0x1] %vm1568, 0.0
  %1582 = vst.msk [vmem:[#allocation2 + $0xd0] sm:$0x1] %vm1568, 0.0
  %1583 = vst.msk [vmem:[#allocation2 + $0xe0] sm:$0x1] %vm1568, 0.0
  %1584 = vst.msk [vmem:[#allocation2 + $0xf0] sm:$0x1] %vm1568, 0.0
  %1585 = vst.msk [vmem:[#allocation2 + $0x100] sm:$0x1] %vm1568, 0.0
  %1586 = vst.msk [vmem:[#allocation2 + $0x110] sm:$0x1] %vm1568, 0.0
  %1587 = vst.msk [vmem:[#allocation2 + $0x120] sm:$0x1] %vm1568, 0.0
  %1588 = vst.msk [vmem:[#allocation2 + $0x130] sm:$0x1] %vm1568, 0.0
  %1589 = vst.msk [vmem:[#allocation2 + $0x9] sm:$0x1] %vm1568, 0.0
  %1590 = vst.msk [vmem:[#allocation2 + $0x19] sm:$0x1] %vm1568, 0.0
  %1591 = vst.msk [vmem:[#allocation2 + $0x29] sm:$0x1] %vm1568, 0.0
  %1592 = vst.msk [vmem:[#allocation2 + $0x39] sm:$0x1] %vm1568, 0.0
  %1593 = vst.msk [vmem:[#allocation2 + $0x49] sm:$0x1] %vm1568, 0.0
  %1594 = vst.msk [vmem:[#allocation2 + $0x59] sm:$0x1] %vm1568, 0.0
  %1595 = vst.msk [vmem:[#allocation2 + $0x69] sm:$0x1] %vm1568, 0.0
  %1596 = vst.msk [vmem:[#allocation2 + $0x79] sm:$0x1] %vm1568, 0.0
  %1597 = vst.msk [vmem:[#allocation2 + $0x89] sm:$0x1] %vm1568, 0.0
  %1598 = vst.msk [vmem:[#allocation2 + $0x99] sm:$0x1] %vm1568, 0.0
  %1599 = vst.msk [vmem:[#allocation2 + $0xa9] sm:$0x1] %vm1568, 0.0
  %1600 = vst.msk [vmem:[#allocation2 + $0xb9] sm:$0x1] %vm1568, 0.0
  %1601 = vst.msk [vmem:[#allocation2 + $0xc9] sm:$0x1] %vm1568, 0.0
  %1602 = vst.msk [vmem:[#allocation2 + $0xd9] sm:$0x1] %vm1568, 0.0
  %1603 = vst.msk [vmem:[#allocation2 + $0xe9] sm:$0x1] %vm1568, 0.0
  %1604 = vst.msk [vmem:[#allocation2 + $0xf9] sm:$0x1] %vm1568, 0.0
  %1605 = vst.msk [vmem:[#allocation2 + $0x109] sm:$0x1] %vm1568, 0.0
  %1606 = vst.msk [vmem:[#allocation2 + $0x119] sm:$0x1] %vm1568, 0.0
  %1607 = vst.msk [vmem:[#allocation2 + $0x129] sm:$0x1] %vm1568, 0.0
  %1608 = vst.msk [vmem:[#allocation2 + $0x139] sm:$0x1] %vm1568, 0.0
  %s1609 = scalar_lea.vmem [#allocation2], 16
  %1610 = vst.msk [vmem:[%s1609 + $0x1] sm:$0xff] %vm1359, %v1542
  %1611 = vst.msk [vmem:[%s1609 + $0x11] sm:$0xff] %vm1359, %v1543
  %1612 = vst.msk [vmem:[%s1609 + $0x21] sm:$0xff] %vm1359, %v1544
  %1613 = vst.msk [vmem:[%s1609 + $0x31] sm:$0xff] %vm1359, %v1545
  %1614 = vst.msk [vmem:[%s1609 + $0x41] sm:$0xff] %vm1359, %v1546
  %1615 = vst.msk [vmem:[%s1609 + $0x51] sm:$0xff] %vm1359, %v1547
  %1616 = vst.msk [vmem:[%s1609 + $0x61] sm:$0xff] %vm1359, %v1548
  %1617 = vst.msk [vmem:[%s1609 + $0x71] sm:$0xff] %vm1359, %v1549
  %1618 = vst.msk [vmem:[%s1609 + $0xa1] sm:$0xff] %vm1359, %v1550
  %1619 = vst.msk [vmem:[%s1609 + $0xb1] sm:$0xff] %vm1359, %v1551
  %1620 = vst.msk [vmem:[%s1609 + $0xc1] sm:$0xff] %vm1359, %v1552
  %1621 = vst.msk [vmem:[%s1609 + $0xd1] sm:$0xff] %vm1359, %v1553
  %1622 = vst.msk [vmem:[%s1609 + $0xe1] sm:$0xff] %vm1359, %v1554
  %1623 = vst.msk [vmem:[%s1609 + $0xf1] sm:$0xff] %vm1359, %v1555
  %1624 = vst.msk [vmem:[%s1609 + $0x101] sm:$0xff] %vm1359, %v1556
  %1625 = vst.msk [vmem:[%s1609 + $0x111] sm:$0xff] %vm1359, %v1557
  %v1626 = vld [vmem:[#allocation2] sm:$0xff]
  %v1627 = vld [vmem:[#allocation2 + $0x10] sm:$0xff]
  %v1628 = vld [vmem:[#allocation2 + $0x20] sm:$0xff]
  %v1629 = vld [vmem:[#allocation2 + $0x30] sm:$0xff]
  %v1630 = vld [vmem:[#allocation2 + $0x40] sm:$0xff]
  %v1631 = vld [vmem:[#allocation2 + $0x50] sm:$0xff]
  %v1632 = vld [vmem:[#allocation2 + $0x60] sm:$0xff]
  %v1633 = vld [vmem:[#allocation2 + $0x70] sm:$0xff]
  %v1634 = vld [vmem:[#allocation2 + $0xa0] sm:$0xff]
  %v1635 = vld [vmem:[#allocation2 + $0xb0] sm:$0xff]
  %v1636 = vld [vmem:[#allocation2 + $0xc0] sm:$0xff]
  %v1637 = vld [vmem:[#allocation2 + $0xd0] sm:$0xff]
  %v1638 = vld [vmem:[#allocation2 + $0xe0] sm:$0xff]
  %v1639 = vld [vmem:[#allocation2 + $0xf0] sm:$0xff]
  %v1640 = vld [vmem:[#allocation2 + $0x100] sm:$0xff]
  %v1641 = vld [vmem:[#allocation2 + $0x110] sm:$0xff]
  %v1642 = vld [vmem:[%s2] sm:$0xff]
  %v1643 = vld [vmem:[#allocation2 + $0x1] sm:$0xff]
  %v1644 = vld [vmem:[#allocation2 + $0x11] sm:$0xff]
  %v1645 = vld [vmem:[#allocation2 + $0x21] sm:$0xff]
  %v1646 = vld [vmem:[#allocation2 + $0x31] sm:$0xff]
  %v1647 = vld [vmem:[#allocation2 + $0x41] sm:$0xff]
  %v1648 = vld [vmem:[#allocation2 + $0x51] sm:$0xff]
  %v1649 = vld [vmem:[#allocation2 + $0x61] sm:$0xff]
  %v1650 = vld [vmem:[#allocation2 + $0x71] sm:$0xff]
  %v1651 = vld [vmem:[#allocation2 + $0xa1] sm:$0xff]
  %v1652 = vld [vmem:[#allocation2 + $0xb1] sm:$0xff]
  %v1653 = vld [vmem:[#allocation2 + $0xc1] sm:$0xff]
  %v1654 = vld [vmem:[#allocation2 + $0xd1] sm:$0xff]
  %v1655 = vld [vmem:[#allocation2 + $0xe1] sm:$0xff]
  %v1656 = vld [vmem:[#allocation2 + $0xf1] sm:$0xff]
  %v1657 = vld [vmem:[#allocation2 + $0x101] sm:$0xff]
  %v1658 = vld [vmem:[#allocation2 + $0x111] sm:$0xff]
  %s1659 = scalar_lea.vmem %s2, 8
  %v1660 = vld [vmem:[%s1659] sm:$0xff]
  %v1662 = vsel %vm1359, %v1643, 0
  %v1665 = vsel %vm1359, %v1644, 0
  %v1668 = vsel %vm1359, %v1645, 0
  %v1671 = vsel %vm1359, %v1646, 0
  %v1674 = vsel %vm1359, %v1647, 0
  %v1677 = vsel %vm1359, %v1648, 0
  %v1680 = vsel %vm1359, %v1649, 0
  %v1683 = vsel %vm1359, %v1650, 0
  %v1686 = vsel %vm1359, %v1651, 0
  %v1689 = vsel %vm1359, %v1652, 0
  %v1692 = vsel %vm1359, %v1653, 0
  %v1695 = vsel %vm1359, %v1654, 0
  %v1698 = vsel %vm1359, %v1655, 0
  %v1701 = vsel %vm1359, %v1656, 0
  %v1704 = vsel %vm1359, %v1657, 0
  %v1707 = vsel %vm1359, %v1658, 0
  %1709 = vmatpush.msra.mxu0 0.0
  %1710 = vmatpush.msra.mxu0 0.0
  %1711 = vmatpush.msra.mxu0 0.0
  %1712 = vmatpush.msra.mxu0 0.0
  %1713 = vmatpush.msra.mxu0 0.0
  %1714 = vmatpush.msra.mxu0 0.0
  %1715 = vmatpush.msra.mxu0 0.0
  %1716 = vmatpush.msra.mxu0 0.0
  %1717 = vmatpush.msra.mxu0 0.0
  %1718 = vmatpush.msra.mxu0 0.0
  %1719 = vmatpush.msra.mxu0 0.0
  %1720 = vmatpush.msra.mxu0 0.0
  %1721 = vmatpush.msra.mxu0 0.0
  %1722 = vmatpush.msra.mxu0 0.0
  %1723 = vmatpush.msra.mxu0 0.0
  %1724 = vmatpush.msra.mxu0 %v1660
  %1725 = vmatmul.f32.gmra.mxu0 %v1662
  %v1726 = vpop.f32.mrf.mxu0
  %v1727 = vadd.f32 0.0, %v1726
  %1728 = vmatmul.f32.gmra.mxu0 %v1665
  %v1729 = vpop.f32.mrf.mxu0
  %v1730 = vadd.f32 0.0, %v1729
  %1731 = vmatmul.f32.gmra.mxu0 %v1668
  %v1732 = vpop.f32.mrf.mxu0
  %v1733 = vadd.f32 0.0, %v1732
  %1734 = vmatmul.f32.gmra.mxu0 %v1671
  %v1735 = vpop.f32.mrf.mxu0
  %v1736 = vadd.f32 0.0, %v1735
  %1737 = vmatmul.f32.gmra.mxu0 %v1674
  %v1738 = vpop.f32.mrf.mxu0
  %v1739 = vadd.f32 0.0, %v1738
  %1740 = vmatmul.f32.gmra.mxu0 %v1677
  %v1741 = vpop.f32.mrf.mxu0
  %v1742 = vadd.f32 0.0, %v1741
  %1743 = vmatmul.f32.gmra.mxu0 %v1680
  %v1744 = vpop.f32.mrf.mxu0
  %v1745 = vadd.f32 0.0, %v1744
  %1746 = vmatmul.f32.gmra.mxu0 %v1683
  %v1747 = vpop.f32.mrf.mxu0
  %v1748 = vadd.f32 0.0, %v1747
  %1749 = vmatmul.f32.gmra.mxu0 %v1686
  %v1750 = vpop.f32.mrf.mxu0
  %v1751 = vadd.f32 0.0, %v1750
  %1752 = vmatmul.f32.gmra.mxu0 %v1689
  %v1753 = vpop.f32.mrf.mxu0
  %v1754 = vadd.f32 0.0, %v1753
  %1755 = vmatmul.f32.gmra.mxu0 %v1692
  %v1756 = vpop.f32.mrf.mxu0
  %v1757 = vadd.f32 0.0, %v1756
  %1758 = vmatmul.f32.gmra.mxu0 %v1695
  %v1759 = vpop.f32.mrf.mxu0
  %v1760 = vadd.f32 0.0, %v1759
  %1761 = vmatmul.f32.gmra.mxu0 %v1698
  %v1762 = vpop.f32.mrf.mxu0
  %v1763 = vadd.f32 0.0, %v1762
  %1764 = vmatmul.f32.gmra.mxu0 %v1701
  %v1765 = vpop.f32.mrf.mxu0
  %v1766 = vadd.f32 0.0, %v1765
  %1767 = vmatmul.f32.gmra.mxu0 %v1704
  %v1768 = vpop.f32.mrf.mxu0
  %v1769 = vadd.f32 0.0, %v1768
  %1770 = vmatmul.f32.gmra.mxu0 %v1707
  %v1771 = vpop.f32.mrf.mxu0
  %v1772 = vadd.f32 0.0, %v1771
  %1773 = vdwg.mxu0
  %v1775 = vsel %vm1359, %v1626, 0
  %v1778 = vsel %vm1359, %v1627, 0
  %v1781 = vsel %vm1359, %v1628, 0
  %v1784 = vsel %vm1359, %v1629, 0
  %v1787 = vsel %vm1359, %v1630, 0
  %v1790 = vsel %vm1359, %v1631, 0
  %v1793 = vsel %vm1359, %v1632, 0
  %v1796 = vsel %vm1359, %v1633, 0
  %v1799 = vsel %vm1359, %v1634, 0
  %v1802 = vsel %vm1359, %v1635, 0
  %v1805 = vsel %vm1359, %v1636, 0
  %v1808 = vsel %vm1359, %v1637, 0
  %v1811 = vsel %vm1359, %v1638, 0
  %v1814 = vsel %vm1359, %v1639, 0
  %v1817 = vsel %vm1359, %v1640, 0
  %v1820 = vsel %vm1359, %v1641, 0
  %1822 = vmatpush.msra.mxu0 0.0
  %1823 = vmatpush.msra.mxu0 0.0
  %1824 = vmatpush.msra.mxu0 0.0
  %1825 = vmatpush.msra.mxu0 0.0
  %1826 = vmatpush.msra.mxu0 0.0
  %1827 = vmatpush.msra.mxu0 0.0
  %1828 = vmatpush.msra.mxu0 0.0
  %1829 = vmatpush.msra.mxu0 0.0
  %1830 = vmatpush.msra.mxu0 0.0
  %1831 = vmatpush.msra.mxu0 0.0
  %1832 = vmatpush.msra.mxu0 0.0
  %1833 = vmatpush.msra.mxu0 0.0
  %1834 = vmatpush.msra.mxu0 0.0
  %1835 = vmatpush.msra.mxu0 0.0
  %1836 = vmatpush.msra.mxu0 0.0
  %1837 = vmatpush.msra.mxu0 %v1642
  %1838 = vmatmul.f32.gmra.mxu0 %v1775
  %v1839 = vpop.f32.mrf.mxu0
  %v1840 = vadd.f32 %v1727, %v1839
  %1841 = vmatmul.f32.gmra.mxu0 %v1778
  %v1842 = vpop.f32.mrf.mxu0
  %v1843 = vadd.f32 %v1730, %v1842
  %1844 = vmatmul.f32.gmra.mxu0 %v1781
  %v1845 = vpop.f32.mrf.mxu0
  %v1846 = vadd.f32 %v1733, %v1845
  %1847 = vmatmul.f32.gmra.mxu0 %v1784
  %v1848 = vpop.f32.mrf.mxu0
  %v1849 = vadd.f32 %v1736, %v1848
  %1850 = vmatmul.f32.gmra.mxu0 %v1787
  %v1851 = vpop.f32.mrf.mxu0
  %v1852 = vadd.f32 %v1739, %v1851
  %1853 = vmatmul.f32.gmra.mxu0 %v1790
  %v1854 = vpop.f32.mrf.mxu0
  %v1855 = vadd.f32 %v1742, %v1854
  %1856 = vmatmul.f32.gmra.mxu0 %v1793
  %v1857 = vpop.f32.mrf.mxu0
  %v1858 = vadd.f32 %v1745, %v1857
  %1859 = vmatmul.f32.gmra.mxu0 %v1796
  %v1860 = vpop.f32.mrf.mxu0
  %v1861 = vadd.f32 %v1748, %v1860
  %1862 = vmatmul.f32.gmra.mxu0 %v1799
  %v1863 = vpop.f32.mrf.mxu0
  %v1864 = vadd.f32 %v1751, %v1863
  %1865 = vmatmul.f32.gmra.mxu0 %v1802
  %v1866 = vpop.f32.mrf.mxu0
  %v1867 = vadd.f32 %v1754, %v1866
  %1868 = vmatmul.f32.gmra.mxu0 %v1805
  %v1869 = vpop.f32.mrf.mxu0
  %v1870 = vadd.f32 %v1757, %v1869
  %1871 = vmatmul.f32.gmra.mxu0 %v1808
  %v1872 = vpop.f32.mrf.mxu0
  %v1873 = vadd.f32 %v1760, %v1872
  %1874 = vmatmul.f32.gmra.mxu0 %v1811
  %v1875 = vpop.f32.mrf.mxu0
  %v1876 = vadd.f32 %v1763, %v1875
  %1877 = vmatmul.f32.gmra.mxu0 %v1814
  %v1878 = vpop.f32.mrf.mxu0
  %v1879 = vadd.f32 %v1766, %v1878
  %1880 = vmatmul.f32.gmra.mxu0 %v1817
  %v1881 = vpop.f32.mrf.mxu0
  %v1882 = vadd.f32 %v1769, %v1881
  %1883 = vmatmul.f32.gmra.mxu0 %v1820
  %v1884 = vpop.f32.mrf.mxu0
  %v1885 = vadd.f32 %v1772, %v1884
  %1886 = vdwg.mxu0
  %v1887 = vld [vmem:[#allocation2 + $0x2] sm:$0xff]
  %v1888 = vld [vmem:[#allocation2 + $0x12] sm:$0xff]
  %v1889 = vld [vmem:[#allocation2 + $0x22] sm:$0xff]
  %v1890 = vld [vmem:[#allocation2 + $0x32] sm:$0xff]
  %v1891 = vld [vmem:[#allocation2 + $0x42] sm:$0xff]
  %v1892 = vld [vmem:[#allocation2 + $0x52] sm:$0xff]
  %v1893 = vld [vmem:[#allocation2 + $0x62] sm:$0xff]
  %v1894 = vld [vmem:[#allocation2 + $0x72] sm:$0xff]
  %v1895 = vld [vmem:[#allocation2 + $0xa2] sm:$0xff]
  %v1896 = vld [vmem:[#allocation2 + $0xb2] sm:$0xff]
  %v1897 = vld [vmem:[#allocation2 + $0xc2] sm:$0xff]
  %v1898 = vld [vmem:[#allocation2 + $0xd2] sm:$0xff]
  %v1899 = vld [vmem:[#allocation2 + $0xe2] sm:$0xff]
  %v1900 = vld [vmem:[#allocation2 + $0xf2] sm:$0xff]
  %v1901 = vld [vmem:[#allocation2 + $0x102] sm:$0xff]
  %v1902 = vld [vmem:[#allocation2 + $0x112] sm:$0xff]
  %s1903 = scalar_lea.vmem %s2, 16
  %v1904 = vld [vmem:[%s1903] sm:$0xff]
  %v1906 = vsel %vm1359, %v1887, 0
  %v1909 = vsel %vm1359, %v1888, 0
  %v1912 = vsel %vm1359, %v1889, 0
  %v1915 = vsel %vm1359, %v1890, 0
  %v1918 = vsel %vm1359, %v1891, 0
  %v1921 = vsel %vm1359, %v1892, 0
  %v1924 = vsel %vm1359, %v1893, 0
  %v1927 = vsel %vm1359, %v1894, 0
  %v1930 = vsel %vm1359, %v1895, 0
  %v1933 = vsel %vm1359, %v1896, 0
  %v1936 = vsel %vm1359, %v1897, 0
  %v1939 = vsel %vm1359, %v1898, 0
  %v1942 = vsel %vm1359, %v1899, 0
  %v1945 = vsel %vm1359, %v1900, 0
  %v1948 = vsel %vm1359, %v1901, 0
  %v1951 = vsel %vm1359, %v1902, 0
  %1953 = vmatpush.msra.mxu0 0.0
  %1954 = vmatpush.msra.mxu0 0.0
  %1955 = vmatpush.msra.mxu0 0.0
  %1956 = vmatpush.msra.mxu0 0.0
  %1957 = vmatpush.msra.mxu0 0.0
  %1958 = vmatpush.msra.mxu0 0.0
  %1959 = vmatpush.msra.mxu0 0.0
  %1960 = vmatpush.msra.mxu0 0.0
  %1961 = vmatpush.msra.mxu0 0.0
  %1962 = vmatpush.msra.mxu0 0.0
  %1963 = vmatpush.msra.mxu0 0.0
  %1964 = vmatpush.msra.mxu0 0.0
  %1965 = vmatpush.msra.mxu0 0.0
  %1966 = vmatpush.msra.mxu0 0.0
  %1967 = vmatpush.msra.mxu0 0.0
  %1968 = vmatpush.msra.mxu0 %v1904
  %1969 = vmatmul.f32.gmra.mxu0 %v1906
  %v1970 = vpop.f32.mrf.mxu0
  %v1971 = vadd.f32 0.0, %v1970
  %1972 = vmatmul.f32.gmra.mxu0 %v1909
  %v1973 = vpop.f32.mrf.mxu0
  %v1974 = vadd.f32 0.0, %v1973
  %1975 = vmatmul.f32.gmra.mxu0 %v1912
  %v1976 = vpop.f32.mrf.mxu0
  %v1977 = vadd.f32 0.0, %v1976
  %1978 = vmatmul.f32.gmra.mxu0 %v1915
  %v1979 = vpop.f32.mrf.mxu0
  %v1980 = vadd.f32 0.0, %v1979
  %1981 = vmatmul.f32.gmra.mxu0 %v1918
  %v1982 = vpop.f32.mrf.mxu0
  %v1983 = vadd.f32 0.0, %v1982
  %1984 = vmatmul.f32.gmra.mxu0 %v1921
  %v1985 = vpop.f32.mrf.mxu0
  %v1986 = vadd.f32 0.0, %v1985
  %1987 = vmatmul.f32.gmra.mxu0 %v1924
  %v1988 = vpop.f32.mrf.mxu0
  %v1989 = vadd.f32 0.0, %v1988
  %1990 = vmatmul.f32.gmra.mxu0 %v1927
  %v1991 = vpop.f32.mrf.mxu0
  %v1992 = vadd.f32 0.0, %v1991
  %1993 = vmatmul.f32.gmra.mxu0 %v1930
  %v1994 = vpop.f32.mrf.mxu0
  %v1995 = vadd.f32 0.0, %v1994
  %1996 = vmatmul.f32.gmra.mxu0 %v1933
  %v1997 = vpop.f32.mrf.mxu0
  %v1998 = vadd.f32 0.0, %v1997
  %1999 = vmatmul.f32.gmra.mxu0 %v1936
  %v2000 = vpop.f32.mrf.mxu0
  %v2001 = vadd.f32 0.0, %v2000
  %2002 = vmatmul.f32.gmra.mxu0 %v1939
  %v2003 = vpop.f32.mrf.mxu0
  %v2004 = vadd.f32 0.0, %v2003
  %2005 = vmatmul.f32.gmra.mxu0 %v1942
  %v2006 = vpop.f32.mrf.mxu0
  %v2007 = vadd.f32 0.0, %v2006
  %2008 = vmatmul.f32.gmra.mxu0 %v1945
  %v2009 = vpop.f32.mrf.mxu0
  %v2010 = vadd.f32 0.0, %v2009
  %2011 = vmatmul.f32.gmra.mxu0 %v1948
  %v2012 = vpop.f32.mrf.mxu0
  %v2013 = vadd.f32 0.0, %v2012
  %2014 = vmatmul.f32.gmra.mxu0 %v1951
  %v2015 = vpop.f32.mrf.mxu0
  %v2016 = vadd.f32 0.0, %v2015
  %2017 = vdwg.mxu0
  %v2018 = vadd.f32 %v1840, %v1971
  %v2019 = vadd.f32 %v1843, %v1974
  %v2020 = vadd.f32 %v1846, %v1977
  %v2021 = vadd.f32 %v1849, %v1980
  %v2022 = vadd.f32 %v1852, %v1983
  %v2023 = vadd.f32 %v1855, %v1986
  %v2024 = vadd.f32 %v1858, %v1989
  %v2025 = vadd.f32 %v1861, %v1992
  %v2026 = vadd.f32 %v1864, %v1995
  %v2027 = vadd.f32 %v1867, %v1998
  %v2028 = vadd.f32 %v1870, %v2001
  %v2029 = vadd.f32 %v1873, %v2004
  %v2030 = vadd.f32 %v1876, %v2007
  %v2031 = vadd.f32 %v1879, %v2010
  %v2032 = vadd.f32 %v1882, %v2013
  %v2033 = vadd.f32 %v1885, %v2016
  %v2034 = vld [vmem:[%s1609] sm:$0xff]
  %v2035 = vld [vmem:[%s1609 + $0x10] sm:$0xff]
  %v2036 = vld [vmem:[%s1609 + $0x20] sm:$0xff]
  %v2037 = vld [vmem:[%s1609 + $0x30] sm:$0xff]
  %v2038 = vld [vmem:[%s1609 + $0x40] sm:$0xff]
  %v2039 = vld [vmem:[%s1609 + $0x50] sm:$0xff]
  %v2040 = vld [vmem:[%s1609 + $0x60] sm:$0xff]
  %v2041 = vld [vmem:[%s1609 + $0x70] sm:$0xff]
  %v2042 = vld [vmem:[%s1609 + $0xa0] sm:$0xff]
  %v2043 = vld [vmem:[%s1609 + $0xb0] sm:$0xff]
  %v2044 = vld [vmem:[%s1609 + $0xc0] sm:$0xff]
  %v2045 = vld [vmem:[%s1609 + $0xd0] sm:$0xff]
  %v2046 = vld [vmem:[%s1609 + $0xe0] sm:$0xff]
  %v2047 = vld [vmem:[%s1609 + $0xf0] sm:$0xff]
  %v2048 = vld [vmem:[%s1609 + $0x100] sm:$0xff]
  %v2049 = vld [vmem:[%s1609 + $0x110] sm:$0xff]
  %s2050 = scalar_lea.vmem %s2, 24
  %v2051 = vld [vmem:[%s2050] sm:$0xff]
  %v2053 = vsel %vm1359, %v2034, 0
  %v2056 = vsel %vm1359, %v2035, 0
  %v2059 = vsel %vm1359, %v2036, 0
  %v2062 = vsel %vm1359, %v2037, 0
  %v2065 = vsel %vm1359, %v2038, 0
  %v2068 = vsel %vm1359, %v2039, 0
  %v2071 = vsel %vm1359, %v2040, 0
  %v2074 = vsel %vm1359, %v2041, 0
  %v2077 = vsel %vm1359, %v2042, 0
  %v2080 = vsel %vm1359, %v2043, 0
  %v2083 = vsel %vm1359, %v2044, 0
  %v2086 = vsel %vm1359, %v2045, 0
  %v2089 = vsel %vm1359, %v2046, 0
  %v2092 = vsel %vm1359, %v2047, 0
  %v2095 = vsel %vm1359, %v2048, 0
  %v2098 = vsel %vm1359, %v2049, 0
  %2100 = vmatpush.msra.mxu0 0.0
  %2101 = vmatpush.msra.mxu0 0.0
  %2102 = vmatpush.msra.mxu0 0.0
  %2103 = vmatpush.msra.mxu0 0.0
  %2104 = vmatpush.msra.mxu0 0.0
  %2105 = vmatpush.msra.mxu0 0.0
  %2106 = vmatpush.msra.mxu0 0.0
  %2107 = vmatpush.msra.mxu0 0.0
  %2108 = vmatpush.msra.mxu0 0.0
  %2109 = vmatpush.msra.mxu0 0.0
  %2110 = vmatpush.msra.mxu0 0.0
  %2111 = vmatpush.msra.mxu0 0.0
  %2112 = vmatpush.msra.mxu0 0.0
  %2113 = vmatpush.msra.mxu0 0.0
  %2114 = vmatpush.msra.mxu0 0.0
  %2115 = vmatpush.msra.mxu0 %v2051
  %2116 = vmatmul.f32.gmra.mxu0 %v2053
  %v2117 = vpop.f32.mrf.mxu0
  %v2118 = vadd.f32 0.0, %v2117
  %2119 = vmatmul.f32.gmra.mxu0 %v2056
  %v2120 = vpop.f32.mrf.mxu0
  %v2121 = vadd.f32 0.0, %v2120
  %2122 = vmatmul.f32.gmra.mxu0 %v2059
  %v2123 = vpop.f32.mrf.mxu0
  %v2124 = vadd.f32 0.0, %v2123
  %2125 = vmatmul.f32.gmra.mxu0 %v2062
  %v2126 = vpop.f32.mrf.mxu0
  %v2127 = vadd.f32 0.0, %v2126
  %2128 = vmatmul.f32.gmra.mxu0 %v2065
  %v2129 = vpop.f32.mrf.mxu0
  %v2130 = vadd.f32 0.0, %v2129
  %2131 = vmatmul.f32.gmra.mxu0 %v2068
  %v2132 = vpop.f32.mrf.mxu0
  %v2133 = vadd.f32 0.0, %v2132
  %2134 = vmatmul.f32.gmra.mxu0 %v2071
  %v2135 = vpop.f32.mrf.mxu0
  %v2136 = vadd.f32 0.0, %v2135
  %2137 = vmatmul.f32.gmra.mxu0 %v2074
  %v2138 = vpop.f32.mrf.mxu0
  %v2139 = vadd.f32 0.0, %v2138
  %2140 = vmatmul.f32.gmra.mxu0 %v2077
  %v2141 = vpop.f32.mrf.mxu0
  %v2142 = vadd.f32 0.0, %v2141
  %2143 = vmatmul.f32.gmra.mxu0 %v2080
  %v2144 = vpop.f32.mrf.mxu0
  %v2145 = vadd.f32 0.0, %v2144
  %2146 = vmatmul.f32.gmra.mxu0 %v2083
  %v2147 = vpop.f32.mrf.mxu0
  %v2148 = vadd.f32 0.0, %v2147
  %2149 = vmatmul.f32.gmra.mxu0 %v2086
  %v2150 = vpop.f32.mrf.mxu0
  %v2151 = vadd.f32 0.0, %v2150
  %2152 = vmatmul.f32.gmra.mxu0 %v2089
  %v2153 = vpop.f32.mrf.mxu0
  %v2154 = vadd.f32 0.0, %v2153
  %2155 = vmatmul.f32.gmra.mxu0 %v2092
  %v2156 = vpop.f32.mrf.mxu0
  %v2157 = vadd.f32 0.0, %v2156
  %2158 = vmatmul.f32.gmra.mxu0 %v2095
  %v2159 = vpop.f32.mrf.mxu0
  %v2160 = vadd.f32 0.0, %v2159
  %2161 = vmatmul.f32.gmra.mxu0 %v2098
  %v2162 = vpop.f32.mrf.mxu0
  %v2163 = vadd.f32 0.0, %v2162
  %2164 = vdwg.mxu0
  %v2165 = vadd.f32 %v2018, %v2118
  %v2166 = vadd.f32 %v2019, %v2121
  %v2167 = vadd.f32 %v2020, %v2124
  %v2168 = vadd.f32 %v2021, %v2127
  %v2169 = vadd.f32 %v2022, %v2130
  %v2170 = vadd.f32 %v2023, %v2133
  %v2171 = vadd.f32 %v2024, %v2136
  %v2172 = vadd.f32 %v2025, %v2139
  %v2173 = vadd.f32 %v2026, %v2142
  %v2174 = vadd.f32 %v2027, %v2145
  %v2175 = vadd.f32 %v2028, %v2148
  %v2176 = vadd.f32 %v2029, %v2151
  %v2177 = vadd.f32 %v2030, %v2154
  %v2178 = vadd.f32 %v2031, %v2157
  %v2179 = vadd.f32 %v2032, %v2160
  %v2180 = vadd.f32 %v2033, %v2163
  %v2181 = vld [vmem:[%s1609 + $0x1] sm:$0xff]
  %v2182 = vld [vmem:[%s1609 + $0x11] sm:$0xff]
  %v2183 = vld [vmem:[%s1609 + $0x21] sm:$0xff]
  %v2184 = vld [vmem:[%s1609 + $0x31] sm:$0xff]
  %v2185 = vld [vmem:[%s1609 + $0x41] sm:$0xff]
  %v2186 = vld [vmem:[%s1609 + $0x51] sm:$0xff]
  %v2187 = vld [vmem:[%s1609 + $0x61] sm:$0xff]
  %v2188 = vld [vmem:[%s1609 + $0x71] sm:$0xff]
  %v2189 = vld [vmem:[%s1609 + $0xa1] sm:$0xff]
  %v2190 = vld [vmem:[%s1609 + $0xb1] sm:$0xff]
  %v2191 = vld [vmem:[%s1609 + $0xc1] sm:$0xff]
  %v2192 = vld [vmem:[%s1609 + $0xd1] sm:$0xff]
  %v2193 = vld [vmem:[%s1609 + $0xe1] sm:$0xff]
  %v2194 = vld [vmem:[%s1609 + $0xf1] sm:$0xff]
  %v2195 = vld [vmem:[%s1609 + $0x101] sm:$0xff]
  %v2196 = vld [vmem:[%s1609 + $0x111] sm:$0xff]
  %s2197 = scalar_lea.vmem %s2, 32
  %v2198 = vld [vmem:[%s2197] sm:$0xff]
  %v2200 = vsel %vm1359, %v2181, 0
  %v2203 = vsel %vm1359, %v2182, 0
  %v2206 = vsel %vm1359, %v2183, 0
  %v2209 = vsel %vm1359, %v2184, 0
  %v2212 = vsel %vm1359, %v2185, 0
  %v2215 = vsel %vm1359, %v2186, 0
  %v2218 = vsel %vm1359, %v2187, 0
  %v2221 = vsel %vm1359, %v2188, 0
  %v2224 = vsel %vm1359, %v2189, 0
  %v2227 = vsel %vm1359, %v2190, 0
  %v2230 = vsel %vm1359, %v2191, 0
  %v2233 = vsel %vm1359, %v2192, 0
  %v2236 = vsel %vm1359, %v2193, 0
  %v2239 = vsel %vm1359, %v2194, 0
  %v2242 = vsel %vm1359, %v2195, 0
  %v2245 = vsel %vm1359, %v2196, 0
  %2247 = vmatpush.msra.mxu0 0.0
  %2248 = vmatpush.msra.mxu0 0.0
  %2249 = vmatpush.msra.mxu0 0.0
  %2250 = vmatpush.msra.mxu0 0.0
  %2251 = vmatpush.msra.mxu0 0.0
  %2252 = vmatpush.msra.mxu0 0.0
  %2253 = vmatpush.msra.mxu0 0.0
  %2254 = vmatpush.msra.mxu0 0.0
  %2255 = vmatpush.msra.mxu0 0.0
  %2256 = vmatpush.msra.mxu0 0.0
  %2257 = vmatpush.msra.mxu0 0.0
  %2258 = vmatpush.msra.mxu0 0.0
  %2259 = vmatpush.msra.mxu0 0.0
  %2260 = vmatpush.msra.mxu0 0.0
  %2261 = vmatpush.msra.mxu0 0.0
  %2262 = vmatpush.msra.mxu0 %v2198
  %2263 = vmatmul.f32.gmra.mxu0 %v2200
  %v2264 = vpop.f32.mrf.mxu0
  %v2265 = vadd.f32 0.0, %v2264
  %2266 = vmatmul.f32.gmra.mxu0 %v2203
  %v2267 = vpop.f32.mrf.mxu0
  %v2268 = vadd.f32 0.0, %v2267
  %2269 = vmatmul.f32.gmra.mxu0 %v2206
  %v2270 = vpop.f32.mrf.mxu0
  %v2271 = vadd.f32 0.0, %v2270
  %2272 = vmatmul.f32.gmra.mxu0 %v2209
  %v2273 = vpop.f32.mrf.mxu0
  %v2274 = vadd.f32 0.0, %v2273
  %2275 = vmatmul.f32.gmra.mxu0 %v2212
  %v2276 = vpop.f32.mrf.mxu0
  %v2277 = vadd.f32 0.0, %v2276
  %2278 = vmatmul.f32.gmra.mxu0 %v2215
  %v2279 = vpop.f32.mrf.mxu0
  %v2280 = vadd.f32 0.0, %v2279
  %2281 = vmatmul.f32.gmra.mxu0 %v2218
  %v2282 = vpop.f32.mrf.mxu0
  %v2283 = vadd.f32 0.0, %v2282
  %2284 = vmatmul.f32.gmra.mxu0 %v2221
  %v2285 = vpop.f32.mrf.mxu0
  %v2286 = vadd.f32 0.0, %v2285
  %2287 = vmatmul.f32.gmra.mxu0 %v2224
  %v2288 = vpop.f32.mrf.mxu0
  %v2289 = vadd.f32 0.0, %v2288
  %2290 = vmatmul.f32.gmra.mxu0 %v2227
  %v2291 = vpop.f32.mrf.mxu0
  %v2292 = vadd.f32 0.0, %v2291
  %2293 = vmatmul.f32.gmra.mxu0 %v2230
  %v2294 = vpop.f32.mrf.mxu0
  %v2295 = vadd.f32 0.0, %v2294
  %2296 = vmatmul.f32.gmra.mxu0 %v2233
  %v2297 = vpop.f32.mrf.mxu0
  %v2298 = vadd.f32 0.0, %v2297
  %2299 = vmatmul.f32.gmra.mxu0 %v2236
  %v2300 = vpop.f32.mrf.mxu0
  %v2301 = vadd.f32 0.0, %v2300
  %2302 = vmatmul.f32.gmra.mxu0 %v2239
  %v2303 = vpop.f32.mrf.mxu0
  %v2304 = vadd.f32 0.0, %v2303
  %2305 = vmatmul.f32.gmra.mxu0 %v2242
  %v2306 = vpop.f32.mrf.mxu0
  %v2307 = vadd.f32 0.0, %v2306
  %2308 = vmatmul.f32.gmra.mxu0 %v2245
  %v2309 = vpop.f32.mrf.mxu0
  %v2310 = vadd.f32 0.0, %v2309
  %2311 = vdwg.mxu0
  %v2312 = vadd.f32 %v2165, %v2265
  %v2313 = vadd.f32 %v2166, %v2268
  %v2314 = vadd.f32 %v2167, %v2271
  %v2315 = vadd.f32 %v2168, %v2274
  %v2316 = vadd.f32 %v2169, %v2277
  %v2317 = vadd.f32 %v2170, %v2280
  %v2318 = vadd.f32 %v2171, %v2283
  %v2319 = vadd.f32 %v2172, %v2286
  %v2320 = vadd.f32 %v2173, %v2289
  %v2321 = vadd.f32 %v2174, %v2292
  %v2322 = vadd.f32 %v2175, %v2295
  %v2323 = vadd.f32 %v2176, %v2298
  %v2324 = vadd.f32 %v2177, %v2301
  %v2325 = vadd.f32 %v2178, %v2304
  %v2326 = vadd.f32 %v2179, %v2307
  %v2327 = vadd.f32 %v2180, %v2310
  %v2328 = vld [vmem:[%s1609 + $0x2] sm:$0xff]
  %v2329 = vld [vmem:[%s1609 + $0x12] sm:$0xff]
  %v2330 = vld [vmem:[%s1609 + $0x22] sm:$0xff]
  %v2331 = vld [vmem:[%s1609 + $0x32] sm:$0xff]
  %v2332 = vld [vmem:[%s1609 + $0x42] sm:$0xff]
  %v2333 = vld [vmem:[%s1609 + $0x52] sm:$0xff]
  %v2334 = vld [vmem:[%s1609 + $0x62] sm:$0xff]
  %v2335 = vld [vmem:[%s1609 + $0x72] sm:$0xff]
  %v2336 = vld [vmem:[%s1609 + $0xa2] sm:$0xff]
  %v2337 = vld [vmem:[%s1609 + $0xb2] sm:$0xff]
  %v2338 = vld [vmem:[%s1609 + $0xc2] sm:$0xff]
  %v2339 = vld [vmem:[%s1609 + $0xd2] sm:$0xff]
  %v2340 = vld [vmem:[%s1609 + $0xe2] sm:$0xff]
  %v2341 = vld [vmem:[%s1609 + $0xf2] sm:$0xff]
  %v2342 = vld [vmem:[%s1609 + $0x102] sm:$0xff]
  %v2343 = vld [vmem:[%s1609 + $0x112] sm:$0xff]
  %s2344 = scalar_lea.vmem %s2, 40
  %v2345 = vld [vmem:[%s2344] sm:$0xff]
  %v2347 = vsel %vm1359, %v2328, 0
  %v2350 = vsel %vm1359, %v2329, 0
  %v2353 = vsel %vm1359, %v2330, 0
  %v2356 = vsel %vm1359, %v2331, 0
  %v2359 = vsel %vm1359, %v2332, 0
  %v2362 = vsel %vm1359, %v2333, 0
  %v2365 = vsel %vm1359, %v2334, 0
  %v2368 = vsel %vm1359, %v2335, 0
  %v2371 = vsel %vm1359, %v2336, 0
  %v2374 = vsel %vm1359, %v2337, 0
  %v2377 = vsel %vm1359, %v2338, 0
  %v2380 = vsel %vm1359, %v2339, 0
  %v2383 = vsel %vm1359, %v2340, 0
  %v2386 = vsel %vm1359, %v2341, 0
  %v2389 = vsel %vm1359, %v2342, 0
  %v2392 = vsel %vm1359, %v2343, 0
  %2394 = vmatpush.msra.mxu0 0.0
  %2395 = vmatpush.msra.mxu0 0.0
  %2396 = vmatpush.msra.mxu0 0.0
  %2397 = vmatpush.msra.mxu0 0.0
  %2398 = vmatpush.msra.mxu0 0.0
  %2399 = vmatpush.msra.mxu0 0.0
  %2400 = vmatpush.msra.mxu0 0.0
  %2401 = vmatpush.msra.mxu0 0.0
  %2402 = vmatpush.msra.mxu0 0.0
  %2403 = vmatpush.msra.mxu0 0.0
  %2404 = vmatpush.msra.mxu0 0.0
  %2405 = vmatpush.msra.mxu0 0.0
  %2406 = vmatpush.msra.mxu0 0.0
  %2407 = vmatpush.msra.mxu0 0.0
  %2408 = vmatpush.msra.mxu0 0.0
  %2409 = vmatpush.msra.mxu0 %v2345
  %2410 = vmatmul.f32.gmra.mxu0 %v2347
  %v2411 = vpop.f32.mrf.mxu0
  %v2412 = vadd.f32 0.0, %v2411
  %2413 = vmatmul.f32.gmra.mxu0 %v2350
  %v2414 = vpop.f32.mrf.mxu0
  %v2415 = vadd.f32 0.0, %v2414
  %2416 = vmatmul.f32.gmra.mxu0 %v2353
  %v2417 = vpop.f32.mrf.mxu0
  %v2418 = vadd.f32 0.0, %v2417
  %2419 = vmatmul.f32.gmra.mxu0 %v2356
  %v2420 = vpop.f32.mrf.mxu0
  %v2421 = vadd.f32 0.0, %v2420
  %2422 = vmatmul.f32.gmra.mxu0 %v2359
  %v2423 = vpop.f32.mrf.mxu0
  %v2424 = vadd.f32 0.0, %v2423
  %2425 = vmatmul.f32.gmra.mxu0 %v2362
  %v2426 = vpop.f32.mrf.mxu0
  %v2427 = vadd.f32 0.0, %v2426
  %2428 = vmatmul.f32.gmra.mxu0 %v2365
  %v2429 = vpop.f32.mrf.mxu0
  %v2430 = vadd.f32 0.0, %v2429
  %2431 = vmatmul.f32.gmra.mxu0 %v2368
  %v2432 = vpop.f32.mrf.mxu0
  %v2433 = vadd.f32 0.0, %v2432
  %2434 = vmatmul.f32.gmra.mxu0 %v2371
  %v2435 = vpop.f32.mrf.mxu0
  %v2436 = vadd.f32 0.0, %v2435
  %2437 = vmatmul.f32.gmra.mxu0 %v2374
  %v2438 = vpop.f32.mrf.mxu0
  %v2439 = vadd.f32 0.0, %v2438
  %2440 = vmatmul.f32.gmra.mxu0 %v2377
  %v2441 = vpop.f32.mrf.mxu0
  %v2442 = vadd.f32 0.0, %v2441
  %2443 = vmatmul.f32.gmra.mxu0 %v2380
  %v2444 = vpop.f32.mrf.mxu0
  %v2445 = vadd.f32 0.0, %v2444
  %2446 = vmatmul.f32.gmra.mxu0 %v2383
  %v2447 = vpop.f32.mrf.mxu0
  %v2448 = vadd.f32 0.0, %v2447
  %2449 = vmatmul.f32.gmra.mxu0 %v2386
  %v2450 = vpop.f32.mrf.mxu0
  %v2451 = vadd.f32 0.0, %v2450
  %2452 = vmatmul.f32.gmra.mxu0 %v2389
  %v2453 = vpop.f32.mrf.mxu0
  %v2454 = vadd.f32 0.0, %v2453
  %2455 = vmatmul.f32.gmra.mxu0 %v2392
  %v2456 = vpop.f32.mrf.mxu0
  %v2457 = vadd.f32 0.0, %v2456
  %2458 = vdwg.mxu0
  %v2459 = vadd.f32 %v2312, %v2412
  %v2460 = vadd.f32 %v2313, %v2415
  %v2461 = vadd.f32 %v2314, %v2418
  %v2462 = vadd.f32 %v2315, %v2421
  %v2463 = vadd.f32 %v2316, %v2424
  %v2464 = vadd.f32 %v2317, %v2427
  %v2465 = vadd.f32 %v2318, %v2430
  %v2466 = vadd.f32 %v2319, %v2433
  %v2467 = vadd.f32 %v2320, %v2436
  %v2468 = vadd.f32 %v2321, %v2439
  %v2469 = vadd.f32 %v2322, %v2442
  %v2470 = vadd.f32 %v2323, %v2445
  %v2471 = vadd.f32 %v2324, %v2448
  %v2472 = vadd.f32 %v2325, %v2451
  %v2473 = vadd.f32 %v2326, %v2454
  %v2474 = vadd.f32 %v2327, %v2457
  %s2475 = scalar_lea.vmem [#allocation2], 32
  %v2476 = vld [vmem:[%s2475] sm:$0xff]
  %v2477 = vld [vmem:[%s2475 + $0x10] sm:$0xff]
  %v2478 = vld [vmem:[%s2475 + $0x20] sm:$0xff]
  %v2479 = vld [vmem:[%s2475 + $0x30] sm:$0xff]
  %v2480 = vld [vmem:[%s2475 + $0x40] sm:$0xff]
  %v2481 = vld [vmem:[%s2475 + $0x50] sm:$0xff]
  %v2482 = vld [vmem:[%s2475 + $0x60] sm:$0xff]
  %v2483 = vld [vmem:[%s2475 + $0x70] sm:$0xff]
  %v2484 = vld [vmem:[%s2475 + $0xa0] sm:$0xff]
  %v2485 = vld [vmem:[%s2475 + $0xb0] sm:$0xff]
  %v2486 = vld [vmem:[%s2475 + $0xc0] sm:$0xff]
  %v2487 = vld [vmem:[%s2475 + $0xd0] sm:$0xff]
  %v2488 = vld [vmem:[%s2475 + $0xe0] sm:$0xff]
  %v2489 = vld [vmem:[%s2475 + $0xf0] sm:$0xff]
  %v2490 = vld [vmem:[%s2475 + $0x100] sm:$0xff]
  %v2491 = vld [vmem:[%s2475 + $0x110] sm:$0xff]
  %s2492 = scalar_lea.vmem %s2, 48
  %v2493 = vld [vmem:[%s2492] sm:$0xff]
  %v2495 = vsel %vm1359, %v2476, 0
  %v2498 = vsel %vm1359, %v2477, 0
  %v2501 = vsel %vm1359, %v2478, 0
  %v2504 = vsel %vm1359, %v2479, 0
  %v2507 = vsel %vm1359, %v2480, 0
  %v2510 = vsel %vm1359, %v2481, 0
  %v2513 = vsel %vm1359, %v2482, 0
  %v2516 = vsel %vm1359, %v2483, 0
  %v2519 = vsel %vm1359, %v2484, 0
  %v2522 = vsel %vm1359, %v2485, 0
  %v2525 = vsel %vm1359, %v2486, 0
  %v2528 = vsel %vm1359, %v2487, 0
  %v2531 = vsel %vm1359, %v2488, 0
  %v2534 = vsel %vm1359, %v2489, 0
  %v2537 = vsel %vm1359, %v2490, 0
  %v2540 = vsel %vm1359, %v2491, 0
  %2542 = vmatpush.msra.mxu0 0.0
  %2543 = vmatpush.msra.mxu0 0.0
  %2544 = vmatpush.msra.mxu0 0.0
  %2545 = vmatpush.msra.mxu0 0.0
  %2546 = vmatpush.msra.mxu0 0.0
  %2547 = vmatpush.msra.mxu0 0.0
  %2548 = vmatpush.msra.mxu0 0.0
  %2549 = vmatpush.msra.mxu0 0.0
  %2550 = vmatpush.msra.mxu0 0.0
  %2551 = vmatpush.msra.mxu0 0.0
  %2552 = vmatpush.msra.mxu0 0.0
  %2553 = vmatpush.msra.mxu0 0.0
  %2554 = vmatpush.msra.mxu0 0.0
  %2555 = vmatpush.msra.mxu0 0.0
  %2556 = vmatpush.msra.mxu0 0.0
  %2557 = vmatpush.msra.mxu0 %v2493
  %2558 = vmatmul.f32.gmra.mxu0 %v2495
  %v2559 = vpop.f32.mrf.mxu0
  %v2560 = vadd.f32 0.0, %v2559
  %2561 = vmatmul.f32.gmra.mxu0 %v2498
  %v2562 = vpop.f32.mrf.mxu0
  %v2563 = vadd.f32 0.0, %v2562
  %2564 = vmatmul.f32.gmra.mxu0 %v2501
  %v2565 = vpop.f32.mrf.mxu0
  %v2566 = vadd.f32 0.0, %v2565
  %2567 = vmatmul.f32.gmra.mxu0 %v2504
  %v2568 = vpop.f32.mrf.mxu0
  %v2569 = vadd.f32 0.0, %v2568
  %2570 = vmatmul.f32.gmra.mxu0 %v2507
  %v2571 = vpop.f32.mrf.mxu0
  %v2572 = vadd.f32 0.0, %v2571
  %2573 = vmatmul.f32.gmra.mxu0 %v2510
  %v2574 = vpop.f32.mrf.mxu0
  %v2575 = vadd.f32 0.0, %v2574
  %2576 = vmatmul.f32.gmra.mxu0 %v2513
  %v2577 = vpop.f32.mrf.mxu0
  %v2578 = vadd.f32 0.0, %v2577
  %2579 = vmatmul.f32.gmra.mxu0 %v2516
  %v2580 = vpop.f32.mrf.mxu0
  %v2581 = vadd.f32 0.0, %v2580
  %2582 = vmatmul.f32.gmra.mxu0 %v2519
  %v2583 = vpop.f32.mrf.mxu0
  %v2584 = vadd.f32 0.0, %v2583
  %2585 = vmatmul.f32.gmra.mxu0 %v2522
  %v2586 = vpop.f32.mrf.mxu0
  %v2587 = vadd.f32 0.0, %v2586
  %2588 = vmatmul.f32.gmra.mxu0 %v2525
  %v2589 = vpop.f32.mrf.mxu0
  %v2590 = vadd.f32 0.0, %v2589
  %2591 = vmatmul.f32.gmra.mxu0 %v2528
  %v2592 = vpop.f32.mrf.mxu0
  %v2593 = vadd.f32 0.0, %v2592
  %2594 = vmatmul.f32.gmra.mxu0 %v2531
  %v2595 = vpop.f32.mrf.mxu0
  %v2596 = vadd.f32 0.0, %v2595
  %2597 = vmatmul.f32.gmra.mxu0 %v2534
  %v2598 = vpop.f32.mrf.mxu0
  %v2599 = vadd.f32 0.0, %v2598
  %2600 = vmatmul.f32.gmra.mxu0 %v2537
  %v2601 = vpop.f32.mrf.mxu0
  %v2602 = vadd.f32 0.0, %v2601
  %2603 = vmatmul.f32.gmra.mxu0 %v2540
  %v2604 = vpop.f32.mrf.mxu0
  %v2605 = vadd.f32 0.0, %v2604
  %2606 = vdwg.mxu0
  %v2607 = vadd.f32 %v2459, %v2560
  %v2608 = vadd.f32 %v2460, %v2563
  %v2609 = vadd.f32 %v2461, %v2566
  %v2610 = vadd.f32 %v2462, %v2569
  %v2611 = vadd.f32 %v2463, %v2572
  %v2612 = vadd.f32 %v2464, %v2575
  %v2613 = vadd.f32 %v2465, %v2578
  %v2614 = vadd.f32 %v2466, %v2581
  %v2615 = vadd.f32 %v2467, %v2584
  %v2616 = vadd.f32 %v2468, %v2587
  %v2617 = vadd.f32 %v2469, %v2590
  %v2618 = vadd.f32 %v2470, %v2593
  %v2619 = vadd.f32 %v2471, %v2596
  %v2620 = vadd.f32 %v2472, %v2599
  %v2621 = vadd.f32 %v2473, %v2602
  %v2622 = vadd.f32 %v2474, %v2605
  %v2623 = vld [vmem:[%s2475 + $0x1] sm:$0xff]
  %v2624 = vld [vmem:[%s2475 + $0x11] sm:$0xff]
  %v2625 = vld [vmem:[%s2475 + $0x21] sm:$0xff]
  %v2626 = vld [vmem:[%s2475 + $0x31] sm:$0xff]
  %v2627 = vld [vmem:[%s2475 + $0x41] sm:$0xff]
  %v2628 = vld [vmem:[%s2475 + $0x51] sm:$0xff]
  %v2629 = vld [vmem:[%s2475 + $0x61] sm:$0xff]
  %v2630 = vld [vmem:[%s2475 + $0x71] sm:$0xff]
  %v2631 = vld [vmem:[%s2475 + $0xa1] sm:$0xff]
  %v2632 = vld [vmem:[%s2475 + $0xb1] sm:$0xff]
  %v2633 = vld [vmem:[%s2475 + $0xc1] sm:$0xff]
  %v2634 = vld [vmem:[%s2475 + $0xd1] sm:$0xff]
  %v2635 = vld [vmem:[%s2475 + $0xe1] sm:$0xff]
  %v2636 = vld [vmem:[%s2475 + $0xf1] sm:$0xff]
  %v2637 = vld [vmem:[%s2475 + $0x101] sm:$0xff]
  %v2638 = vld [vmem:[%s2475 + $0x111] sm:$0xff]
  %s2639 = scalar_lea.vmem %s2, 56
  %v2640 = vld [vmem:[%s2639] sm:$0xff]
  %v2642 = vsel %vm1359, %v2623, 0
  %v2645 = vsel %vm1359, %v2624, 0
  %v2648 = vsel %vm1359, %v2625, 0
  %v2651 = vsel %vm1359, %v2626, 0
  %v2654 = vsel %vm1359, %v2627, 0
  %v2657 = vsel %vm1359, %v2628, 0
  %v2660 = vsel %vm1359, %v2629, 0
  %v2663 = vsel %vm1359, %v2630, 0
  %v2666 = vsel %vm1359, %v2631, 0
  %v2669 = vsel %vm1359, %v2632, 0
  %v2672 = vsel %vm1359, %v2633, 0
  %v2675 = vsel %vm1359, %v2634, 0
  %v2678 = vsel %vm1359, %v2635, 0
  %v2681 = vsel %vm1359, %v2636, 0
  %v2684 = vsel %vm1359, %v2637, 0
  %v2687 = vsel %vm1359, %v2638, 0
  %2689 = vmatpush.msra.mxu0 0.0
  %2690 = vmatpush.msra.mxu0 0.0
  %2691 = vmatpush.msra.mxu0 0.0
  %2692 = vmatpush.msra.mxu0 0.0
  %2693 = vmatpush.msra.mxu0 0.0
  %2694 = vmatpush.msra.mxu0 0.0
  %2695 = vmatpush.msra.mxu0 0.0
  %2696 = vmatpush.msra.mxu0 0.0
  %2697 = vmatpush.msra.mxu0 0.0
  %2698 = vmatpush.msra.mxu0 0.0
  %2699 = vmatpush.msra.mxu0 0.0
  %2700 = vmatpush.msra.mxu0 0.0
  %2701 = vmatpush.msra.mxu0 0.0
  %2702 = vmatpush.msra.mxu0 0.0
  %2703 = vmatpush.msra.mxu0 0.0
  %2704 = vmatpush.msra.mxu0 %v2640
  %2705 = vmatmul.f32.gmra.mxu0 %v2642
  %v2706 = vpop.f32.mrf.mxu0
  %v2707 = vadd.f32 0.0, %v2706
  %2708 = vmatmul.f32.gmra.mxu0 %v2645
  %v2709 = vpop.f32.mrf.mxu0
  %v2710 = vadd.f32 0.0, %v2709
  %2711 = vmatmul.f32.gmra.mxu0 %v2648
  %v2712 = vpop.f32.mrf.mxu0
  %v2713 = vadd.f32 0.0, %v2712
  %2714 = vmatmul.f32.gmra.mxu0 %v2651
  %v2715 = vpop.f32.mrf.mxu0
  %v2716 = vadd.f32 0.0, %v2715
  %2717 = vmatmul.f32.gmra.mxu0 %v2654
  %v2718 = vpop.f32.mrf.mxu0
  %v2719 = vadd.f32 0.0, %v2718
  %2720 = vmatmul.f32.gmra.mxu0 %v2657
  %v2721 = vpop.f32.mrf.mxu0
  %v2722 = vadd.f32 0.0, %v2721
  %2723 = vmatmul.f32.gmra.mxu0 %v2660
  %v2724 = vpop.f32.mrf.mxu0
  %v2725 = vadd.f32 0.0, %v2724
  %2726 = vmatmul.f32.gmra.mxu0 %v2663
  %v2727 = vpop.f32.mrf.mxu0
  %v2728 = vadd.f32 0.0, %v2727
  %2729 = vmatmul.f32.gmra.mxu0 %v2666
  %v2730 = vpop.f32.mrf.mxu0
  %v2731 = vadd.f32 0.0, %v2730
  %2732 = vmatmul.f32.gmra.mxu0 %v2669
  %v2733 = vpop.f32.mrf.mxu0
  %v2734 = vadd.f32 0.0, %v2733
  %2735 = vmatmul.f32.gmra.mxu0 %v2672
  %v2736 = vpop.f32.mrf.mxu0
  %v2737 = vadd.f32 0.0, %v2736
  %2738 = vmatmul.f32.gmra.mxu0 %v2675
  %v2739 = vpop.f32.mrf.mxu0
  %v2740 = vadd.f32 0.0, %v2739
  %2741 = vmatmul.f32.gmra.mxu0 %v2678
  %v2742 = vpop.f32.mrf.mxu0
  %v2743 = vadd.f32 0.0, %v2742
  %2744 = vmatmul.f32.gmra.mxu0 %v2681
  %v2745 = vpop.f32.mrf.mxu0
  %v2746 = vadd.f32 0.0, %v2745
  %2747 = vmatmul.f32.gmra.mxu0 %v2684
  %v2748 = vpop.f32.mrf.mxu0
  %v2749 = vadd.f32 0.0, %v2748
  %2750 = vmatmul.f32.gmra.mxu0 %v2687
  %v2751 = vpop.f32.mrf.mxu0
  %v2752 = vadd.f32 0.0, %v2751
  %2753 = vdwg.mxu0
  %v2754 = vadd.f32 %v2607, %v2707
  %v2755 = vadd.f32 %v2608, %v2710
  %v2756 = vadd.f32 %v2609, %v2713
  %v2757 = vadd.f32 %v2610, %v2716
  %v2758 = vadd.f32 %v2611, %v2719
  %v2759 = vadd.f32 %v2612, %v2722
  %v2760 = vadd.f32 %v2613, %v2725
  %v2761 = vadd.f32 %v2614, %v2728
  %v2762 = vadd.f32 %v2615, %v2731
  %v2763 = vadd.f32 %v2616, %v2734
  %v2764 = vadd.f32 %v2617, %v2737
  %v2765 = vadd.f32 %v2618, %v2740
  %v2766 = vadd.f32 %v2619, %v2743
  %v2767 = vadd.f32 %v2620, %v2746
  %v2768 = vadd.f32 %v2621, %v2749
  %v2769 = vadd.f32 %v2622, %v2752
  %v2770 = vld [vmem:[%s2475 + $0x2] sm:$0xff]
  %v2771 = vld [vmem:[%s2475 + $0x12] sm:$0xff]
  %v2772 = vld [vmem:[%s2475 + $0x22] sm:$0xff]
  %v2773 = vld [vmem:[%s2475 + $0x32] sm:$0xff]
  %v2774 = vld [vmem:[%s2475 + $0x42] sm:$0xff]
  %v2775 = vld [vmem:[%s2475 + $0x52] sm:$0xff]
  %v2776 = vld [vmem:[%s2475 + $0x62] sm:$0xff]
  %v2777 = vld [vmem:[%s2475 + $0x72] sm:$0xff]
  %v2778 = vld [vmem:[%s2475 + $0xa2] sm:$0xff]
  %v2779 = vld [vmem:[%s2475 + $0xb2] sm:$0xff]
  %v2780 = vld [vmem:[%s2475 + $0xc2] sm:$0xff]
  %v2781 = vld [vmem:[%s2475 + $0xd2] sm:$0xff]
  %v2782 = vld [vmem:[%s2475 + $0xe2] sm:$0xff]
  %v2783 = vld [vmem:[%s2475 + $0xf2] sm:$0xff]
  %v2784 = vld [vmem:[%s2475 + $0x102] sm:$0xff]
  %v2785 = vld [vmem:[%s2475 + $0x112] sm:$0xff]
  %s2786 = scalar_lea.vmem %s2, 64
  %v2787 = vld [vmem:[%s2786] sm:$0xff]
  %v2789 = vsel %vm1359, %v2770, 0
  %v2792 = vsel %vm1359, %v2771, 0
  %v2795 = vsel %vm1359, %v2772, 0
  %v2798 = vsel %vm1359, %v2773, 0
  %v2801 = vsel %vm1359, %v2774, 0
  %v2804 = vsel %vm1359, %v2775, 0
  %v2807 = vsel %vm1359, %v2776, 0
  %v2810 = vsel %vm1359, %v2777, 0
  %v2813 = vsel %vm1359, %v2778, 0
  %v2816 = vsel %vm1359, %v2779, 0
  %v2819 = vsel %vm1359, %v2780, 0
  %v2822 = vsel %vm1359, %v2781, 0
  %v2825 = vsel %vm1359, %v2782, 0
  %v2828 = vsel %vm1359, %v2783, 0
  %v2831 = vsel %vm1359, %v2784, 0
  %v2834 = vsel %vm1359, %v2785, 0
  %2836 = vmatpush.msra.mxu0 0.0
  %2837 = vmatpush.msra.mxu0 0.0
  %2838 = vmatpush.msra.mxu0 0.0
  %2839 = vmatpush.msra.mxu0 0.0
  %2840 = vmatpush.msra.mxu0 0.0
  %2841 = vmatpush.msra.mxu0 0.0
  %2842 = vmatpush.msra.mxu0 0.0
  %2843 = vmatpush.msra.mxu0 0.0
  %2844 = vmatpush.msra.mxu0 0.0
  %2845 = vmatpush.msra.mxu0 0.0
  %2846 = vmatpush.msra.mxu0 0.0
  %2847 = vmatpush.msra.mxu0 0.0
  %2848 = vmatpush.msra.mxu0 0.0
  %2849 = vmatpush.msra.mxu0 0.0
  %2850 = vmatpush.msra.mxu0 0.0
  %2851 = vmatpush.msra.mxu0 %v2787
  %2852 = vmatmul.f32.gmra.mxu0 %v2789
  %v2853 = vpop.f32.mrf.mxu0
  %v2854 = vadd.f32 0.0, %v2853
  %2855 = vmatmul.f32.gmra.mxu0 %v2792
  %v2856 = vpop.f32.mrf.mxu0
  %v2857 = vadd.f32 0.0, %v2856
  %2858 = vmatmul.f32.gmra.mxu0 %v2795
  %v2859 = vpop.f32.mrf.mxu0
  %v2860 = vadd.f32 0.0, %v2859
  %2861 = vmatmul.f32.gmra.mxu0 %v2798
  %v2862 = vpop.f32.mrf.mxu0
  %v2863 = vadd.f32 0.0, %v2862
  %2864 = vmatmul.f32.gmra.mxu0 %v2801
  %v2865 = vpop.f32.mrf.mxu0
  %v2866 = vadd.f32 0.0, %v2865
  %2867 = vmatmul.f32.gmra.mxu0 %v2804
  %v2868 = vpop.f32.mrf.mxu0
  %v2869 = vadd.f32 0.0, %v2868
  %2870 = vmatmul.f32.gmra.mxu0 %v2807
  %v2871 = vpop.f32.mrf.mxu0
  %v2872 = vadd.f32 0.0, %v2871
  %2873 = vmatmul.f32.gmra.mxu0 %v2810
  %v2874 = vpop.f32.mrf.mxu0
  %v2875 = vadd.f32 0.0, %v2874
  %2876 = vmatmul.f32.gmra.mxu0 %v2813
  %v2877 = vpop.f32.mrf.mxu0
  %v2878 = vadd.f32 0.0, %v2877
  %2879 = vmatmul.f32.gmra.mxu0 %v2816
  %v2880 = vpop.f32.mrf.mxu0
  %v2881 = vadd.f32 0.0, %v2880
  %2882 = vmatmul.f32.gmra.mxu0 %v2819
  %v2883 = vpop.f32.mrf.mxu0
  %v2884 = vadd.f32 0.0, %v2883
  %2885 = vmatmul.f32.gmra.mxu0 %v2822
  %v2886 = vpop.f32.mrf.mxu0
  %v2887 = vadd.f32 0.0, %v2886
  %2888 = vmatmul.f32.gmra.mxu0 %v2825
  %v2889 = vpop.f32.mrf.mxu0
  %v2890 = vadd.f32 0.0, %v2889
  %2891 = vmatmul.f32.gmra.mxu0 %v2828
  %v2892 = vpop.f32.mrf.mxu0
  %v2893 = vadd.f32 0.0, %v2892
  %2894 = vmatmul.f32.gmra.mxu0 %v2831
  %v2895 = vpop.f32.mrf.mxu0
  %v2896 = vadd.f32 0.0, %v2895
  %2897 = vmatmul.f32.gmra.mxu0 %v2834
  %v2898 = vpop.f32.mrf.mxu0
  %v2899 = vadd.f32 0.0, %v2898
  %2900 = vdwg.mxu0
  %v2901 = vadd.f32 %v2754, %v2854
  %v2902 = vadd.f32 %v2755, %v2857
  %v2903 = vadd.f32 %v2756, %v2860
  %v2904 = vadd.f32 %v2757, %v2863
  %v2905 = vadd.f32 %v2758, %v2866
  %v2906 = vadd.f32 %v2759, %v2869
  %v2907 = vadd.f32 %v2760, %v2872
  %v2908 = vadd.f32 %v2761, %v2875
  %v2909 = vadd.f32 %v2762, %v2878
  %v2910 = vadd.f32 %v2763, %v2881
  %v2911 = vadd.f32 %v2764, %v2884
  %v2912 = vadd.f32 %v2765, %v2887
  %v2913 = vadd.f32 %v2766, %v2890
  %v2914 = vadd.f32 %v2767, %v2893
  %v2915 = vadd.f32 %v2768, %v2896
  %v2916 = vadd.f32 %v2769, %v2899
  %v2917 = vsel %vm1359, %v2901, 0.0
  %v2918 = vsel %vm1359, %v2902, 0.0
  %v2919 = vadd.f32 %v2917, %v2918
  %v2920 = vsel %vm1359, %v2903, 0.0
  %v2921 = vadd.f32 %v2919, %v2920
  %v2922 = vsel %vm1359, %v2904, 0.0
  %v2923 = vadd.f32 %v2921, %v2922
  %v2924 = vsel %vm1359, %v2905, 0.0
  %v2925 = vadd.f32 %v2923, %v2924
  %v2926 = vsel %vm1359, %v2906, 0.0
  %v2927 = vadd.f32 %v2925, %v2926
  %v2928 = vsel %vm1359, %v2907, 0.0
  %v2929 = vadd.f32 %v2927, %v2928
  %v2930 = vsel %vm1359, %v2908, 0.0
  %v2931 = vadd.f32 %v2929, %v2930
  %v2932 = vsel %vm1359, %v2909, 0.0
  %v2933 = vadd.f32 %v2931, %v2932
  %v2934 = vsel %vm1359, %v2910, 0.0
  %v2935 = vadd.f32 %v2933, %v2934
  %v2936 = vsel %vm1359, %v2911, 0.0
  %v2937 = vadd.f32 %v2935, %v2936
  %v2938 = vsel %vm1359, %v2912, 0.0
  %v2939 = vadd.f32 %v2937, %v2938
  %v2940 = vsel %vm1359, %v2913, 0.0
  %v2941 = vadd.f32 %v2939, %v2940
  %v2942 = vsel %vm1359, %v2914, 0.0
  %v2943 = vadd.f32 %v2941, %v2942
  %v2944 = vsel %vm1359, %v2915, 0.0
  %v2945 = vadd.f32 %v2943, %v2944
  %v2946 = vsel %vm1359, %v2916, 0.0
  %v2947 = vadd.f32 %v2945, %v2946
  %v2948 = vrot.slane %v2947, 4
  %v2949 = vadd.f32 %v2947, %v2948
  %v2950 = vrot.slane %v2949, 2
  %v2951 = vadd.f32 %v2949, %v2950
  %v2952 = vrot.slane %v2951, 1
  %v2953 = vadd.f32 %v2951, %v2952
  %v2954 = vmul.f32 %v2953, %v1403
  %v2955 = vsub.f32 %v2901, %v2954
  %v2956 = vsub.f32 %v2902, %v2954
  %v2957 = vsub.f32 %v2903, %v2954
  %v2958 = vsub.f32 %v2904, %v2954
  %v2959 = vsub.f32 %v2905, %v2954
  %v2960 = vsub.f32 %v2906, %v2954
  %v2961 = vsub.f32 %v2907, %v2954
  %v2962 = vsub.f32 %v2908, %v2954
  %v2963 = vsub.f32 %v2909, %v2954
  %v2964 = vsub.f32 %v2910, %v2954
  %v2965 = vsub.f32 %v2911, %v2954
  %v2966 = vsub.f32 %v2912, %v2954
  %v2967 = vsub.f32 %v2913, %v2954
  %v2968 = vsub.f32 %v2914, %v2954
  %v2969 = vsub.f32 %v2915, %v2954
  %v2970 = vsub.f32 %v2916, %v2954
  %v2971 = vmul.f32 %v2955, %v2955
  %v2972 = vmul.f32 %v2956, %v2956
  %v2973 = vmul.f32 %v2957, %v2957
  %v2974 = vmul.f32 %v2958, %v2958
  %v2975 = vmul.f32 %v2959, %v2959
  %v2976 = vmul.f32 %v2960, %v2960
  %v2977 = vmul.f32 %v2961, %v2961
  %v2978 = vmul.f32 %v2962, %v2962
  %v2979 = vmul.f32 %v2963, %v2963
  %v2980 = vmul.f32 %v2964, %v2964
  %v2981 = vmul.f32 %v2965, %v2965
  %v2982 = vmul.f32 %v2966, %v2966
  %v2983 = vmul.f32 %v2967, %v2967
  %v2984 = vmul.f32 %v2968, %v2968
  %v2985 = vmul.f32 %v2969, %v2969
  %v2986 = vmul.f32 %v2970, %v2970
  %v2987 = vsel %vm1359, %v2971, 0.0
  %v2988 = vsel %vm1359, %v2972, 0.0
  %v2989 = vadd.f32 %v2987, %v2988
  %v2990 = vsel %vm1359, %v2973, 0.0
  %v2991 = vadd.f32 %v2989, %v2990
  %v2992 = vsel %vm1359, %v2974, 0.0
  %v2993 = vadd.f32 %v2991, %v2992
  %v2994 = vsel %vm1359, %v2975, 0.0
  %v2995 = vadd.f32 %v2993, %v2994
  %v2996 = vsel %vm1359, %v2976, 0.0
  %v2997 = vadd.f32 %v2995, %v2996
  %v2998 = vsel %vm1359, %v2977, 0.0
  %v2999 = vadd.f32 %v2997, %v2998
  %v3000 = vsel %vm1359, %v2978, 0.0
  %v3001 = vadd.f32 %v2999, %v3000
  %v3002 = vsel %vm1359, %v2979, 0.0
  %v3003 = vadd.f32 %v3001, %v3002
  %v3004 = vsel %vm1359, %v2980, 0.0
  %v3005 = vadd.f32 %v3003, %v3004
  %v3006 = vsel %vm1359, %v2981, 0.0
  %v3007 = vadd.f32 %v3005, %v3006
  %v3008 = vsel %vm1359, %v2982, 0.0
  %v3009 = vadd.f32 %v3007, %v3008
  %v3010 = vsel %vm1359, %v2983, 0.0
  %v3011 = vadd.f32 %v3009, %v3010
  %v3012 = vsel %vm1359, %v2984, 0.0
  %v3013 = vadd.f32 %v3011, %v3012
  %v3014 = vsel %vm1359, %v2985, 0.0
  %v3015 = vadd.f32 %v3013, %v3014
  %v3016 = vsel %vm1359, %v2986, 0.0
  %v3017 = vadd.f32 %v3015, %v3016
  %v3018 = vrot.slane %v3017, 4
  %v3019 = vadd.f32 %v3017, %v3018
  %v3020 = vrot.slane %v3019, 2
  %v3021 = vadd.f32 %v3019, %v3020
  %v3022 = vrot.slane %v3021, 1
  %v3023 = vadd.f32 %v3021, %v3022
  %v3024 = vmul.f32 %v3023, %v1403
  %v3025 = vld [vmem:[%s6] sm:$0x1]
  %v3027 = vperm.slane %v3025, 0
  %v3029 = vmul.f32 %v3027, %v2955
  %v3030 = vmul.f32 %v3027, %v2956
  %v3031 = vmul.f32 %v3027, %v2957
  %v3032 = vmul.f32 %v3027, %v2958
  %v3033 = vmul.f32 %v3027, %v2959
  %v3034 = vmul.f32 %v3027, %v2960
  %v3035 = vmul.f32 %v3027, %v2961
  %v3036 = vmul.f32 %v3027, %v2962
  %v3037 = vmul.f32 %v3027, %v2963
  %v3038 = vmul.f32 %v3027, %v2964
  %v3039 = vmul.f32 %v3027, %v2965
  %v3040 = vmul.f32 %v3027, %v2966
  %v3041 = vmul.f32 %v3027, %v2967
  %v3042 = vmul.f32 %v3027, %v2968
  %v3043 = vmul.f32 %v3027, %v2969
  %v3044 = vmul.f32 %v3027, %v2970
  %v3045 = vadd.f32 %v3024, 1e-05
  %v3046 = vrsqrt.pop %v3045
  %v3047 = vmul.f32 %v3046, %v3045
  %v3048 = vmul.f32 %v3047, %v3046
  %v3049 = vmul.f32 0.5, %v3048
  %v3050 = vsub.f32 1.5, %v3049
  %v3051 = vmul.f32 %v3046, %v3050
  %vm3052 = vweird.f32 %v3045
  %vm3053 = vweird.f32 %v3046
  %vm3054 = vmor %vm3052, %vm3053
  %v3055 = vsel %vm3054, %v3046, %v3051
  %v3056 = vmul.f32 %v3029, %v3055
  %v3057 = vmul.f32 %v3030, %v3055
  %v3058 = vmul.f32 %v3031, %v3055
  %v3059 = vmul.f32 %v3032, %v3055
  %v3060 = vmul.f32 %v3033, %v3055
  %v3061 = vmul.f32 %v3034, %v3055
  %v3062 = vmul.f32 %v3035, %v3055
  %v3063 = vmul.f32 %v3036, %v3055
  %v3064 = vmul.f32 %v3037, %v3055
  %v3065 = vmul.f32 %v3038, %v3055
  %v3066 = vmul.f32 %v3039, %v3055
  %v3067 = vmul.f32 %v3040, %v3055
  %v3068 = vmul.f32 %v3041, %v3055
  %v3069 = vmul.f32 %v3042, %v3055
  %v3070 = vmul.f32 %v3043, %v3055
  %v3071 = vmul.f32 %v3044, %v3055
  %v3072 = vld [vmem:[%s7] sm:$0x1]
  %v3074 = vperm.slane %v3072, 0
  %v3076 = vadd.f32 %v3056, %v3074
  %v3077 = vadd.f32 %v3057, %v3074
  %v3078 = vadd.f32 %v3058, %v3074
  %v3079 = vadd.f32 %v3059, %v3074
  %v3080 = vadd.f32 %v3060, %v3074
  %v3081 = vadd.f32 %v3061, %v3074
  %v3082 = vadd.f32 %v3062, %v3074
  %v3083 = vadd.f32 %v3063, %v3074
  %v3084 = vadd.f32 %v3064, %v3074
  %v3085 = vadd.f32 %v3065, %v3074
  %v3086 = vadd.f32 %v3066, %v3074
  %v3087 = vadd.f32 %v3067, %v3074
  %v3088 = vadd.f32 %v3068, %v3074
  %v3089 = vadd.f32 %v3069, %v3074
  %v3090 = vadd.f32 %v3070, %v3074
  %v3091 = vadd.f32 %v3071, %v3074
  %v3092 = vld [vmem:[%s606] sm:$0xff]
  %v3093 = vld [vmem:[%s606 + $0x10] sm:$0xff]
  %v3094 = vld [vmem:[%s606 + $0x20] sm:$0xff]
  %v3095 = vld [vmem:[%s606 + $0x30] sm:$0xff]
  %v3096 = vld [vmem:[%s606 + $0x40] sm:$0xff]
  %v3097 = vld [vmem:[%s606 + $0x50] sm:$0xff]
  %v3098 = vld [vmem:[%s606 + $0x60] sm:$0xff]
  %v3099 = vld [vmem:[%s606 + $0x70] sm:$0xff]
  %v3100 = vld [vmem:[%s606 + $0x90] sm:$0xff]
  %v3101 = vld [vmem:[%s606 + $0xa0] sm:$0xff]
  %v3102 = vld [vmem:[%s606 + $0xb0] sm:$0xff]
  %v3103 = vld [vmem:[%s606 + $0xc0] sm:$0xff]
  %v3104 = vld [vmem:[%s606 + $0xd0] sm:$0xff]
  %v3105 = vld [vmem:[%s606 + $0xe0] sm:$0xff]
  %v3106 = vld [vmem:[%s606 + $0xf0] sm:$0xff]
  %v3107 = vld [vmem:[%s606 + $0x100] sm:$0xff]
  %v3108 = vld [vmem:[%s3] sm:$0xf]
  %v3110 = vsel %vm71, %v3092, 0
  %v3113 = vsel %vm71, %v3093, 0
  %v3116 = vsel %vm71, %v3094, 0
  %v3119 = vsel %vm71, %v3095, 0
  %v3122 = vsel %vm71, %v3096, 0
  %v3125 = vsel %vm71, %v3097, 0
  %v3128 = vsel %vm71, %v3098, 0
  %v3131 = vsel %vm71, %v3099, 0
  %v3134 = vsel %vm71, %v3100, 0
  %v3137 = vsel %vm71, %v3101, 0
  %v3140 = vsel %vm71, %v3102, 0
  %v3143 = vsel %vm71, %v3103, 0
  %v3146 = vsel %vm71, %v3104, 0
  %v3149 = vsel %vm71, %v3105, 0
  %v3152 = vsel %vm71, %v3106, 0
  %v3155 = vsel %vm71, %v3107, 0
  %v3158 = vsel %vm120, %v3108, 0
  %3160 = vmatpush.msra.mxu0 0.0
  %3161 = vmatpush.msra.mxu0 0.0
  %3162 = vmatpush.msra.mxu0 0.0
  %3163 = vmatpush.msra.mxu0 0.0
  %3164 = vmatpush.msra.mxu0 0.0
  %3165 = vmatpush.msra.mxu0 0.0
  %3166 = vmatpush.msra.mxu0 0.0
  %3167 = vmatpush.msra.mxu0 0.0
  %3168 = vmatpush.msra.mxu0 0.0
  %3169 = vmatpush.msra.mxu0 0.0
  %3170 = vmatpush.msra.mxu0 0.0
  %3171 = vmatpush.msra.mxu0 0.0
  %3172 = vmatpush.msra.mxu0 0.0
  %3173 = vmatpush.msra.mxu0 0.0
  %3174 = vmatpush.msra.mxu0 0.0
  %3175 = vmatpush.msra.mxu0 %v3158
  %3176 = vmatmul.f32.gmra.mxu0 %v3110
  %v3177 = vpop.f32.mrf.mxu0
  %v3178 = vadd.f32 0.0, %v3177
  %3179 = vmatmul.f32.gmra.mxu0 %v3113
  %v3180 = vpop.f32.mrf.mxu0
  %v3181 = vadd.f32 0.0, %v3180
  %3182 = vmatmul.f32.gmra.mxu0 %v3116
  %v3183 = vpop.f32.mrf.mxu0
  %v3184 = vadd.f32 0.0, %v3183
  %3185 = vmatmul.f32.gmra.mxu0 %v3119
  %v3186 = vpop.f32.mrf.mxu0
  %v3187 = vadd.f32 0.0, %v3186
  %3188 = vmatmul.f32.gmra.mxu0 %v3122
  %v3189 = vpop.f32.mrf.mxu0
  %v3190 = vadd.f32 0.0, %v3189
  %3191 = vmatmul.f32.gmra.mxu0 %v3125
  %v3192 = vpop.f32.mrf.mxu0
  %v3193 = vadd.f32 0.0, %v3192
  %3194 = vmatmul.f32.gmra.mxu0 %v3128
  %v3195 = vpop.f32.mrf.mxu0
  %v3196 = vadd.f32 0.0, %v3195
  %3197 = vmatmul.f32.gmra.mxu0 %v3131
  %v3198 = vpop.f32.mrf.mxu0
  %v3199 = vadd.f32 0.0, %v3198
  %3200 = vmatmul.f32.gmra.mxu0 %v3134
  %v3201 = vpop.f32.mrf.mxu0
  %v3202 = vadd.f32 0.0, %v3201
  %3203 = vmatmul.f32.gmra.mxu0 %v3137
  %v3204 = vpop.f32.mrf.mxu0
  %v3205 = vadd.f32 0.0, %v3204
  %3206 = vmatmul.f32.gmra.mxu0 %v3140
  %v3207 = vpop.f32.mrf.mxu0
  %v3208 = vadd.f32 0.0, %v3207
  %3209 = vmatmul.f32.gmra.mxu0 %v3143
  %v3210 = vpop.f32.mrf.mxu0
  %v3211 = vadd.f32 0.0, %v3210
  %3212 = vmatmul.f32.gmra.mxu0 %v3146
  %v3213 = vpop.f32.mrf.mxu0
  %v3214 = vadd.f32 0.0, %v3213
  %3215 = vmatmul.f32.gmra.mxu0 %v3149
  %v3216 = vpop.f32.mrf.mxu0
  %v3217 = vadd.f32 0.0, %v3216
  %3218 = vmatmul.f32.gmra.mxu0 %v3152
  %v3219 = vpop.f32.mrf.mxu0
  %v3220 = vadd.f32 0.0, %v3219
  %3221 = vmatmul.f32.gmra.mxu0 %v3155
  %v3222 = vpop.f32.mrf.mxu0
  %v3223 = vadd.f32 0.0, %v3222
  %3224 = vdwg.mxu0
  %v3225 = vsel %vm1359, %v3178, 0.0
  %v3226 = vsel %vm1359, %v3181, 0.0
  %v3227 = vadd.f32 %v3225, %v3226
  %v3228 = vsel %vm1359, %v3184, 0.0
  %v3229 = vadd.f32 %v3227, %v3228
  %v3230 = vsel %vm1359, %v3187, 0.0
  %v3231 = vadd.f32 %v3229, %v3230
  %v3232 = vsel %vm1359, %v3190, 0.0
  %v3233 = vadd.f32 %v3231, %v3232
  %v3234 = vsel %vm1359, %v3193, 0.0
  %v3235 = vadd.f32 %v3233, %v3234
  %v3236 = vsel %vm1359, %v3196, 0.0
  %v3237 = vadd.f32 %v3235, %v3236
  %v3238 = vsel %vm1359, %v3199, 0.0
  %v3239 = vadd.f32 %v3237, %v3238
  %v3240 = vsel %vm1359, %v3202, 0.0
  %v3241 = vadd.f32 %v3239, %v3240
  %v3242 = vsel %vm1359, %v3205, 0.0
  %v3243 = vadd.f32 %v3241, %v3242
  %v3244 = vsel %vm1359, %v3208, 0.0
  %v3245 = vadd.f32 %v3243, %v3244
  %v3246 = vsel %vm1359, %v3211, 0.0
  %v3247 = vadd.f32 %v3245, %v3246
  %v3248 = vsel %vm1359, %v3214, 0.0
  %v3249 = vadd.f32 %v3247, %v3248
  %v3250 = vsel %vm1359, %v3217, 0.0
  %v3251 = vadd.f32 %v3249, %v3250
  %v3252 = vsel %vm1359, %v3220, 0.0
  %v3253 = vadd.f32 %v3251, %v3252
  %v3254 = vsel %vm1359, %v3223, 0.0
  %v3255 = vadd.f32 %v3253, %v3254
  %v3256 = vrot.slane %v3255, 4
  %v3257 = vadd.f32 %v3255, %v3256
  %v3258 = vrot.slane %v3257, 2
  %v3259 = vadd.f32 %v3257, %v3258
  %v3260 = vrot.slane %v3259, 1
  %v3261 = vadd.f32 %v3259, %v3260
  %v3262 = vmul.f32 %v3261, %v1403
  %v3263 = vsub.f32 %v3178, %v3262
  %v3264 = vsub.f32 %v3181, %v3262
  %v3265 = vsub.f32 %v3184, %v3262
  %v3266 = vsub.f32 %v3187, %v3262
  %v3267 = vsub.f32 %v3190, %v3262
  %v3268 = vsub.f32 %v3193, %v3262
  %v3269 = vsub.f32 %v3196, %v3262
  %v3270 = vsub.f32 %v3199, %v3262
  %v3271 = vsub.f32 %v3202, %v3262
  %v3272 = vsub.f32 %v3205, %v3262
  %v3273 = vsub.f32 %v3208, %v3262
  %v3274 = vsub.f32 %v3211, %v3262
  %v3275 = vsub.f32 %v3214, %v3262
  %v3276 = vsub.f32 %v3217, %v3262
  %v3277 = vsub.f32 %v3220, %v3262
  %v3278 = vsub.f32 %v3223, %v3262
  %v3279 = vmul.f32 %v3263, %v3263
  %v3280 = vmul.f32 %v3264, %v3264
  %v3281 = vmul.f32 %v3265, %v3265
  %v3282 = vmul.f32 %v3266, %v3266
  %v3283 = vmul.f32 %v3267, %v3267
  %v3284 = vmul.f32 %v3268, %v3268
  %v3285 = vmul.f32 %v3269, %v3269
  %v3286 = vmul.f32 %v3270, %v3270
  %v3287 = vmul.f32 %v3271, %v3271
  %v3288 = vmul.f32 %v3272, %v3272
  %v3289 = vmul.f32 %v3273, %v3273
  %v3290 = vmul.f32 %v3274, %v3274
  %v3291 = vmul.f32 %v3275, %v3275
  %v3292 = vmul.f32 %v3276, %v3276
  %v3293 = vmul.f32 %v3277, %v3277
  %v3294 = vmul.f32 %v3278, %v3278
  %v3295 = vsel %vm1359, %v3279, 0.0
  %v3296 = vsel %vm1359, %v3280, 0.0
  %v3297 = vadd.f32 %v3295, %v3296
  %v3298 = vsel %vm1359, %v3281, 0.0
  %v3299 = vadd.f32 %v3297, %v3298
  %v3300 = vsel %vm1359, %v3282, 0.0
  %v3301 = vadd.f32 %v3299, %v3300
  %v3302 = vsel %vm1359, %v3283, 0.0
  %v3303 = vadd.f32 %v3301, %v3302
  %v3304 = vsel %vm1359, %v3284, 0.0
  %v3305 = vadd.f32 %v3303, %v3304
  %v3306 = vsel %vm1359, %v3285, 0.0
  %v3307 = vadd.f32 %v3305, %v3306
  %v3308 = vsel %vm1359, %v3286, 0.0
  %v3309 = vadd.f32 %v3307, %v3308
  %v3310 = vsel %vm1359, %v3287, 0.0
  %v3311 = vadd.f32 %v3309, %v3310
  %v3312 = vsel %vm1359, %v3288, 0.0
  %v3313 = vadd.f32 %v3311, %v3312
  %v3314 = vsel %vm1359, %v3289, 0.0
  %v3315 = vadd.f32 %v3313, %v3314
  %v3316 = vsel %vm1359, %v3290, 0.0
  %v3317 = vadd.f32 %v3315, %v3316
  %v3318 = vsel %vm1359, %v3291, 0.0
  %v3319 = vadd.f32 %v3317, %v3318
  %v3320 = vsel %vm1359, %v3292, 0.0
  %v3321 = vadd.f32 %v3319, %v3320
  %v3322 = vsel %vm1359, %v3293, 0.0
  %v3323 = vadd.f32 %v3321, %v3322
  %v3324 = vsel %vm1359, %v3294, 0.0
  %v3325 = vadd.f32 %v3323, %v3324
  %v3326 = vrot.slane %v3325, 4
  %v3327 = vadd.f32 %v3325, %v3326
  %v3328 = vrot.slane %v3327, 2
  %v3329 = vadd.f32 %v3327, %v3328
  %v3330 = vrot.slane %v3329, 1
  %v3331 = vadd.f32 %v3329, %v3330
  %v3332 = vmul.f32 %v3331, %v1403
  %v3333 = vld [vmem:[%s8] sm:$0x1]
  %v3335 = vperm.slane %v3333, 0
  %v3337 = vmul.f32 %v3335, %v3263
  %v3338 = vmul.f32 %v3335, %v3264
  %v3339 = vmul.f32 %v3335, %v3265
  %v3340 = vmul.f32 %v3335, %v3266
  %v3341 = vmul.f32 %v3335, %v3267
  %v3342 = vmul.f32 %v3335, %v3268
  %v3343 = vmul.f32 %v3335, %v3269
  %v3344 = vmul.f32 %v3335, %v3270
  %v3345 = vmul.f32 %v3335, %v3271
  %v3346 = vmul.f32 %v3335, %v3272
  %v3347 = vmul.f32 %v3335, %v3273
  %v3348 = vmul.f32 %v3335, %v3274
  %v3349 = vmul.f32 %v3335, %v3275
  %v3350 = vmul.f32 %v3335, %v3276
  %v3351 = vmul.f32 %v3335, %v3277
  %v3352 = vmul.f32 %v3335, %v3278
  %v3353 = vadd.f32 %v3332, 1e-05
  %v3354 = vrsqrt.pop %v3353
  %v3355 = vmul.f32 %v3354, %v3353
  %v3356 = vmul.f32 %v3355, %v3354
  %v3357 = vmul.f32 0.5, %v3356
  %v3358 = vsub.f32 1.5, %v3357
  %v3359 = vmul.f32 %v3354, %v3358
  %vm3360 = vweird.f32 %v3353
  %vm3361 = vweird.f32 %v3354
  %vm3362 = vmor %vm3360, %vm3361
  %v3363 = vsel %vm3362, %v3354, %v3359
  %v3364 = vmul.f32 %v3337, %v3363
  %v3365 = vmul.f32 %v3338, %v3363
  %v3366 = vmul.f32 %v3339, %v3363
  %v3367 = vmul.f32 %v3340, %v3363
  %v3368 = vmul.f32 %v3341, %v3363
  %v3369 = vmul.f32 %v3342, %v3363
  %v3370 = vmul.f32 %v3343, %v3363
  %v3371 = vmul.f32 %v3344, %v3363
  %v3372 = vmul.f32 %v3345, %v3363
  %v3373 = vmul.f32 %v3346, %v3363
  %v3374 = vmul.f32 %v3347, %v3363
  %v3375 = vmul.f32 %v3348, %v3363
  %v3376 = vmul.f32 %v3349, %v3363
  %v3377 = vmul.f32 %v3350, %v3363
  %v3378 = vmul.f32 %v3351, %v3363
  %v3379 = vmul.f32 %v3352, %v3363
  %v3380 = vld [vmem:[%s9] sm:$0x1]
  %v3382 = vperm.slane %v3380, 0
  %v3384 = vadd.f32 %v3364, %v3382
  %v3385 = vadd.f32 %v3365, %v3382
  %v3386 = vadd.f32 %v3366, %v3382
  %v3387 = vadd.f32 %v3367, %v3382
  %v3388 = vadd.f32 %v3368, %v3382
  %v3389 = vadd.f32 %v3369, %v3382
  %v3390 = vadd.f32 %v3370, %v3382
  %v3391 = vadd.f32 %v3371, %v3382
  %v3392 = vadd.f32 %v3372, %v3382
  %v3393 = vadd.f32 %v3373, %v3382
  %v3394 = vadd.f32 %v3374, %v3382
  %v3395 = vadd.f32 %v3375, %v3382
  %v3396 = vadd.f32 %v3376, %v3382
  %v3397 = vadd.f32 %v3377, %v3382
  %v3398 = vadd.f32 %v3378, %v3382
  %v3399 = vadd.f32 %v3379, %v3382
  %v3400 = vadd.f32 %v3076, %v3384
  %v3401 = vadd.f32 %v3077, %v3385
  %v3402 = vadd.f32 %v3078, %v3386
  %v3403 = vadd.f32 %v3079, %v3387
  %v3404 = vadd.f32 %v3080, %v3388
  %v3405 = vadd.f32 %v3081, %v3389
  %v3406 = vadd.f32 %v3082, %v3390
  %v3407 = vadd.f32 %v3083, %v3391
  %v3408 = vadd.f32 %v3084, %v3392
  %v3409 = vadd.f32 %v3085, %v3393
  %v3410 = vadd.f32 %v3086, %v3394
  %v3411 = vadd.f32 %v3087, %v3395
  %v3412 = vadd.f32 %v3088, %v3396
  %v3413 = vadd.f32 %v3089, %v3397
  %v3414 = vadd.f32 %v3090, %v3398
  %v3415 = vadd.f32 %v3091, %v3399
  %v3416 = vmax.f32 %v3400, 0.0
  %v3417 = vmax.f32 %v3401, 0.0
  %v3418 = vmax.f32 %v3402, 0.0
  %v3419 = vmax.f32 %v3403, 0.0
  %v3420 = vmax.f32 %v3404, 0.0
  %v3421 = vmax.f32 %v3405, 0.0
  %v3422 = vmax.f32 %v3406, 0.0
  %v3423 = vmax.f32 %v3407, 0.0
  %v3424 = vmax.f32 %v3408, 0.0
  %v3425 = vmax.f32 %v3409, 0.0
  %v3426 = vmax.f32 %v3410, 0.0
  %v3427 = vmax.f32 %v3411, 0.0
  %v3428 = vmax.f32 %v3412, 0.0
  %v3429 = vmax.f32 %v3413, 0.0
  %v3430 = vmax.f32 %v3414, 0.0
  %v3431 = vmax.f32 %v3415, 0.0
  %3432 = vst.msk [vmem:[%s10] sm:$0xff] %vm1359, %v3416
  %3433 = vst.msk [vmem:[%s10 + $0x8] sm:$0xff] %vm1359, %v3417
  %3434 = vst.msk [vmem:[%s10 + $0x10] sm:$0xff] %vm1359, %v3418
  %3435 = vst.msk [vmem:[%s10 + $0x18] sm:$0xff] %vm1359, %v3419
  %3436 = vst.msk [vmem:[%s10 + $0x20] sm:$0xff] %vm1359, %v3420
  %3437 = vst.msk [vmem:[%s10 + $0x28] sm:$0xff] %vm1359, %v3421
  %3438 = vst.msk [vmem:[%s10 + $0x30] sm:$0xff] %vm1359, %v3422
  %3439 = vst.msk [vmem:[%s10 + $0x38] sm:$0xff] %vm1359, %v3423
  %3440 = vst.msk [vmem:[%s10 + $0x40] sm:$0xff] %vm1359, %v3424
  %3441 = vst.msk [vmem:[%s10 + $0x48] sm:$0xff] %vm1359, %v3425
  %3442 = vst.msk [vmem:[%s10 + $0x50] sm:$0xff] %vm1359, %v3426
  %3443 = vst.msk [vmem:[%s10 + $0x58] sm:$0xff] %vm1359, %v3427
  %3444 = vst.msk [vmem:[%s10 + $0x60] sm:$0xff] %vm1359, %v3428
  %3445 = vst.msk [vmem:[%s10 + $0x68] sm:$0xff] %vm1359, %v3429
  %3446 = vst.msk [vmem:[%s10 + $0x70] sm:$0xff] %vm1359, %v3430
  %3447 = vst.msk [vmem:[%s10 + $0x78] sm:$0xff] %vm1359, %v3431
  // Predicated region
  $region42: #{tpu_custom_call.1} parent=0 // pred_check
    _
  $region43: #{tpu_custom_call.1} parent=0 // pred_check_branch
    %3449 = sbr.rel (0) target = $region45
  $region44: #{tpu_custom_call.1} parent=0 // pred_region
    _
  $region45: #{tpu_custom_call.1} parent=0 // pred_fallthru
    _
  // Predicated region
  $region46: #{tpu_custom_call.1} parent=0 // pred_check
    _
  $region47: #{tpu_custom_call.1} parent=0 // pred_check_branch
    %3451 = sbr.rel (0) target = $region49
  $region48: #{tpu_custom_call.1} parent=0 // pred_region
    _
  $region49: #{tpu_custom_call.1} parent=0 // pred_fallthru
    _

</llo_original>
